<compile_context>
chip_gen: v7x
topology: tpu7x:2x2x1
jax: 0.10.0
libtpu: 0.0.40
codegen_flags: <defaults>
</compile_context>

<pallas_src>
import jax
import jax.numpy as jnp
from jax import lax
from jax.experimental import pallas as pl
from jax.experimental.pallas import tpu as pltpu


LANE = 128      # TPU lane width; padded hidden size Hp
SUBLANE = 8


def _round_up(x, m):
    return (x + m - 1) // m * m


# -----------------------------------------------------------------------------
# Kernel
# -----------------------------------------------------------------------------
def fused_lstm_kernel(x_ref, wih0_ref, whh0_ref, b0_ref,
                      wih1_ref, whh1_ref, b1_ref,
                      w3_ref, lb_ref,
                      logits_ref, hn_ref, cn_ref,
                      zx0_ref, h1all_ref):
    """Full 2-layer LSTM recurrence + fused Linear head, everything in VMEM.

    Shapes (Hp = padded hidden = 128, Vp = padded vocab, Lp = padded #steps):
      x_ref     : (L*N, E)     bf16  embedded input, time-major flattened
      wih0_ref  : (E,  4*Hp)   bf16  layer-0 input weights  (gate blocks padded)
      whh0_ref  : (Hp, 4*Hp)   bf16  layer-0 recurrent weights
      b0_ref    : (1,  4*Hp)   f32   layer-0 bias (b_ih + b_hh)
      wih1_ref  : (Hp, 4*Hp)   bf16  layer-1 input weights
      whh1_ref  : (Hp, 4*Hp)   bf16  layer-1 recurrent weights
      b1_ref    : (1,  4*Hp)   f32
      w3_ref    : (N, Hp, Vp)  bf16  classifier weights per sequence slot n
      lb_ref    : (1, Vp)      f32   classifier bias
      logits_ref: (Lp, Vp)     f32
      hn_ref    : (2, N, Hp)   f32   final hidden state; ALSO the running h
      cn_ref    : (2, N, Hp)   f32   final cell state;   ALSO the running c
      zx0_ref   : (L*N, 4*Hp)  f32   scratch: hoisted layer-0 input projection
      h1all_ref : (Lp*N, Hp)   f32   scratch: layer-1 outputs, row = l*N + n
    """
    N = hn_ref.shape[1]
    Hp = hn_ref.shape[2]
    L = x_ref.shape[0] // N
    Lp, Vp = logits_ref.shape

    # --- init: zero h0/c0 (PyTorch default) and padded scratch rows ----------
    hn_ref[...] = jnp.zeros_like(hn_ref)
    cn_ref[...] = jnp.zeros_like(cn_ref)
    h1all_ref[...] = jnp.zeros_like(h1all_ref)

    # --- hoisted layer-0 input projection for ALL time steps (one matmul) ----
    zx0_ref[...] = (
        jnp.dot(x_ref[...], wih0_ref[...], preferred_element_type=jnp.float32)
        + b0_ref[...])

    def gates(z, c):
        # z: (N, 4*Hp) f32; gate blocks [i | f | g | o] are full 128-lane tiles.
        i = jax.nn.sigmoid(z[:, 0 * Hp:1 * Hp])
        f = jax.nn.sigmoid(z[:, 1 * Hp:2 * Hp])
        g = jnp.tanh(z[:, 2 * Hp:3 * Hp])
        o = jax.nn.sigmoid(z[:, 3 * Hp:4 * Hp])
        c_new = f * c + i * g
        h_new = o * jnp.tanh(c_new)
        return h_new, c_new

    def step(l, carry):
        row = pl.multiple_of(l * N, N)
        zx0 = zx0_ref[pl.ds(row, N), :]                       # (N, 4Hp) f32

        h0 = hn_ref[0]
        c0 = cn_ref[0]
        h1 = hn_ref[1]
        c1 = cn_ref[1]

        # layer 0: only the recurrent matmul (input part was hoisted).
        z0 = zx0 + jnp.dot(h0.astype(jnp.bfloat16), whh0_ref[...],
                           preferred_element_type=jnp.float32)
        h0n, c0n = gates(z0, c0)

        # layer 1: input = layer-0 output at this time step.
        z1 = (jnp.dot(h0n.astype(jnp.bfloat16), wih1_ref[...],
                      preferred_element_type=jnp.float32)
              + jnp.dot(h1.astype(jnp.bfloat16), whh1_ref[...],
                        preferred_element_type=jnp.float32)
              + b1_ref[...])
        h1n, c1n = gates(z1, c1)

        # state lives directly in the resident output blocks.
        hn_ref[0] = h0n
        cn_ref[0] = c0n
        hn_ref[1] = h1n
        cn_ref[1] = c1n
        h1all_ref[pl.ds(row, N), :] = h1n                     # rows l*N .. l*N+N-1
        return carry

    # Sequential recurrence; short static trip count -> fully unrolled.
    lax.fori_loop(0, L, step, 0, unroll=True)

    # --- fused classifier: logits[l] = sum_n h1[l, n, :] @ W3[n] + b ---------
    acc = jnp.zeros((Lp, Vp), jnp.float32)
    for n in range(N):                                        # static, N = seq_length
        # rows n, n+N, n+2N, ...  ==  layer-1 output of column n at l = 0..Lp-1
        g_n = h1all_ref[pl.ds(n, Lp, stride=N), :]            # (Lp, Hp)
        acc = acc + jnp.dot(g_n.astype(jnp.bfloat16), w3_ref[n],
                            preferred_element_type=jnp.float32)
    logits_ref[...] = acc + lb_ref[...]


# -----------------------------------------------------------------------------
# pallas_call wrapper
# -----------------------------------------------------------------------------
def fused_lstm_pallas(x_flat, packed, L, N):
    """x_flat: (L*N, E) bf16 -> (logits (Lp,Vp) f32, h_n (2,N,Hp), c_n (2,N,Hp))."""
    LN, _ = x_flat.shape
    Hp = packed["whh0"].shape[0]
    Vp = packed["w3"].shape[2]
    Lp = _round_up(max(L, 1), SUBLANE)

    out_shape = (
        jax.ShapeDtypeStruct((Lp, Vp), jnp.float32),
        jax.ShapeDtypeStruct((2, N, Hp), jnp.float32),
        jax.ShapeDtypeStruct((2, N, Hp), jnp.float32),
    )
    return pl.pallas_call(
        fused_lstm_kernel,
        out_shape=out_shape,
        scratch_shapes=[
            pltpu.VMEM((LN, 4 * Hp), jnp.float32),    # hoisted x@Wih0 + b0
            pltpu.VMEM((Lp * N, Hp), jnp.float32),    # layer-1 outputs
        ],
        compiler_params=pltpu.CompilerParams(
            vmem_limit_bytes=32 * 1024 * 1024),       # safe on v5e/v6e/v7x
    )(x_flat,
      packed["wih0"], packed["whh0"], packed["b0"],
      packed["wih1"], packed["whh1"], packed["b1"],
      packed["w3"], packed["lb"])


# -----------------------------------------------------------------------------
# Weight packing: PyTorch layout -> padded / transposed kernel layout
# -----------------------------------------------------------------------------
def _pack_lstm_layer(wih, whh, bih, bhh, hp, in_pad=None):
    """wih: (4H, In), whh: (4H, H), biases (4H,), gate order [i, f, g, o].

    Returns wih_p (In_p, 4*hp) bf16, whh_p (hp, 4*hp) bf16, b_p (1, 4*hp) f32.
    Padded rows/columns are zero, so padded lanes of h/c stay exactly zero and
    never influence real lanes.
    """
    four_h, n_in = wih.shape
    h = four_h // 4
    n_in_p = n_in if in_pad is None else in_pad
    b = (bih + bhh).astype(jnp.float32)

    wih_p = jnp.zeros((n_in_p, 4 * hp), jnp.float32)
    whh_p = jnp.zeros((hp, 4 * hp), jnp.float32)
    b_p = jnp.zeros((1, 4 * hp), jnp.float32)
    for k in range(4):
        wih_p = wih_p.at[:n_in, k * hp:k * hp + h].set(wih[k * h:(k + 1) * h, :].T)
        whh_p = whh_p.at[:h, k * hp:k * hp + h].set(whh[k * h:(k + 1) * h, :].T)
        b_p = b_p.at[0, k * hp:k * hp + h].set(b[k * h:(k + 1) * h])
    return wih_p.astype(jnp.bfloat16), whh_p.astype(jnp.bfloat16), b_p


def _pack_classifier(lin_w, lin_b, seq_len, h, hp, vp):
    """lin_w: (V, seq_len*H), lin_b: (V,) -> W3 (seq_len, hp, vp) bf16, b (1, vp) f32."""
    v = lin_w.shape[0]
    w3 = lin_w.T.reshape(seq_len, h, v)      # [t, h, v] matches flatten order t*H + h
    w3_p = jnp.zeros((seq_len, hp, vp), jnp.float32).at[:, :h, :v].set(w3)
    lb_p = jnp.zeros((1, vp), jnp.float32).at[0, :v].set(lin_b)
    return w3_p.astype(jnp.bfloat16), lb_p


def init_params(key, vocab_size, embed_size, hidden_size, seq_length):
    ks = jax.random.split(key, 11)
    h, e = hidden_size, embed_size
    bound = 1.0 / jnp.sqrt(h)

    def u(k, shape):
        return jax.random.uniform(k, shape, jnp.float32, -bound, bound)

    raw = {
        "embed": jax.random.normal(ks[0], (vocab_size, e), jnp.float32),
        "wih0": u(ks[1], (4 * h, e)), "whh0": u(ks[2], (4 * h, h)),
        "bih0": u(ks[3], (4 * h,)), "bhh0": u(ks[4], (4 * h,)),
        "wih1": u(ks[5], (4 * h, h)), "whh1": u(ks[6], (4 * h, h)),
        "bih1": u(ks[7], (4 * h,)), "bhh1": u(ks[8], (4 * h,)),
    }
    f = h * seq_length
    lb = 1.0 / jnp.sqrt(f)
    raw["lin_w"] = jax.random.uniform(ks[9], (vocab_size, f), jnp.float32, -lb, lb)
    raw["lin_b"] = jax.random.uniform(ks[10], (vocab_size,), jnp.float32, -lb, lb)

    hp = _round_up(max(h, LANE), LANE)          # gate blocks = full lane tiles
    vp = _round_up(vocab_size, LANE)            # lane-dense logits store

    wih0p, whh0p, b0p = _pack_lstm_layer(raw["wih0"], raw["whh0"],
                                         raw["bih0"], raw["bhh0"], hp)
    wih1p, whh1p, b1p = _pack_lstm_layer(raw["wih1"], raw["whh1"],
                                         raw["bih1"], raw["bhh1"], hp, in_pad=hp)
    w3p, lbp = _pack_classifier(raw["lin_w"], raw["lin_b"], seq_length, h, hp, vp)

    packed = {"wih0": wih0p, "whh0": whh0p, "b0": b0p,
              "wih1": wih1p, "whh1": whh1p, "b1": b1p,
              "w3": w3p, "lb": lbp}
    return {"raw": raw, "packed": packed}


# -----------------------------------------------------------------------------
# Model forward (reproduces the PyTorch module)
# -----------------------------------------------------------------------------
def lstm_model_forward(params, input_word, hidden_size, vocab_size):
    raw, packed = params["raw"], params["packed"]
    # Embedding lookup stays in XLA (gather glue).
    emb = jnp.take(raw["embed"], input_word, axis=0)          # (B, T, E) f32
    B, T, E = emb.shape
    L, N = B, T           # batch_first=False: LSTM time axis = B, batch axis = T
    x_flat = emb.reshape(L * N, E).astype(jnp.bfloat16)

    logits_p, hn_p, cn_p = fused_lstm_pallas(x_flat, packed, L, N)

    logits = logits_p[:B, :vocab_size]
    h_n = hn_p[:, :, :hidden_size]
    c_n = cn_p[:, :, :hidden_size]
    return logits, (h_n, c_n)


# -----------------------------------------------------------------------------
# Pure-JAX f32 reference (for validation only)
# -----------------------------------------------------------------------------
def lstm_reference(raw, input_word):
    emb = jnp.take(raw["embed"], input_word, axis=0)          # (B, T, E)
    L, N, _ = emb.shape
    H = raw["whh0"].shape[1]

    def cell(x, h, c, wih, whh, b):
        z = x @ wih.T + h @ whh.T + b
        i = jax.nn.sigmoid(z[:, 0 * H:1 * H])
        f = jax.nn.sigmoid(z[:, 1 * H:2 * H])
        g = jnp.tanh(z[:, 2 * H:3 * H])
        o = jax.nn.sigmoid(z[:, 3 * H:4 * H])
        c = f * c + i * g
        return o * jnp.tanh(c), c

    h0 = c0 = h1 = c1 = jnp.zeros((N, H), jnp.float32)
    b0 = raw["bih0"] + raw["bhh0"]
    b1 = raw["bih1"] + raw["bhh1"]
    outs = []
    for l in range(L):
        h0, c0 = cell(emb[l], h0, c0, raw["wih0"], raw["whh0"], b0)
        h1, c1 = cell(h0, h1, c1, raw["wih1"], raw["whh1"], b1)
        outs.append(h1)
    out = jnp.stack(outs, axis=0)                             # (L, N, H)
    logits = out.reshape(L, -1) @ raw["lin_w"].T + raw["lin_b"]
    return logits, (jnp.stack([h0, h1]), jnp.stack([c0, c1]))


if __name__ == "__main__":
    vocab_size, embed_size, hidden_size = 50, 16, 32
    batch, seq_length = 2, 8

    key = jax.random.PRNGKey(0)
    pkey, dkey = jax.random.split(key)
    params = init_params(pkey, vocab_size, embed_size, hidden_size, seq_length)
    input_word = jax.random.randint(dkey, (batch, seq_length), 0, vocab_size,
                                    dtype=jnp.int32)

    logits, (h_n, c_n) = lstm_model_forward(params, input_word,
                                            hidden_size, vocab_size)
    jax.block_until_ready((logits, h_n, c_n))

    assert logits.shape == (batch, vocab_size)
    assert h_n.shape == (2, seq_length, hidden_size)
    assert c_n.shape == (2, seq_length, hidden_size)

    # numerical check against a pure-JAX f32 reference (bf16 matmuls -> loose tol)
    ref_logits, (ref_h, ref_c) = lstm_reference(params["raw"], input_word)
    assert bool(jnp.allclose(logits, ref_logits, rtol=5e-2, atol=1e-2))
    assert bool(jnp.allclose(h_n, ref_h, rtol=5e-2, atol=1e-2))
    assert bool(jnp.allclose(c_n, ref_c, rtol=5e-2, atol=1e-2))

    print("KERNEL_OK")
</pallas_src>

<mosaic_0001>
module attributes {stable_mosaic.version = 11 : i64} {
  func.func @fused_lstm_kernel(%arg0: memref<16x16xbf16, #tpu.memory_space<vmem>>, %arg1: memref<16x512xbf16, #tpu.memory_space<vmem>>, %arg2: memref<128x512xbf16, #tpu.memory_space<vmem>>, %arg3: memref<1x512xf32, #tpu.memory_space<vmem>>, %arg4: memref<128x512xbf16, #tpu.memory_space<vmem>>, %arg5: memref<128x512xbf16, #tpu.memory_space<vmem>>, %arg6: memref<1x512xf32, #tpu.memory_space<vmem>>, %arg7: memref<8x128x128xbf16, #tpu.memory_space<vmem>>, %arg8: memref<1x128xf32, #tpu.memory_space<vmem>>, %arg9: memref<8x128xf32, #tpu.memory_space<vmem>>, %arg10: memref<2x8x128xf32, #tpu.memory_space<vmem>>, %arg11: memref<2x8x128xf32, #tpu.memory_space<vmem>>, %arg12: memref<16x512xf32, #tpu.memory_space<vmem>>, %arg13: memref<64x128xf32, #tpu.memory_space<vmem>>) attributes {dimension_semantics = [], scalar_prefetch = 0 : i64, scratch_operands = 2 : i64, tpu.core_type = #tpu.core_type<tc>} {
    %cst = arith.constant 0.000000e+00 : f32
    %0 = vector.broadcast %cst : f32 to vector<2x8x128xf32>
    %c0 = arith.constant 0 : index
    %c0_0 = arith.constant 0 : index
    %c0_1 = arith.constant 0 : index
    %1 = vector.load %arg10[%c0, %c0_0, %c0_1] : memref<2x8x128xf32, #tpu.memory_space<vmem>>, vector<2x8x128xf32>
    tpu.vector_store %arg10[%c0, %c0_0, %c0_1], %0 {strides = array<i32>} : memref<2x8x128xf32, #tpu.memory_space<vmem>>, vector<2x8x128xf32>,
    %cst_2 = arith.constant 0.000000e+00 : f32
    %2 = vector.broadcast %cst_2 : f32 to vector<2x8x128xf32>
    %c0_3 = arith.constant 0 : index
    %c0_4 = arith.constant 0 : index
    %c0_5 = arith.constant 0 : index
    %3 = vector.load %arg11[%c0_3, %c0_4, %c0_5] : memref<2x8x128xf32, #tpu.memory_space<vmem>>, vector<2x8x128xf32>
    tpu.vector_store %arg11[%c0_3, %c0_4, %c0_5], %2 {strides = array<i32>} : memref<2x8x128xf32, #tpu.memory_space<vmem>>, vector<2x8x128xf32>,
    %cst_6 = arith.constant 0.000000e+00 : f32
    %4 = vector.broadcast %cst_6 : f32 to vector<64x128xf32>
    %c0_7 = arith.constant 0 : index
    %c0_8 = arith.constant 0 : index
    %5 = vector.load %arg13[%c0_7, %c0_8] : memref<64x128xf32, #tpu.memory_space<vmem>>, vector<64x128xf32>
    tpu.vector_store %arg13[%c0_7, %c0_8], %4 {strides = array<i32>} : memref<64x128xf32, #tpu.memory_space<vmem>>, vector<64x128xf32>,
    %c0_9 = arith.constant 0 : index
    %c0_10 = arith.constant 0 : index
    %6 = vector.load %arg0[%c0_9, %c0_10] : memref<16x16xbf16, #tpu.memory_space<vmem>>, vector<16x16xbf16>
    %c0_11 = arith.constant 0 : index
    %c0_12 = arith.constant 0 : index
    %7 = vector.load %arg1[%c0_11, %c0_12] : memref<16x512xbf16, #tpu.memory_space<vmem>>, vector<16x512xbf16>
    %cst_13 = arith.constant dense<0.000000e+00> : vector<16x512xf32>
    %8 = tpu.matmul %6, %7, %cst_13 {dimension_numbers = #tpu.dot_dimension_numbers<[1], [0], [0], [1], [0, 0, 1, 1], [], []>} : vector<16x16xbf16>, vector<16x512xbf16>, vector<16x512xf32> -> vector<16x512xf32>
    %c0_14 = arith.constant 0 : index
    %c0_15 = arith.constant 0 : index
    %9 = vector.load %arg3[%c0_14, %c0_15] : memref<1x512xf32, #tpu.memory_space<vmem>>, vector<1x512xf32>
    %10 = vector.broadcast %9 : vector<1x512xf32> to vector<16x512xf32>
    %11 = arith.addf %8, %10 : vector<16x512xf32>
    %c0_16 = arith.constant 0 : index
    %c0_17 = arith.constant 0 : index
    %12 = vector.load %arg12[%c0_16, %c0_17] : memref<16x512xf32, #tpu.memory_space<vmem>>, vector<16x512xf32>
    tpu.vector_store %arg12[%c0_16, %c0_17], %11 {strides = array<i32>} : memref<16x512xf32, #tpu.memory_space<vmem>>, vector<16x512xf32>,
    %c0_i32 = arith.constant 0 : i32
    %c8_i32 = arith.constant 8 : i32
    %13 = arith.muli %c0_i32, %c8_i32 : i32
    %14 = tpu.assume_multiple %13, 8 : i32
    %15 = arith.index_cast %14 : i32 to index
    %c0_18 = arith.constant 0 : index
    %16 = vector.load %arg12[%15, %c0_18] : memref<16x512xf32, #tpu.memory_space<vmem>>, vector<8x512xf32>
    %c0_19 = arith.constant 0 : index
    %c0_20 = arith.constant 0 : index
    %c0_21 = arith.constant 0 : index
    %17 = vector.load %arg10[%c0_19, %c0_20, %c0_21] : memref<2x8x128xf32, #tpu.memory_space<vmem>>, vector<1x8x128xf32>
    %18 = vector.shape_cast %17 : vector<1x8x128xf32> to vector<8x128xf32>
    %c0_22 = arith.constant 0 : index
    %c0_23 = arith.constant 0 : index
    %c0_24 = arith.constant 0 : index
    %19 = vector.load %arg11[%c0_22, %c0_23, %c0_24] : memref<2x8x128xf32, #tpu.memory_space<vmem>>, vector<1x8x128xf32>
    %20 = vector.shape_cast %19 : vector<1x8x128xf32> to vector<8x128xf32>
    %c1 = arith.constant 1 : index
    %c0_25 = arith.constant 0 : index
    %c0_26 = arith.constant 0 : index
    %21 = vector.load %arg10[%c1, %c0_25, %c0_26] : memref<2x8x128xf32, #tpu.memory_space<vmem>>, vector<1x8x128xf32>
    %22 = vector.shape_cast %21 : vector<1x8x128xf32> to vector<8x128xf32>
    %c1_27 = arith.constant 1 : index
    %c0_28 = arith.constant 0 : index
    %c0_29 = arith.constant 0 : index
    %23 = vector.load %arg11[%c1_27, %c0_28, %c0_29] : memref<2x8x128xf32, #tpu.memory_space<vmem>>, vector<1x8x128xf32>
    %24 = vector.shape_cast %23 : vector<1x8x128xf32> to vector<8x128xf32>
    %25 = arith.truncf %18 : vector<8x128xf32> to vector<8x128xbf16>
    %c0_30 = arith.constant 0 : index
    %c0_31 = arith.constant 0 : index
    %26 = vector.load %arg2[%c0_30, %c0_31] : memref<128x512xbf16, #tpu.memory_space<vmem>>, vector<128x512xbf16>
    %cst_32 = arith.constant dense<0.000000e+00> : vector<8x512xf32>
    %27 = tpu.matmul %25, %26, %cst_32 {dimension_numbers = #tpu.dot_dimension_numbers<[1], [0], [0], [1], [0, 0, 1, 1], [], []>} : vector<8x128xbf16>, vector<128x512xbf16>, vector<8x512xf32> -> vector<8x512xf32>
    %28 = arith.addf %16, %27 : vector<8x512xf32>
    %29 = vector.extract_strided_slice %28 {offsets = [0, 0], sizes = [8, 128], strides = [1, 1]} : vector<8x512xf32> to vector<8x128xf32>
    %30 = arith.negf %29 : vector<8x128xf32>
    %31 = math.exp %30 : vector<8x128xf32>
    %cst_33 = arith.constant 1.000000e+00 : f32
    %32 = vector.broadcast %cst_33 : f32 to vector<8x128xf32>
    %33 = arith.addf %32, %31 : vector<8x128xf32>
    %34 = arith.divf %32, %33 : vector<8x128xf32>
    %35 = vector.extract_strided_slice %28 {offsets = [0, 128], sizes = [8, 128], strides = [1, 1]} : vector<8x512xf32> to vector<8x128xf32>
    %36 = arith.negf %35 : vector<8x128xf32>
    %37 = math.exp %36 : vector<8x128xf32>
    %cst_34 = arith.constant 1.000000e+00 : f32
    %38 = vector.broadcast %cst_34 : f32 to vector<8x128xf32>
    %39 = arith.addf %38, %37 : vector<8x128xf32>
    %40 = arith.divf %38, %39 : vector<8x128xf32>
    %41 = vector.extract_strided_slice %28 {offsets = [0, 256], sizes = [8, 128], strides = [1, 1]} : vector<8x512xf32> to vector<8x128xf32>
    %42 = math.tanh %41 : vector<8x128xf32>
    %43 = vector.extract_strided_slice %28 {offsets = [0, 384], sizes = [8, 128], strides = [1, 1]} : vector<8x512xf32> to vector<8x128xf32>
    %44 = arith.negf %43 : vector<8x128xf32>
    %45 = math.exp %44 : vector<8x128xf32>
    %cst_35 = arith.constant 1.000000e+00 : f32
    %46 = vector.broadcast %cst_35 : f32 to vector<8x128xf32>
    %47 = arith.addf %46, %45 : vector<8x128xf32>
    %48 = arith.divf %46, %47 : vector<8x128xf32>
    %49 = arith.mulf %40, %20 : vector<8x128xf32>
    %50 = arith.mulf %34, %42 : vector<8x128xf32>
    %51 = arith.addf %49, %50 : vector<8x128xf32>
    %52 = math.tanh %51 : vector<8x128xf32>
    %53 = arith.mulf %48, %52 : vector<8x128xf32>
    %54 = arith.truncf %53 : vector<8x128xf32> to vector<8x128xbf16>
    %c0_36 = arith.constant 0 : index
    %c0_37 = arith.constant 0 : index
    %55 = vector.load %arg4[%c0_36, %c0_37] : memref<128x512xbf16, #tpu.memory_space<vmem>>, vector<128x512xbf16>
    %cst_38 = arith.constant dense<0.000000e+00> : vector<8x512xf32>
    %56 = tpu.matmul %54, %55, %cst_38 {dimension_numbers = #tpu.dot_dimension_numbers<[1], [0], [0], [1], [0, 0, 1, 1], [], []>} : vector<8x128xbf16>, vector<128x512xbf16>, vector<8x512xf32> -> vector<8x512xf32>
    %57 = arith.truncf %22 : vector<8x128xf32> to vector<8x128xbf16>
    %c0_39 = arith.constant 0 : index
    %c0_40 = arith.constant 0 : index
    %58 = vector.load %arg5[%c0_39, %c0_40] : memref<128x512xbf16, #tpu.memory_space<vmem>>, vector<128x512xbf16>
    %cst_41 = arith.constant dense<0.000000e+00> : vector<8x512xf32>
    %59 = tpu.matmul %57, %58, %cst_41 {dimension_numbers = #tpu.dot_dimension_numbers<[1], [0], [0], [1], [0, 0, 1, 1], [], []>} : vector<8x128xbf16>, vector<128x512xbf16>, vector<8x512xf32> -> vector<8x512xf32>
    %60 = arith.addf %56, %59 : vector<8x512xf32>
    %c0_42 = arith.constant 0 : index
    %c0_43 = arith.constant 0 : index
    %61 = vector.load %arg6[%c0_42, %c0_43] : memref<1x512xf32, #tpu.memory_space<vmem>>, vector<1x512xf32>
    %62 = vector.broadcast %61 : vector<1x512xf32> to vector<8x512xf32>
    %63 = arith.addf %60, %62 : vector<8x512xf32>
    %64 = vector.extract_strided_slice %63 {offsets = [0, 0], sizes = [8, 128], strides = [1, 1]} : vector<8x512xf32> to vector<8x128xf32>
    %65 = arith.negf %64 : vector<8x128xf32>
    %66 = math.exp %65 : vector<8x128xf32>
    %cst_44 = arith.constant 1.000000e+00 : f32
    %67 = vector.broadcast %cst_44 : f32 to vector<8x128xf32>
    %68 = arith.addf %67, %66 : vector<8x128xf32>
    %69 = arith.divf %67, %68 : vector<8x128xf32>
    %70 = vector.extract_strided_slice %63 {offsets = [0, 128], sizes = [8, 128], strides = [1, 1]} : vector<8x512xf32> to vector<8x128xf32>
    %71 = arith.negf %70 : vector<8x128xf32>
    %72 = math.exp %71 : vector<8x128xf32>
    %cst_45 = arith.constant 1.000000e+00 : f32
    %73 = vector.broadcast %cst_45 : f32 to vector<8x128xf32>
    %74 = arith.addf %73, %72 : vector<8x128xf32>
    %75 = arith.divf %73, %74 : vector<8x128xf32>
    %76 = vector.extract_strided_slice %63 {offsets = [0, 256], sizes = [8, 128], strides = [1, 1]} : vector<8x512xf32> to vector<8x128xf32>
    %77 = math.tanh %76 : vector<8x128xf32>
    %78 = vector.extract_strided_slice %63 {offsets = [0, 384], sizes = [8, 128], strides = [1, 1]} : vector<8x512xf32> to vector<8x128xf32>
    %79 = arith.negf %78 : vector<8x128xf32>
    %80 = math.exp %79 : vector<8x128xf32>
    %cst_46 = arith.constant 1.000000e+00 : f32
    %81 = vector.broadcast %cst_46 : f32 to vector<8x128xf32>
    %82 = arith.addf %81, %80 : vector<8x128xf32>
    %83 = arith.divf %81, %82 : vector<8x128xf32>
    %84 = arith.mulf %75, %24 : vector<8x128xf32>
    %85 = arith.mulf %69, %77 : vector<8x128xf32>
    %86 = arith.addf %84, %85 : vector<8x128xf32>
    %87 = math.tanh %86 : vector<8x128xf32>
    %88 = arith.mulf %83, %87 : vector<8x128xf32>
    %c0_47 = arith.constant 0 : index
    %c0_48 = arith.constant 0 : index
    %c0_49 = arith.constant 0 : index
    %89 = vector.load %arg10[%c0_47, %c0_48, %c0_49] : memref<2x8x128xf32, #tpu.memory_space<vmem>>, vector<1x8x128xf32>
    %90 = vector.shape_cast %89 : vector<1x8x128xf32> to vector<8x128xf32>
    %91 = vector.shape_cast %53 : vector<8x128xf32> to vector<1x8x128xf32>
    tpu.vector_store %arg10[%c0_47, %c0_48, %c0_49], %91 {strides = array<i32>} : memref<2x8x128xf32, #tpu.memory_space<vmem>>, vector<1x8x128xf32>,
    %c0_50 = arith.constant 0 : index
    %c0_51 = arith.constant 0 : index
    %c0_52 = arith.constant 0 : index
    %92 = vector.load %arg11[%c0_50, %c0_51, %c0_52] : memref<2x8x128xf32, #tpu.memory_space<vmem>>, vector<1x8x128xf32>
    %93 = vector.shape_cast %92 : vector<1x8x128xf32> to vector<8x128xf32>
    %94 = vector.shape_cast %51 : vector<8x128xf32> to vector<1x8x128xf32>
    tpu.vector_store %arg11[%c0_50, %c0_51, %c0_52], %94 {strides = array<i32>} : memref<2x8x128xf32, #tpu.memory_space<vmem>>, vector<1x8x128xf32>,
    %c1_53 = arith.constant 1 : index
    %c0_54 = arith.constant 0 : index
    %c0_55 = arith.constant 0 : index
    %95 = vector.load %arg10[%c1_53, %c0_54, %c0_55] : memref<2x8x128xf32, #tpu.memory_space<vmem>>, vector<1x8x128xf32>
    %96 = vector.shape_cast %95 : vector<1x8x128xf32> to vector<8x128xf32>
    %97 = vector.shape_cast %88 : vector<8x128xf32> to vector<1x8x128xf32>
    tpu.vector_store %arg10[%c1_53, %c0_54, %c0_55], %97 {strides = array<i32>} : memref<2x8x128xf32, #tpu.memory_space<vmem>>, vector<1x8x128xf32>,
    %c1_56 = arith.constant 1 : index
    %c0_57 = arith.constant 0 : index
    %c0_58 = arith.constant 0 : index
    %98 = vector.load %arg11[%c1_56, %c0_57, %c0_58] : memref<2x8x128xf32, #tpu.memory_space<vmem>>, vector<1x8x128xf32>
    %99 = vector.shape_cast %98 : vector<1x8x128xf32> to vector<8x128xf32>
    %100 = vector.shape_cast %86 : vector<8x128xf32> to vector<1x8x128xf32>
    tpu.vector_store %arg11[%c1_56, %c0_57, %c0_58], %100 {strides = array<i32>} : memref<2x8x128xf32, #tpu.memory_space<vmem>>, vector<1x8x128xf32>,
    %101 = arith.index_cast %14 : i32 to index
    %c0_59 = arith.constant 0 : index
    %102 = vector.load %arg13[%101, %c0_59] : memref<64x128xf32, #tpu.memory_space<vmem>>, vector<8x128xf32>
    tpu.vector_store %arg13[%101, %c0_59], %88 {strides = array<i32>} : memref<64x128xf32, #tpu.memory_space<vmem>>, vector<8x128xf32>,
    %c1_i32 = arith.constant 1 : i32
    %c8_i32_60 = arith.constant 8 : i32
    %103 = arith.muli %c1_i32, %c8_i32_60 : i32
    %104 = tpu.assume_multiple %103, 8 : i32
    %105 = arith.index_cast %104 : i32 to index
    %c0_61 = arith.constant 0 : index
    %106 = vector.load %arg12[%105, %c0_61] : memref<16x512xf32, #tpu.memory_space<vmem>>, vector<8x512xf32>
    %c0_62 = arith.constant 0 : index
    %c0_63 = arith.constant 0 : index
    %c0_64 = arith.constant 0 : index
    %107 = vector.load %arg10[%c0_62, %c0_63, %c0_64] : memref<2x8x128xf32, #tpu.memory_space<vmem>>, vector<1x8x128xf32>
    %108 = vector.shape_cast %107 : vector<1x8x128xf32> to vector<8x128xf32>
    %c0_65 = arith.constant 0 : index
    %c0_66 = arith.constant 0 : index
    %c0_67 = arith.constant 0 : index
    %109 = vector.load %arg11[%c0_65, %c0_66, %c0_67] : memref<2x8x128xf32, #tpu.memory_space<vmem>>, vector<1x8x128xf32>
    %110 = vector.shape_cast %109 : vector<1x8x128xf32> to vector<8x128xf32>
    %c1_68 = arith.constant 1 : index
    %c0_69 = arith.constant 0 : index
    %c0_70 = arith.constant 0 : index
    %111 = vector.load %arg10[%c1_68, %c0_69, %c0_70] : memref<2x8x128xf32, #tpu.memory_space<vmem>>, vector<1x8x128xf32>
    %112 = vector.shape_cast %111 : vector<1x8x128xf32> to vector<8x128xf32>
    %c1_71 = arith.constant 1 : index
    %c0_72 = arith.constant 0 : index
    %c0_73 = arith.constant 0 : index
    %113 = vector.load %arg11[%c1_71, %c0_72, %c0_73] : memref<2x8x128xf32, #tpu.memory_space<vmem>>, vector<1x8x128xf32>
    %114 = vector.shape_cast %113 : vector<1x8x128xf32> to vector<8x128xf32>
    %115 = arith.truncf %108 : vector<8x128xf32> to vector<8x128xbf16>
    %c0_74 = arith.constant 0 : index
    %c0_75 = arith.constant 0 : index
    %116 = vector.load %arg2[%c0_74, %c0_75] : memref<128x512xbf16, #tpu.memory_space<vmem>>, vector<128x512xbf16>
    %cst_76 = arith.constant dense<0.000000e+00> : vector<8x512xf32>
    %117 = tpu.matmul %115, %116, %cst_76 {dimension_numbers = #tpu.dot_dimension_numbers<[1], [0], [0], [1], [0, 0, 1, 1], [], []>} : vector<8x128xbf16>, vector<128x512xbf16>, vector<8x512xf32> -> vector<8x512xf32>
    %118 = arith.addf %106, %117 : vector<8x512xf32>
    %119 = vector.extract_strided_slice %118 {offsets = [0, 0], sizes = [8, 128], strides = [1, 1]} : vector<8x512xf32> to vector<8x128xf32>
    %120 = arith.negf %119 : vector<8x128xf32>
    %121 = math.exp %120 : vector<8x128xf32>
    %cst_77 = arith.constant 1.000000e+00 : f32
    %122 = vector.broadcast %cst_77 : f32 to vector<8x128xf32>
    %123 = arith.addf %122, %121 : vector<8x128xf32>
    %124 = arith.divf %122, %123 : vector<8x128xf32>
    %125 = vector.extract_strided_slice %118 {offsets = [0, 128], sizes = [8, 128], strides = [1, 1]} : vector<8x512xf32> to vector<8x128xf32>
    %126 = arith.negf %125 : vector<8x128xf32>
    %127 = math.exp %126 : vector<8x128xf32>
    %cst_78 = arith.constant 1.000000e+00 : f32
    %128 = vector.broadcast %cst_78 : f32 to vector<8x128xf32>
    %129 = arith.addf %128, %127 : vector<8x128xf32>
    %130 = arith.divf %128, %129 : vector<8x128xf32>
    %131 = vector.extract_strided_slice %118 {offsets = [0, 256], sizes = [8, 128], strides = [1, 1]} : vector<8x512xf32> to vector<8x128xf32>
    %132 = math.tanh %131 : vector<8x128xf32>
    %133 = vector.extract_strided_slice %118 {offsets = [0, 384], sizes = [8, 128], strides = [1, 1]} : vector<8x512xf32> to vector<8x128xf32>
    %134 = arith.negf %133 : vector<8x128xf32>
    %135 = math.exp %134 : vector<8x128xf32>
    %cst_79 = arith.constant 1.000000e+00 : f32
    %136 = vector.broadcast %cst_79 : f32 to vector<8x128xf32>
    %137 = arith.addf %136, %135 : vector<8x128xf32>
    %138 = arith.divf %136, %137 : vector<8x128xf32>
    %139 = arith.mulf %130, %110 : vector<8x128xf32>
    %140 = arith.mulf %124, %132 : vector<8x128xf32>
    %141 = arith.addf %139, %140 : vector<8x128xf32>
    %142 = math.tanh %141 : vector<8x128xf32>
    %143 = arith.mulf %138, %142 : vector<8x128xf32>
    %144 = arith.truncf %143 : vector<8x128xf32> to vector<8x128xbf16>
    %c0_80 = arith.constant 0 : index
    %c0_81 = arith.constant 0 : index
    %145 = vector.load %arg4[%c0_80, %c0_81] : memref<128x512xbf16, #tpu.memory_space<vmem>>, vector<128x512xbf16>
    %cst_82 = arith.constant dense<0.000000e+00> : vector<8x512xf32>
    %146 = tpu.matmul %144, %145, %cst_82 {dimension_numbers = #tpu.dot_dimension_numbers<[1], [0], [0], [1], [0, 0, 1, 1], [], []>} : vector<8x128xbf16>, vector<128x512xbf16>, vector<8x512xf32> -> vector<8x512xf32>
    %147 = arith.truncf %112 : vector<8x128xf32> to vector<8x128xbf16>
    %c0_83 = arith.constant 0 : index
    %c0_84 = arith.constant 0 : index
    %148 = vector.load %arg5[%c0_83, %c0_84] : memref<128x512xbf16, #tpu.memory_space<vmem>>, vector<128x512xbf16>
    %cst_85 = arith.constant dense<0.000000e+00> : vector<8x512xf32>
    %149 = tpu.matmul %147, %148, %cst_85 {dimension_numbers = #tpu.dot_dimension_numbers<[1], [0], [0], [1], [0, 0, 1, 1], [], []>} : vector<8x128xbf16>, vector<128x512xbf16>, vector<8x512xf32> -> vector<8x512xf32>
    %150 = arith.addf %146, %149 : vector<8x512xf32>
    %c0_86 = arith.constant 0 : index
    %c0_87 = arith.constant 0 : index
    %151 = vector.load %arg6[%c0_86, %c0_87] : memref<1x512xf32, #tpu.memory_space<vmem>>, vector<1x512xf32>
    %152 = vector.broadcast %151 : vector<1x512xf32> to vector<8x512xf32>
    %153 = arith.addf %150, %152 : vector<8x512xf32>
    %154 = vector.extract_strided_slice %153 {offsets = [0, 0], sizes = [8, 128], strides = [1, 1]} : vector<8x512xf32> to vector<8x128xf32>
    %155 = arith.negf %154 : vector<8x128xf32>
    %156 = math.exp %155 : vector<8x128xf32>
    %cst_88 = arith.constant 1.000000e+00 : f32
    %157 = vector.broadcast %cst_88 : f32 to vector<8x128xf32>
    %158 = arith.addf %157, %156 : vector<8x128xf32>
    %159 = arith.divf %157, %158 : vector<8x128xf32>
    %160 = vector.extract_strided_slice %153 {offsets = [0, 128], sizes = [8, 128], strides = [1, 1]} : vector<8x512xf32> to vector<8x128xf32>
    %161 = arith.negf %160 : vector<8x128xf32>
    %162 = math.exp %161 : vector<8x128xf32>
    %cst_89 = arith.constant 1.000000e+00 : f32
    %163 = vector.broadcast %cst_89 : f32 to vector<8x128xf32>
    %164 = arith.addf %163, %162 : vector<8x128xf32>
    %165 = arith.divf %163, %164 : vector<8x128xf32>
    %166 = vector.extract_strided_slice %153 {offsets = [0, 256], sizes = [8, 128], strides = [1, 1]} : vector<8x512xf32> to vector<8x128xf32>
    %167 = math.tanh %166 : vector<8x128xf32>
    %168 = vector.extract_strided_slice %153 {offsets = [0, 384], sizes = [8, 128], strides = [1, 1]} : vector<8x512xf32> to vector<8x128xf32>
    %169 = arith.negf %168 : vector<8x128xf32>
    %170 = math.exp %169 : vector<8x128xf32>
    %cst_90 = arith.constant 1.000000e+00 : f32
    %171 = vector.broadcast %cst_90 : f32 to vector<8x128xf32>
    %172 = arith.addf %171, %170 : vector<8x128xf32>
    %173 = arith.divf %171, %172 : vector<8x128xf32>
    %174 = arith.mulf %165, %114 : vector<8x128xf32>
    %175 = arith.mulf %159, %167 : vector<8x128xf32>
    %176 = arith.addf %174, %175 : vector<8x128xf32>
    %177 = math.tanh %176 : vector<8x128xf32>
    %178 = arith.mulf %173, %177 : vector<8x128xf32>
    %c0_91 = arith.constant 0 : index
    %c0_92 = arith.constant 0 : index
    %c0_93 = arith.constant 0 : index
    %179 = vector.load %arg10[%c0_91, %c0_92, %c0_93] : memref<2x8x128xf32, #tpu.memory_space<vmem>>, vector<1x8x128xf32>
    %180 = vector.shape_cast %179 : vector<1x8x128xf32> to vector<8x128xf32>
    %181 = vector.shape_cast %143 : vector<8x128xf32> to vector<1x8x128xf32>
    tpu.vector_store %arg10[%c0_91, %c0_92, %c0_93], %181 {strides = array<i32>} : memref<2x8x128xf32, #tpu.memory_space<vmem>>, vector<1x8x128xf32>,
    %c0_94 = arith.constant 0 : index
    %c0_95 = arith.constant 0 : index
    %c0_96 = arith.constant 0 : index
    %182 = vector.load %arg11[%c0_94, %c0_95, %c0_96] : memref<2x8x128xf32, #tpu.memory_space<vmem>>, vector<1x8x128xf32>
    %183 = vector.shape_cast %182 : vector<1x8x128xf32> to vector<8x128xf32>
    %184 = vector.shape_cast %141 : vector<8x128xf32> to vector<1x8x128xf32>
    tpu.vector_store %arg11[%c0_94, %c0_95, %c0_96], %184 {strides = array<i32>} : memref<2x8x128xf32, #tpu.memory_space<vmem>>, vector<1x8x128xf32>,
    %c1_97 = arith.constant 1 : index
    %c0_98 = arith.constant 0 : index
    %c0_99 = arith.constant 0 : index
    %185 = vector.load %arg10[%c1_97, %c0_98, %c0_99] : memref<2x8x128xf32, #tpu.memory_space<vmem>>, vector<1x8x128xf32>
    %186 = vector.shape_cast %185 : vector<1x8x128xf32> to vector<8x128xf32>
    %187 = vector.shape_cast %178 : vector<8x128xf32> to vector<1x8x128xf32>
    tpu.vector_store %arg10[%c1_97, %c0_98, %c0_99], %187 {strides = array<i32>} : memref<2x8x128xf32, #tpu.memory_space<vmem>>, vector<1x8x128xf32>,
    %c1_100 = arith.constant 1 : index
    %c0_101 = arith.constant 0 : index
    %c0_102 = arith.constant 0 : index
    %188 = vector.load %arg11[%c1_100, %c0_101, %c0_102] : memref<2x8x128xf32, #tpu.memory_space<vmem>>, vector<1x8x128xf32>
    %189 = vector.shape_cast %188 : vector<1x8x128xf32> to vector<8x128xf32>
    %190 = vector.shape_cast %176 : vector<8x128xf32> to vector<1x8x128xf32>
    tpu.vector_store %arg11[%c1_100, %c0_101, %c0_102], %190 {strides = array<i32>} : memref<2x8x128xf32, #tpu.memory_space<vmem>>, vector<1x8x128xf32>,
    %191 = arith.index_cast %104 : i32 to index
    %c0_103 = arith.constant 0 : index
    %192 = vector.load %arg13[%191, %c0_103] : memref<64x128xf32, #tpu.memory_space<vmem>>, vector<8x128xf32>
    tpu.vector_store %arg13[%191, %c0_103], %178 {strides = array<i32>} : memref<64x128xf32, #tpu.memory_space<vmem>>, vector<8x128xf32>,
    %c2_i32 = arith.constant 2 : i32
    %cst_104 = arith.constant 0.000000e+00 : f32
    %193 = vector.broadcast %cst_104 : f32 to vector<8x128xf32>
    %c0_105 = arith.constant 0 : index
    %c0_106 = arith.constant 0 : index
    %194 = tpu.strided_load %arg13[%c0_105, %c0_106] {strides = array<i32: 8, 1>} : memref<64x128xf32, #tpu.memory_space<vmem>>, vector<8x128xf32>
    %195 = arith.truncf %194 : vector<8x128xf32> to vector<8x128xbf16>
    %c0_107 = arith.constant 0 : index
    %c0_108 = arith.constant 0 : index
    %c0_109 = arith.constant 0 : index
    %196 = vector.load %arg7[%c0_107, %c0_108, %c0_109] : memref<8x128x128xbf16, #tpu.memory_space<vmem>>, vector<1x128x128xbf16>
    %197 = vector.shape_cast %196 : vector<1x128x128xbf16> to vector<128x128xbf16>
    %cst_110 = arith.constant dense<0.000000e+00> : vector<8x128xf32>
    %198 = tpu.matmul %195, %197, %cst_110 {dimension_numbers = #tpu.dot_dimension_numbers<[1], [0], [0], [1], [0, 0, 1, 1], [], []>} : vector<8x128xbf16>, vector<128x128xbf16>, vector<8x128xf32> -> vector<8x128xf32>
    %199 = arith.addf %193, %198 : vector<8x128xf32>
    %c1_111 = arith.constant 1 : index
    %c0_112 = arith.constant 0 : index
    %200 = tpu.strided_load %arg13[%c1_111, %c0_112] {strides = array<i32: 8, 1>} : memref<64x128xf32, #tpu.memory_space<vmem>>, vector<8x128xf32>
    %201 = arith.truncf %200 : vector<8x128xf32> to vector<8x128xbf16>
    %c1_113 = arith.constant 1 : index
    %c0_114 = arith.constant 0 : index
    %c0_115 = arith.constant 0 : index
    %202 = vector.load %arg7[%c1_113, %c0_114, %c0_115] : memref<8x128x128xbf16, #tpu.memory_space<vmem>>, vector<1x128x128xbf16>
    %203 = vector.shape_cast %202 : vector<1x128x128xbf16> to vector<128x128xbf16>
    %cst_116 = arith.constant dense<0.000000e+00> : vector<8x128xf32>
    %204 = tpu.matmul %201, %203, %cst_116 {dimension_numbers = #tpu.dot_dimension_numbers<[1], [0], [0], [1], [0, 0, 1, 1], [], []>} : vector<8x128xbf16>, vector<128x128xbf16>, vector<8x128xf32> -> vector<8x128xf32>
    %205 = arith.addf %199, %204 : vector<8x128xf32>
    %c2 = arith.constant 2 : index
    %c0_117 = arith.constant 0 : index
    %206 = tpu.strided_load %arg13[%c2, %c0_117] {strides = array<i32: 8, 1>} : memref<64x128xf32, #tpu.memory_space<vmem>>, vector<8x128xf32>
    %207 = arith.truncf %206 : vector<8x128xf32> to vector<8x128xbf16>
    %c2_118 = arith.constant 2 : index
    %c0_119 = arith.constant 0 : index
    %c0_120 = arith.constant 0 : index
    %208 = vector.load %arg7[%c2_118, %c0_119, %c0_120] : memref<8x128x128xbf16, #tpu.memory_space<vmem>>, vector<1x128x128xbf16>
    %209 = vector.shape_cast %208 : vector<1x128x128xbf16> to vector<128x128xbf16>
    %cst_121 = arith.constant dense<0.000000e+00> : vector<8x128xf32>
    %210 = tpu.matmul %207, %209, %cst_121 {dimension_numbers = #tpu.dot_dimension_numbers<[1], [0], [0], [1], [0, 0, 1, 1], [], []>} : vector<8x128xbf16>, vector<128x128xbf16>, vector<8x128xf32> -> vector<8x128xf32>
    %211 = arith.addf %205, %210 : vector<8x128xf32>
    %c3 = arith.constant 3 : index
    %c0_122 = arith.constant 0 : index
    %212 = tpu.strided_load %arg13[%c3, %c0_122] {strides = array<i32: 8, 1>} : memref<64x128xf32, #tpu.memory_space<vmem>>, vector<8x128xf32>
    %213 = arith.truncf %212 : vector<8x128xf32> to vector<8x128xbf16>
    %c3_123 = arith.constant 3 : index
    %c0_124 = arith.constant 0 : index
    %c0_125 = arith.constant 0 : index
    %214 = vector.load %arg7[%c3_123, %c0_124, %c0_125] : memref<8x128x128xbf16, #tpu.memory_space<vmem>>, vector<1x128x128xbf16>
    %215 = vector.shape_cast %214 : vector<1x128x128xbf16> to vector<128x128xbf16>
    %cst_126 = arith.constant dense<0.000000e+00> : vector<8x128xf32>
    %216 = tpu.matmul %213, %215, %cst_126 {dimension_numbers = #tpu.dot_dimension_numbers<[1], [0], [0], [1], [0, 0, 1, 1], [], []>} : vector<8x128xbf16>, vector<128x128xbf16>, vector<8x128xf32> -> vector<8x128xf32>
    %217 = arith.addf %211, %216 : vector<8x128xf32>
    %c4 = arith.constant 4 : index
    %c0_127 = arith.constant 0 : index
    %218 = tpu.strided_load %arg13[%c4, %c0_127] {strides = array<i32: 8, 1>} : memref<64x128xf32, #tpu.memory_space<vmem>>, vector<8x128xf32>
    %219 = arith.truncf %218 : vector<8x128xf32> to vector<8x128xbf16>
    %c4_128 = arith.constant 4 : index
    %c0_129 = arith.constant 0 : index
    %c0_130 = arith.constant 0 : index
    %220 = vector.load %arg7[%c4_128, %c0_129, %c0_130] : memref<8x128x128xbf16, #tpu.memory_space<vmem>>, vector<1x128x128xbf16>
    %221 = vector.shape_cast %220 : vector<1x128x128xbf16> to vector<128x128xbf16>
    %cst_131 = arith.constant dense<0.000000e+00> : vector<8x128xf32>
    %222 = tpu.matmul %219, %221, %cst_131 {dimension_numbers = #tpu.dot_dimension_numbers<[1], [0], [0], [1], [0, 0, 1, 1], [], []>} : vector<8x128xbf16>, vector<128x128xbf16>, vector<8x128xf32> -> vector<8x128xf32>
    %223 = arith.addf %217, %222 : vector<8x128xf32>
    %c5 = arith.constant 5 : index
    %c0_132 = arith.constant 0 : index
    %224 = tpu.strided_load %arg13[%c5, %c0_132] {strides = array<i32: 8, 1>} : memref<64x128xf32, #tpu.memory_space<vmem>>, vector<8x128xf32>
    %225 = arith.truncf %224 : vector<8x128xf32> to vector<8x128xbf16>
    %c5_133 = arith.constant 5 : index
    %c0_134 = arith.constant 0 : index
    %c0_135 = arith.constant 0 : index
    %226 = vector.load %arg7[%c5_133, %c0_134, %c0_135] : memref<8x128x128xbf16, #tpu.memory_space<vmem>>, vector<1x128x128xbf16>
    %227 = vector.shape_cast %226 : vector<1x128x128xbf16> to vector<128x128xbf16>
    %cst_136 = arith.constant dense<0.000000e+00> : vector<8x128xf32>
    %228 = tpu.matmul %225, %227, %cst_136 {dimension_numbers = #tpu.dot_dimension_numbers<[1], [0], [0], [1], [0, 0, 1, 1], [], []>} : vector<8x128xbf16>, vector<128x128xbf16>, vector<8x128xf32> -> vector<8x128xf32>
    %229 = arith.addf %223, %228 : vector<8x128xf32>
    %c6 = arith.constant 6 : index
    %c0_137 = arith.constant 0 : index
    %230 = tpu.strided_load %arg13[%c6, %c0_137] {strides = array<i32: 8, 1>} : memref<64x128xf32, #tpu.memory_space<vmem>>, vector<8x128xf32>
    %231 = arith.truncf %230 : vector<8x128xf32> to vector<8x128xbf16>
    %c6_138 = arith.constant 6 : index
    %c0_139 = arith.constant 0 : index
    %c0_140 = arith.constant 0 : index
    %232 = vector.load %arg7[%c6_138, %c0_139, %c0_140] : memref<8x128x128xbf16, #tpu.memory_space<vmem>>, vector<1x128x128xbf16>
    %233 = vector.shape_cast %232 : vector<1x128x128xbf16> to vector<128x128xbf16>
    %cst_141 = arith.constant dense<0.000000e+00> : vector<8x128xf32>
    %234 = tpu.matmul %231, %233, %cst_141 {dimension_numbers = #tpu.dot_dimension_numbers<[1], [0], [0], [1], [0, 0, 1, 1], [], []>} : vector<8x128xbf16>, vector<128x128xbf16>, vector<8x128xf32> -> vector<8x128xf32>
    %235 = arith.addf %229, %234 : vector<8x128xf32>
    %c7 = arith.constant 7 : index
    %c0_142 = arith.constant 0 : index
    %236 = tpu.strided_load %arg13[%c7, %c0_142] {strides = array<i32: 8, 1>} : memref<64x128xf32, #tpu.memory_space<vmem>>, vector<8x128xf32>
    %237 = arith.truncf %236 : vector<8x128xf32> to vector<8x128xbf16>
    %c7_143 = arith.constant 7 : index
    %c0_144 = arith.constant 0 : index
    %c0_145 = arith.constant 0 : index
    %238 = vector.load %arg7[%c7_143, %c0_144, %c0_145] : memref<8x128x128xbf16, #tpu.memory_space<vmem>>, vector<1x128x128xbf16>
    %239 = vector.shape_cast %238 : vector<1x128x128xbf16> to vector<128x128xbf16>
    %cst_146 = arith.constant dense<0.000000e+00> : vector<8x128xf32>
    %240 = tpu.matmul %237, %239, %cst_146 {dimension_numbers = #tpu.dot_dimension_numbers<[1], [0], [0], [1], [0, 0, 1, 1], [], []>} : vector<8x128xbf16>, vector<128x128xbf16>, vector<8x128xf32> -> vector<8x128xf32>
    %241 = arith.addf %235, %240 : vector<8x128xf32>
    %c0_147 = arith.constant 0 : index
    %c0_148 = arith.constant 0 : index
    %242 = vector.load %arg8[%c0_147, %c0_148] : memref<1x128xf32, #tpu.memory_space<vmem>>, vector<1x128xf32>
    %243 = vector.broadcast %242 : vector<1x128xf32> to vector<8x128xf32>
    %244 = arith.addf %241, %243 : vector<8x128xf32>
    %c0_149 = arith.constant 0 : index
    %c0_150 = arith.constant 0 : index
    %245 = vector.load %arg9[%c0_149, %c0_150] : memref<8x128xf32, #tpu.memory_space<vmem>>, vector<8x128xf32>
    tpu.vector_store %arg9[%c0_149, %c0_150], %244 {strides = array<i32>} : memref<8x128xf32, #tpu.memory_space<vmem>>, vector<8x128xf32>,
    return
  }
}

</mosaic_0001>

<llo_original>
// kernel: tpu_custom_call.1
$region0: #{tpu_custom_call.1}
  #allocation0 [shape = 'u32[]', space=smem, size = 0x4, offset = 0x4, fixed_abs, tag = 'smem constant byte address 0x4 - core index']
  #allocation1 [shape = 'u32[144,128]{1,0:T(1,128)}', space=vmem, size = 0x12000, scoped, tag = 'internal scratch']
  #allocation2 [shape = 'f32[16,512]{1,0:T(8,128)}', space=vmem, size = 0x8000, scoped, tag = 'scratch operand']
  #allocation3 [shape = 'f32[64,128]{1,0:T(8,128)}', space=vmem, size = 0x8000, scoped, tag = 'scratch operand']
  %s0 = inlined_call_operand.hbm [shape: bf16[16,16], index: 0, kind: input, shape index: {}]
  %s1 = inlined_call_operand.hbm [shape: bf16[16,512], index: 1, kind: input, shape index: {}]
  %s2 = inlined_call_operand.hbm [shape: bf16[128,512], index: 2, kind: input, shape index: {}]
  %s3 = inlined_call_operand.vmem [shape: f32[1,512], index: 3, kind: input, shape index: {}]
  %s4 = inlined_call_operand.hbm [shape: bf16[128,512], index: 4, kind: input, shape index: {}]
  %s5 = inlined_call_operand.hbm [shape: bf16[128,512], index: 5, kind: input, shape index: {}]
  %s6 = inlined_call_operand.vmem [shape: f32[1,512], index: 6, kind: input, shape index: {}]
  %s7 = inlined_call_operand.hbm [shape: bf16[8,128,128], index: 7, kind: input, shape index: {}]
  %s8 = inlined_call_operand.vmem [shape: f32[1,128], index: 8, kind: input, shape index: {}]
  %s9 = inlined_call_operand.hbm [shape: f32[8,128], index: 9, kind: output, shape index: {0}]
  %s10 = inlined_call_operand.hbm [shape: f32[2,8,128], index: 10, kind: output, shape index: {1}]
  %s11 = inlined_call_operand.hbm [shape: f32[2,8,128], index: 11, kind: output, shape index: {2}]
  %12 = xla_tuple %s9, %s10, %s11
  %s13 = sld [smem:[#allocation0]]
  $region86: #{tpu_custom_call.1} parent=0
    _
  %s15 = ssub.s32 1, %s13
  %s16 = scalar_select 0, %s15, %s13
  $region1: #{tpu_custom_call.1} parent=0
    #allocation4 [shape = 'u8[4096]{0}', space=vmem, size = 0x1000, scoped, tag = 'input window, operand 0, single buffered']
    #allocation5 [shape = 's32[1]{0}', space=sflag, size = 0x4, scoped, tag = 'scoped memory for tpu_custom_call.1']
    #allocation6 [shape = 's32[1]{0}', space=sflag, size = 0x4, scoped, tag = 'scoped memory for tpu_custom_call.1']
    #allocation7 [shape = 'u8[16384]{0}', space=vmem, size = 0x4000, scoped, tag = 'input window, operand 1, single buffered']
    #allocation8 [shape = 's32[1]{0}', space=sflag, size = 0x4, scoped, tag = 'scoped memory for tpu_custom_call.1']
    #allocation9 [shape = 'u8[131072]{0}', space=vmem, size = 0x20000, scoped, tag = 'input window, operand 2, single buffered']
    #allocation10 [shape = 'u8[131072]{0}', space=vmem, size = 0x20000, scoped, tag = 'input window, operand 4, single buffered']
    #allocation11 [shape = 's32[1]{0}', space=sflag, size = 0x4, scoped, tag = 'scoped memory for tpu_custom_call.1']
    #allocation12 [shape = 'u8[131072]{0}', space=vmem, size = 0x20000, scoped, tag = 'input window, operand 5, single buffered']
    #allocation13 [shape = 'u8[262144]{0}', space=vmem, size = 0x40000, scoped, tag = 'input window, operand 7, single buffered']
    #allocation14 [shape = 's32[1]{0}', space=sflag, size = 0x4, scoped, tag = 'scoped memory for tpu_custom_call.1']
    #allocation15 [shape = 'u8[4096]{0}', space=vmem, size = 0x1000, scoped, tag = 'output window, operand 0, single buffered']
    #allocation16 [shape = 'u8[8192]{0}', space=vmem, size = 0x2000, scoped, tag = 'output window, operand 1, single buffered']
    #allocation17 [shape = 's32[1]{0}', space=sflag, size = 0x4, scoped, tag = 'scoped memory for tpu_custom_call.1']
    #allocation18 [shape = 'u8[8192]{0}', space=vmem, size = 0x2000, scoped, tag = 'output window, operand 2, single buffered']
    %17 = vsyncpa [#allocation5], 0
    %18 = vsyncpa [#allocation8], 0
    %19 = vsyncpa [#allocation11], 0
    %20 = vsyncpa [#allocation14], 0
    %21 = vsyncpa [#allocation6], 0
    %22 = vsyncpa [#allocation17], 0
    // Predicated region
    $region2: #{tpu_custom_call.1} parent=1 // pred_check
      _
    $region3: #{tpu_custom_call.1} parent=1 // pred_check_branch
      %24 = sbr.rel (0) target = $region5
    $region4: #{tpu_custom_call.1} parent=1 // pred_region
      %s26 = ssub.s32 128, 128
      %27 = vsyncadd [#allocation5], %s26
      %s28 = sshll.u32 [#allocation4], 4
      %s29 = int_to_ptr.vmem [resolvable:$true] %s28
      %34 = dma.hbm_to_vmem [thread:$0]  %s0, 128, %s29, [#allocation5], 64, 64, 4
    $region5: #{tpu_custom_call.1} parent=1 // pred_fallthru
      _
    // Predicated region
    $region6: #{tpu_custom_call.1} parent=1 // pred_check
      _
    $region7: #{tpu_custom_call.1} parent=1 // pred_check_branch
      %36 = sbr.rel (0) target = $region9
    $region8: #{tpu_custom_call.1} parent=1 // pred_region
      %s38 = ssub.s32 512, 512
      %39 = vsyncadd [#allocation8], %s38
      %s40 = sshll.u32 [#allocation7], 4
      %s41 = int_to_ptr.vmem [resolvable:$true] %s40
      %46 = dma.hbm_to_vmem [thread:$0]  %s1, 512, %s41, [#allocation8], 256, 256, 16
    $region9: #{tpu_custom_call.1} parent=1 // pred_fallthru
      _
    // Predicated region
    $region10: #{tpu_custom_call.1} parent=1 // pred_check
      _
    $region11: #{tpu_custom_call.1} parent=1 // pred_check_branch
      %48 = sbr.rel (0) target = $region13
    $region12: #{tpu_custom_call.1} parent=1 // pred_region
      %s50 = ssub.s32 4096, 4096
      %51 = vsyncadd [#allocation8], %s50
      %s52 = sshll.u32 [#allocation9], 4
      %s53 = int_to_ptr.vmem [resolvable:$true] %s52
      %58 = dma.hbm_to_vmem [thread:$0]  %s2, 4096, %s53, [#allocation8], 256, 256, 16
    $region13: #{tpu_custom_call.1} parent=1 // pred_fallthru
      _
    // Predicated region
    $region14: #{tpu_custom_call.1} parent=1 // pred_check
      _
    $region15: #{tpu_custom_call.1} parent=1 // pred_check_branch
      %60 = sbr.rel (0) target = $region17
    $region16: #{tpu_custom_call.1} parent=1 // pred_region
      _
    $region17: #{tpu_custom_call.1} parent=1 // pred_fallthru
      _
    // Predicated region
    $region18: #{tpu_custom_call.1} parent=1 // pred_check
      _
    $region19: #{tpu_custom_call.1} parent=1 // pred_check_branch
      %62 = sbr.rel (0) target = $region21
    $region20: #{tpu_custom_call.1} parent=1 // pred_region
      %s64 = ssub.s32 4096, 4096
      %65 = vsyncadd [#allocation11], %s64
      %s66 = sshll.u32 [#allocation10], 4
      %s67 = int_to_ptr.vmem [resolvable:$true] %s66
      %72 = dma.hbm_to_vmem [thread:$0]  %s4, 4096, %s67, [#allocation11], 256, 256, 16
    $region21: #{tpu_custom_call.1} parent=1 // pred_fallthru
      _
    // Predicated region
    $region22: #{tpu_custom_call.1} parent=1 // pred_check
      _
    $region23: #{tpu_custom_call.1} parent=1 // pred_check_branch
      %74 = sbr.rel (0) target = $region25
    $region24: #{tpu_custom_call.1} parent=1 // pred_region
      %s76 = ssub.s32 4096, 4096
      %77 = vsyncadd [#allocation11], %s76
      %s78 = sshll.u32 [#allocation12], 4
      %s79 = int_to_ptr.vmem [resolvable:$true] %s78
      %84 = dma.hbm_to_vmem [thread:$0]  %s5, 4096, %s79, [#allocation11], 256, 256, 16
    $region25: #{tpu_custom_call.1} parent=1 // pred_fallthru
      _
    // Predicated region
    $region26: #{tpu_custom_call.1} parent=1 // pred_check
      _
    $region27: #{tpu_custom_call.1} parent=1 // pred_check_branch
      %86 = sbr.rel (0) target = $region29
    $region28: #{tpu_custom_call.1} parent=1 // pred_region
      _
    $region29: #{tpu_custom_call.1} parent=1 // pred_fallthru
      _
    // Predicated region
    $region30: #{tpu_custom_call.1} parent=1 // pred_check
      _
    $region31: #{tpu_custom_call.1} parent=1 // pred_check_branch
      %88 = sbr.rel (0) target = $region33
    $region32: #{tpu_custom_call.1} parent=1 // pred_region
      %s90 = ssub.s32 8192, 8192
      %91 = vsyncadd [#allocation14], %s90
      %s92 = sshll.u32 [#allocation13], 4
      %s93 = int_to_ptr.vmem [resolvable:$true] %s92
      %98 = dma.hbm_to_vmem [thread:$0]  %s7, 8192, %s93, [#allocation14], 64, 64, 4
    $region33: #{tpu_custom_call.1} parent=1 // pred_fallthru
      _
    // Predicated region
    $region34: #{tpu_custom_call.1} parent=1 // pred_check
      _
    $region35: #{tpu_custom_call.1} parent=1 // pred_check_branch
      %100 = sbr.rel (0) target = $region37
    $region36: #{tpu_custom_call.1} parent=1 // pred_region
      _
    $region37: #{tpu_custom_call.1} parent=1 // pred_fallthru
      _
    // Predicated region
    $region38: #{tpu_custom_call.1} parent=1 // pred_check
      _
    $region39: #{tpu_custom_call.1} parent=1 // pred_check_branch
      %102 = sbr.rel (0) target = $region41
    $region40: #{tpu_custom_call.1} parent=1 // pred_region
      %103 = dma.done [#allocation5], 128
    $region41: #{tpu_custom_call.1} parent=1 // pred_fallthru
      _
    // Predicated region
    $region42: #{tpu_custom_call.1} parent=1 // pred_check
      _
    $region43: #{tpu_custom_call.1} parent=1 // pred_check_branch
      %105 = sbr.rel (0) target = $region45
    $region44: #{tpu_custom_call.1} parent=1 // pred_region
      %106 = dma.done [#allocation8], 512
    $region45: #{tpu_custom_call.1} parent=1 // pred_fallthru
      _
    // Predicated region
    $region46: #{tpu_custom_call.1} parent=1 // pred_check
      _
    $region47: #{tpu_custom_call.1} parent=1 // pred_check_branch
      %108 = sbr.rel (0) target = $region49
    $region48: #{tpu_custom_call.1} parent=1 // pred_region
      %109 = dma.done [#allocation8], 4096
    $region49: #{tpu_custom_call.1} parent=1 // pred_fallthru
      _
    // Predicated region
    $region50: #{tpu_custom_call.1} parent=1 // pred_check
      _
    $region51: #{tpu_custom_call.1} parent=1 // pred_check_branch
      %111 = sbr.rel (0) target = $region53
    $region52: #{tpu_custom_call.1} parent=1 // pred_region
      %112 = dma.done [#allocation11], 4096
    $region53: #{tpu_custom_call.1} parent=1 // pred_fallthru
      _
    // Predicated region
    $region54: #{tpu_custom_call.1} parent=1 // pred_check
      _
    $region55: #{tpu_custom_call.1} parent=1 // pred_check_branch
      %114 = sbr.rel (0) target = $region57
    $region56: #{tpu_custom_call.1} parent=1 // pred_region
      %115 = dma.done [#allocation11], 4096
    $region57: #{tpu_custom_call.1} parent=1 // pred_fallthru
      _
    // Predicated region
    $region58: #{tpu_custom_call.1} parent=1 // pred_check
      _
    $region59: #{tpu_custom_call.1} parent=1 // pred_check_branch
      %117 = sbr.rel (0) target = $region61
    $region60: #{tpu_custom_call.1} parent=1 // pred_region
      %118 = dma.done [#allocation14], 8192
    $region61: #{tpu_custom_call.1} parent=1 // pred_fallthru
      _
    %120 = vst [vmem:[#allocation16] sm:$0xff] 0.0
    %121 = vst [vmem:[#allocation16 + $0x8] sm:$0xff] 0.0
    %122 = vst [vmem:[#allocation18] sm:$0xff] 0.0
    %123 = vst [vmem:[#allocation18 + $0x8] sm:$0xff] 0.0
    %124 = vst [vmem:[#allocation3] sm:$0xff] 0.0
    %125 = vst [vmem:[#allocation3 + $0x8] sm:$0xff] 0.0
    %126 = vst [vmem:[#allocation3 + $0x10] sm:$0xff] 0.0
    %127 = vst [vmem:[#allocation3 + $0x18] sm:$0xff] 0.0
    %128 = vst [vmem:[#allocation3 + $0x20] sm:$0xff] 0.0
    %129 = vst [vmem:[#allocation3 + $0x28] sm:$0xff] 0.0
    %130 = vst [vmem:[#allocation3 + $0x30] sm:$0xff] 0.0
    %131 = vst [vmem:[#allocation3 + $0x38] sm:$0xff] 0.0
    %v132 = vld [vmem:[#allocation4] sm:$0xf]
    %v133 = vld [vmem:[#allocation4 + $0x4] sm:$0xf]
    %v134 = vld [vmem:[#allocation7] sm:$0xff]
    %v135 = vld [vmem:[#allocation7 + $0x8] sm:$0xff]
    %v136 = vld [vmem:[#allocation7 + $0x10] sm:$0xff]
    %v137 = vld [vmem:[#allocation7 + $0x18] sm:$0xff]
    %v138 = vld [vmem:[%s3] sm:$0xf]
    %v140 = vlaneseq
    %v141 = vshrl.u32 %v140, 7
    %v142 = vsub.s32 0, %v141
    %v143 = vrot.slane %v138, %v142
    %v144 = vlaneseq
    %v145 = vshrl.u32 %v144, 7
    %v146 = vsub.s32 1, %v145
    %v147 = vrot.slane %v138, %v146
    %v148 = vlaneseq
    %v149 = vshrl.u32 %v148, 7
    %v150 = vsub.s32 2, %v149
    %v151 = vrot.slane %v138, %v150
    %v152 = vlaneseq
    %v153 = vshrl.u32 %v152, 7
    %v154 = vsub.s32 3, %v153
    %v155 = vrot.slane %v138, %v154
    %v162 = vunpack.c.l.b16 %v132
    %v163 = vunpack.c.l.b16 %v133
    %v164 = vpack.c.b16 %v163, %v162
    %v169 = vunpack.c.l.b16 %v134
    %v170 = vunpack.c.h.b16 %v134
    %v171 = vunpack.c.l.b16 %v135
    %v172 = vunpack.c.h.b16 %v135
    %v173 = vunpack.c.l.b16 %v136
    %v174 = vunpack.c.h.b16 %v136
    %v175 = vunpack.c.l.b16 %v137
    %v176 = vunpack.c.h.b16 %v137
    %v177 = vpack.c.b16 %v173, %v169
    %v178 = vpack.c.b16 %v174, %v170
    %v179 = vpack.c.b16 %v175, %v171
    %v180 = vpack.c.b16 %v176, %v172
    %vm185 = vcmask 130048
    %v187 = vsel %vm185, %v164, 0
    %189 = vmatprep.subr.bf16.mxu0 %v178
    %190 = vmatpush1.bf16.msra.mxu0 %v177
    %191 = vmatprep.subr.bf16.mxu0 0
    %192 = vmatpush1.bf16.msra.mxu0 0
    %193 = vmatprep.subr.bf16.mxu0 0
    %194 = vmatpush1.bf16.msra.mxu0 0
    %195 = vmatprep.subr.bf16.mxu0 0
    %196 = vmatpush1.bf16.msra.mxu0 0
    %197 = vmatprep.subr.bf16.mxu0 0
    %198 = vmatpush1.bf16.msra.mxu0 0
    %199 = vmatprep.subr.bf16.mxu0 0
    %200 = vmatpush1.bf16.msra.mxu0 0
    %201 = vmatprep.subr.bf16.mxu0 0
    %202 = vmatpush1.bf16.msra.mxu0 0
    %203 = vmatprep.subr.bf16.mxu0 0
    %204 = vmatpush1.bf16.msra.mxu0 0
    %205 = vmatprep.subr.bf16.mxu0 0
    %206 = vmatpush1.bf16.msra.mxu0 0
    %207 = vmatprep.subr.bf16.mxu0 0
    %208 = vmatpush1.bf16.msra.mxu0 0
    %209 = vmatprep.subr.bf16.mxu0 0
    %210 = vmatpush1.bf16.msra.mxu0 0
    %211 = vmatprep.subr.bf16.mxu0 0
    %212 = vmatpush1.bf16.msra.mxu0 0
    %213 = vmatprep.subr.bf16.mxu0 0
    %214 = vmatpush1.bf16.msra.mxu0 0
    %215 = vmatprep.subr.bf16.mxu0 0
    %216 = vmatpush1.bf16.msra.mxu0 0
    %217 = vmatprep.subr.bf16.mxu0 0
    %218 = vmatpush1.bf16.msra.mxu0 0
    %219 = vmatprep.subr.bf16.mxu0 0
    %220 = vmatpush1.bf16.msra.mxu0 0
    %221 = vmatprep.mubr.bf16.mxu0 0
    %222 = vmatmul.mubr.bf16.gmra.mrb[0].mxu0 %v187
    %v223 = vpop.f32.mrb[0].mxu0
    %v224 = vadd.f32 %v143, %v223
    %v225 = vpop.f32.mrb[0].mxu0
    %v226 = vadd.f32 %v147, %v225
    %v227 = vpop.f32.mrb[0].mxu0
    %v228 = vadd.f32 %v143, %v227
    %v229 = vpop.f32.mrb[0].mxu0
    %v230 = vadd.f32 %v147, %v229
    %231 = vdwg.mxu0
    %232 = vmatprep.subr.bf16.mxu0 %v180
    %233 = vmatpush1.bf16.msra.mxu0 %v179
    %234 = vmatprep.subr.bf16.mxu0 0
    %235 = vmatpush1.bf16.msra.mxu0 0
    %236 = vmatprep.subr.bf16.mxu0 0
    %237 = vmatpush1.bf16.msra.mxu0 0
    %238 = vmatprep.subr.bf16.mxu0 0
    %239 = vmatpush1.bf16.msra.mxu0 0
    %240 = vmatprep.subr.bf16.mxu0 0
    %241 = vmatpush1.bf16.msra.mxu0 0
    %242 = vmatprep.subr.bf16.mxu0 0
    %243 = vmatpush1.bf16.msra.mxu0 0
    %244 = vmatprep.subr.bf16.mxu0 0
    %245 = vmatpush1.bf16.msra.mxu0 0
    %246 = vmatprep.subr.bf16.mxu0 0
    %247 = vmatpush1.bf16.msra.mxu0 0
    %248 = vmatprep.subr.bf16.mxu0 0
    %249 = vmatpush1.bf16.msra.mxu0 0
    %250 = vmatprep.subr.bf16.mxu0 0
    %251 = vmatpush1.bf16.msra.mxu0 0
    %252 = vmatprep.subr.bf16.mxu0 0
    %253 = vmatpush1.bf16.msra.mxu0 0
    %254 = vmatprep.subr.bf16.mxu0 0
    %255 = vmatpush1.bf16.msra.mxu0 0
    %256 = vmatprep.subr.bf16.mxu0 0
    %257 = vmatpush1.bf16.msra.mxu0 0
    %258 = vmatprep.subr.bf16.mxu0 0
    %259 = vmatpush1.bf16.msra.mxu0 0
    %260 = vmatprep.subr.bf16.mxu0 0
    %261 = vmatpush1.bf16.msra.mxu0 0
    %262 = vmatprep.subr.bf16.mxu0 0
    %263 = vmatpush1.bf16.msra.mxu0 0
    %264 = vmatprep.mubr.bf16.mxu0 0
    %265 = vmatmul.mubr.bf16.gmra.mrb[0].mxu0 %v187
    %v266 = vpop.f32.mrb[0].mxu0
    %v267 = vadd.f32 %v151, %v266
    %v268 = vpop.f32.mrb[0].mxu0
    %v269 = vadd.f32 %v155, %v268
    %v270 = vpop.f32.mrb[0].mxu0
    %v271 = vadd.f32 %v151, %v270
    %v272 = vpop.f32.mrb[0].mxu0
    %v273 = vadd.f32 %v155, %v272
    %274 = vdwg.mxu0
    %275 = vst [vmem:[#allocation2] sm:$0xff] %v224
    %276 = vst [vmem:[#allocation2 + $0x8] sm:$0xff] %v226
    %277 = vst [vmem:[#allocation2 + $0x10] sm:$0xff] %v267
    %278 = vst [vmem:[#allocation2 + $0x18] sm:$0xff] %v269
    %279 = vst [vmem:[#allocation2 + $0x20] sm:$0xff] %v228
    %280 = vst [vmem:[#allocation2 + $0x28] sm:$0xff] %v230
    %281 = vst [vmem:[#allocation2 + $0x30] sm:$0xff] %v271
    %282 = vst [vmem:[#allocation2 + $0x38] sm:$0xff] %v273
    %s283 = smul.u32 0, 4
    %s284 = smul.addr %s283, 8
    %s285 = scalar_lea.vmem [#allocation2], %s284
    %v286 = vld [vmem:[%s285] sm:$0xff]
    %v287 = vld [vmem:[%s285 + $0x8] sm:$0xff]
    %v288 = vld [vmem:[%s285 + $0x10] sm:$0xff]
    %v289 = vld [vmem:[%s285 + $0x18] sm:$0xff]
    %v290 = vld [vmem:[#allocation16] sm:$0xff]
    %v291 = vld [vmem:[#allocation18] sm:$0xff]
    %s292 = scalar_lea.vmem [#allocation16], 8
    %v293 = vld [vmem:[%s292] sm:$0xff]
    %s294 = scalar_lea.vmem [#allocation18], 8
    %v295 = vld [vmem:[%s294] sm:$0xff]
    %v296 = vpack.c.bf16 %v290, %v290
    %v297 = vld [vmem:[#allocation9] sm:$0xff]
    %v298 = vld [vmem:[#allocation9 + $0x8] sm:$0xff]
    %v299 = vld [vmem:[#allocation9 + $0x10] sm:$0xff]
    %v300 = vld [vmem:[#allocation9 + $0x18] sm:$0xff]
    %v301 = vld [vmem:[#allocation9 + $0x20] sm:$0xff]
    %v302 = vld [vmem:[#allocation9 + $0x28] sm:$0xff]
    %v303 = vld [vmem:[#allocation9 + $0x30] sm:$0xff]
    %v304 = vld [vmem:[#allocation9 + $0x38] sm:$0xff]
    %v305 = vld [vmem:[#allocation9 + $0x40] sm:$0xff]
    %v306 = vld [vmem:[#allocation9 + $0x48] sm:$0xff]
    %v307 = vld [vmem:[#allocation9 + $0x50] sm:$0xff]
    %v308 = vld [vmem:[#allocation9 + $0x58] sm:$0xff]
    %v309 = vld [vmem:[#allocation9 + $0x60] sm:$0xff]
    %v310 = vld [vmem:[#allocation9 + $0x68] sm:$0xff]
    %v311 = vld [vmem:[#allocation9 + $0x70] sm:$0xff]
    %v312 = vld [vmem:[#allocation9 + $0x78] sm:$0xff]
    %v313 = vld [vmem:[#allocation9 + $0x80] sm:$0xff]
    %v314 = vld [vmem:[#allocation9 + $0x88] sm:$0xff]
    %v315 = vld [vmem:[#allocation9 + $0x90] sm:$0xff]
    %v316 = vld [vmem:[#allocation9 + $0x98] sm:$0xff]
    %v317 = vld [vmem:[#allocation9 + $0xa0] sm:$0xff]
    %v318 = vld [vmem:[#allocation9 + $0xa8] sm:$0xff]
    %v319 = vld [vmem:[#allocation9 + $0xb0] sm:$0xff]
    %v320 = vld [vmem:[#allocation9 + $0xb8] sm:$0xff]
    %v321 = vld [vmem:[#allocation9 + $0xc0] sm:$0xff]
    %v322 = vld [vmem:[#allocation9 + $0xc8] sm:$0xff]
    %v323 = vld [vmem:[#allocation9 + $0xd0] sm:$0xff]
    %v324 = vld [vmem:[#allocation9 + $0xd8] sm:$0xff]
    %v325 = vld [vmem:[#allocation9 + $0xe0] sm:$0xff]
    %v326 = vld [vmem:[#allocation9 + $0xe8] sm:$0xff]
    %v327 = vld [vmem:[#allocation9 + $0xf0] sm:$0xff]
    %v328 = vld [vmem:[#allocation9 + $0xf8] sm:$0xff]
    %v361 = vunpack.c.l.b16 %v297
    %v362 = vunpack.c.h.b16 %v297
    %v363 = vunpack.c.l.b16 %v298
    %v364 = vunpack.c.h.b16 %v298
    %v365 = vunpack.c.l.b16 %v299
    %v366 = vunpack.c.h.b16 %v299
    %v367 = vunpack.c.l.b16 %v300
    %v368 = vunpack.c.h.b16 %v300
    %v369 = vunpack.c.l.b16 %v301
    %v370 = vunpack.c.h.b16 %v301
    %v371 = vunpack.c.l.b16 %v302
    %v372 = vunpack.c.h.b16 %v302
    %v373 = vunpack.c.l.b16 %v303
    %v374 = vunpack.c.h.b16 %v303
    %v375 = vunpack.c.l.b16 %v304
    %v376 = vunpack.c.h.b16 %v304
    %v377 = vunpack.c.l.b16 %v305
    %v378 = vunpack.c.h.b16 %v305
    %v379 = vunpack.c.l.b16 %v306
    %v380 = vunpack.c.h.b16 %v306
    %v381 = vunpack.c.l.b16 %v307
    %v382 = vunpack.c.h.b16 %v307
    %v383 = vunpack.c.l.b16 %v308
    %v384 = vunpack.c.h.b16 %v308
    %v385 = vunpack.c.l.b16 %v309
    %v386 = vunpack.c.h.b16 %v309
    %v387 = vunpack.c.l.b16 %v310
    %v388 = vunpack.c.h.b16 %v310
    %v389 = vunpack.c.l.b16 %v311
    %v390 = vunpack.c.h.b16 %v311
    %v391 = vunpack.c.l.b16 %v312
    %v392 = vunpack.c.h.b16 %v312
    %v393 = vunpack.c.l.b16 %v313
    %v394 = vunpack.c.h.b16 %v313
    %v395 = vunpack.c.l.b16 %v314
    %v396 = vunpack.c.h.b16 %v314
    %v397 = vunpack.c.l.b16 %v315
    %v398 = vunpack.c.h.b16 %v315
    %v399 = vunpack.c.l.b16 %v316
    %v400 = vunpack.c.h.b16 %v316
    %v401 = vunpack.c.l.b16 %v317
    %v402 = vunpack.c.h.b16 %v317
    %v403 = vunpack.c.l.b16 %v318
    %v404 = vunpack.c.h.b16 %v318
    %v405 = vunpack.c.l.b16 %v319
    %v406 = vunpack.c.h.b16 %v319
    %v407 = vunpack.c.l.b16 %v320
    %v408 = vunpack.c.h.b16 %v320
    %v409 = vunpack.c.l.b16 %v321
    %v410 = vunpack.c.h.b16 %v321
    %v411 = vunpack.c.l.b16 %v322
    %v412 = vunpack.c.h.b16 %v322
    %v413 = vunpack.c.l.b16 %v323
    %v414 = vunpack.c.h.b16 %v323
    %v415 = vunpack.c.l.b16 %v324
    %v416 = vunpack.c.h.b16 %v324
    %v417 = vunpack.c.l.b16 %v325
    %v418 = vunpack.c.h.b16 %v325
    %v419 = vunpack.c.l.b16 %v326
    %v420 = vunpack.c.h.b16 %v326
    %v421 = vunpack.c.l.b16 %v327
    %v422 = vunpack.c.h.b16 %v327
    %v423 = vunpack.c.l.b16 %v328
    %v424 = vunpack.c.h.b16 %v328
    %v425 = vpack.c.b16 %v365, %v361
    %v426 = vpack.c.b16 %v366, %v362
    %v427 = vpack.c.b16 %v367, %v363
    %v428 = vpack.c.b16 %v368, %v364
    %v429 = vpack.c.b16 %v373, %v369
    %v430 = vpack.c.b16 %v374, %v370
    %v431 = vpack.c.b16 %v375, %v371
    %v432 = vpack.c.b16 %v376, %v372
    %v433 = vpack.c.b16 %v381, %v377
    %v434 = vpack.c.b16 %v382, %v378
    %v435 = vpack.c.b16 %v383, %v379
    %v436 = vpack.c.b16 %v384, %v380
    %v437 = vpack.c.b16 %v389, %v385
    %v438 = vpack.c.b16 %v390, %v386
    %v439 = vpack.c.b16 %v391, %v387
    %v440 = vpack.c.b16 %v392, %v388
    %v441 = vpack.c.b16 %v397, %v393
    %v442 = vpack.c.b16 %v398, %v394
    %v443 = vpack.c.b16 %v399, %v395
    %v444 = vpack.c.b16 %v400, %v396
    %v445 = vpack.c.b16 %v405, %v401
    %v446 = vpack.c.b16 %v406, %v402
    %v447 = vpack.c.b16 %v407, %v403
    %v448 = vpack.c.b16 %v408, %v404
    %v449 = vpack.c.b16 %v413, %v409
    %v450 = vpack.c.b16 %v414, %v410
    %v451 = vpack.c.b16 %v415, %v411
    %v452 = vpack.c.b16 %v416, %v412
    %v453 = vpack.c.b16 %v421, %v417
    %v454 = vpack.c.b16 %v422, %v418
    %v455 = vpack.c.b16 %v423, %v419
    %v456 = vpack.c.b16 %v424, %v420
    %489 = vmatprep.subr.bf16.mxu0 %v426
    %490 = vmatpush1.bf16.msra.mxu0 %v425
    %491 = vmatprep.subr.bf16.mxu0 %v430
    %492 = vmatpush1.bf16.msra.mxu0 %v429
    %493 = vmatprep.subr.bf16.mxu0 %v434
    %494 = vmatpush1.bf16.msra.mxu0 %v433
    %495 = vmatprep.subr.bf16.mxu0 %v438
    %496 = vmatpush1.bf16.msra.mxu0 %v437
    %497 = vmatprep.subr.bf16.mxu0 %v442
    %498 = vmatpush1.bf16.msra.mxu0 %v441
    %499 = vmatprep.subr.bf16.mxu0 %v446
    %500 = vmatpush1.bf16.msra.mxu0 %v445
    %501 = vmatprep.subr.bf16.mxu0 %v450
    %502 = vmatpush1.bf16.msra.mxu0 %v449
    %503 = vmatprep.subr.bf16.mxu0 %v454
    %504 = vmatpush1.bf16.msra.mxu0 %v453
    %505 = vmatprep.subr.bf16.mxu0 0
    %506 = vmatpush1.bf16.msra.mxu0 0
    %507 = vmatprep.subr.bf16.mxu0 0
    %508 = vmatpush1.bf16.msra.mxu0 0
    %509 = vmatprep.subr.bf16.mxu0 0
    %510 = vmatpush1.bf16.msra.mxu0 0
    %511 = vmatprep.subr.bf16.mxu0 0
    %512 = vmatpush1.bf16.msra.mxu0 0
    %513 = vmatprep.subr.bf16.mxu0 0
    %514 = vmatpush1.bf16.msra.mxu0 0
    %515 = vmatprep.subr.bf16.mxu0 0
    %516 = vmatpush1.bf16.msra.mxu0 0
    %517 = vmatprep.subr.bf16.mxu0 0
    %518 = vmatpush1.bf16.msra.mxu0 0
    %519 = vmatprep.subr.bf16.mxu0 0
    %520 = vmatpush1.bf16.msra.mxu0 0
    %521 = vmatprep.mubr.bf16.mxu0 0
    %522 = vmatmul.mubr.bf16.gmra.mrb[0].mxu0 %v296
    %v523 = vpop.f32.mrb[0].mxu0
    %v524 = vadd.f32 0.0, %v523
    %v525 = vpop.f32.mrb[0].mxu0
    %v526 = vadd.f32 0.0, %v525
    %v527 = vpop.f32.mrb[0].mxu0
    %v528 = vpop.f32.mrb[0].mxu0
    %529 = vdwg.mxu0
    %530 = vmatprep.subr.bf16.mxu0 %v428
    %531 = vmatpush1.bf16.msra.mxu0 %v427
    %532 = vmatprep.subr.bf16.mxu0 %v432
    %533 = vmatpush1.bf16.msra.mxu0 %v431
    %534 = vmatprep.subr.bf16.mxu0 %v436
    %535 = vmatpush1.bf16.msra.mxu0 %v435
    %536 = vmatprep.subr.bf16.mxu0 %v440
    %537 = vmatpush1.bf16.msra.mxu0 %v439
    %538 = vmatprep.subr.bf16.mxu0 %v444
    %539 = vmatpush1.bf16.msra.mxu0 %v443
    %540 = vmatprep.subr.bf16.mxu0 %v448
    %541 = vmatpush1.bf16.msra.mxu0 %v447
    %542 = vmatprep.subr.bf16.mxu0 %v452
    %543 = vmatpush1.bf16.msra.mxu0 %v451
    %544 = vmatprep.subr.bf16.mxu0 %v456
    %545 = vmatpush1.bf16.msra.mxu0 %v455
    %546 = vmatprep.subr.bf16.mxu0 0
    %547 = vmatpush1.bf16.msra.mxu0 0
    %548 = vmatprep.subr.bf16.mxu0 0
    %549 = vmatpush1.bf16.msra.mxu0 0
    %550 = vmatprep.subr.bf16.mxu0 0
    %551 = vmatpush1.bf16.msra.mxu0 0
    %552 = vmatprep.subr.bf16.mxu0 0
    %553 = vmatpush1.bf16.msra.mxu0 0
    %554 = vmatprep.subr.bf16.mxu0 0
    %555 = vmatpush1.bf16.msra.mxu0 0
    %556 = vmatprep.subr.bf16.mxu0 0
    %557 = vmatpush1.bf16.msra.mxu0 0
    %558 = vmatprep.subr.bf16.mxu0 0
    %559 = vmatpush1.bf16.msra.mxu0 0
    %560 = vmatprep.subr.bf16.mxu0 0
    %561 = vmatpush1.bf16.msra.mxu0 0
    %562 = vmatprep.mubr.bf16.mxu0 0
    %563 = vmatmul.mubr.bf16.gmra.mrb[0].mxu0 %v296
    %v564 = vpop.f32.mrb[0].mxu0
    %v565 = vadd.f32 0.0, %v564
    %v566 = vpop.f32.mrb[0].mxu0
    %v567 = vadd.f32 0.0, %v566
    %v568 = vpop.f32.mrb[0].mxu0
    %v569 = vpop.f32.mrb[0].mxu0
    %570 = vdwg.mxu0
    %v571 = vadd.f32 %v286, %v524
    %v572 = vadd.f32 %v287, %v526
    %v573 = vadd.f32 %v288, %v565
    %v574 = vadd.f32 %v289, %v567
    %v575 = vxor.u32 %v571, 2147483648
    %v576 = vmul.f32 %v575, 1.442695
    %v577 = vpow.pop %v576
    %v578 = vadd.f32 %v577, 1.0
    %v579 = vrcp.pop %v578
    %v580 = vmul.f32 1.0, %v579
    %v581 = vxor.u32 %v572, 2147483648
    %v582 = vmul.f32 %v581, 1.442695
    %v583 = vpow.pop %v582
    %v584 = vadd.f32 %v583, 1.0
    %v585 = vrcp.pop %v584
    %v586 = vmul.f32 1.0, %v585
    %v587 = vtanh.pop %v573
    %v588 = vxor.u32 %v574, 2147483648
    %v589 = vmul.f32 %v588, 1.442695
    %v590 = vpow.pop %v589
    %v591 = vadd.f32 %v590, 1.0
    %v592 = vrcp.pop %v591
    %v593 = vmul.f32 1.0, %v592
    %v594 = vmul.f32 %v586, %v291
    %v595 = vmul.f32 %v580, %v587
    %v596 = vadd.f32 %v594, %v595
    %v597 = vtanh.pop %v596
    %v598 = vmul.f32 %v593, %v597
    %v599 = vpack.c.bf16 %v598, %v598
    %v600 = vld [vmem:[#allocation10] sm:$0xff]
    %v601 = vld [vmem:[#allocation10 + $0x8] sm:$0xff]
    %v602 = vld [vmem:[#allocation10 + $0x10] sm:$0xff]
    %v603 = vld [vmem:[#allocation10 + $0x18] sm:$0xff]
    %v604 = vld [vmem:[#allocation10 + $0x20] sm:$0xff]
    %v605 = vld [vmem:[#allocation10 + $0x28] sm:$0xff]
    %v606 = vld [vmem:[#allocation10 + $0x30] sm:$0xff]
    %v607 = vld [vmem:[#allocation10 + $0x38] sm:$0xff]
    %v608 = vld [vmem:[#allocation10 + $0x40] sm:$0xff]
    %v609 = vld [vmem:[#allocation10 + $0x48] sm:$0xff]
    %v610 = vld [vmem:[#allocation10 + $0x50] sm:$0xff]
    %v611 = vld [vmem:[#allocation10 + $0x58] sm:$0xff]
    %v612 = vld [vmem:[#allocation10 + $0x60] sm:$0xff]
    %v613 = vld [vmem:[#allocation10 + $0x68] sm:$0xff]
    %v614 = vld [vmem:[#allocation10 + $0x70] sm:$0xff]
    %v615 = vld [vmem:[#allocation10 + $0x78] sm:$0xff]
    %v616 = vld [vmem:[#allocation10 + $0x80] sm:$0xff]
    %v617 = vld [vmem:[#allocation10 + $0x88] sm:$0xff]
    %v618 = vld [vmem:[#allocation10 + $0x90] sm:$0xff]
    %v619 = vld [vmem:[#allocation10 + $0x98] sm:$0xff]
    %v620 = vld [vmem:[#allocation10 + $0xa0] sm:$0xff]
    %v621 = vld [vmem:[#allocation10 + $0xa8] sm:$0xff]
    %v622 = vld [vmem:[#allocation10 + $0xb0] sm:$0xff]
    %v623 = vld [vmem:[#allocation10 + $0xb8] sm:$0xff]
    %v624 = vld [vmem:[#allocation10 + $0xc0] sm:$0xff]
    %v625 = vld [vmem:[#allocation10 + $0xc8] sm:$0xff]
    %v626 = vld [vmem:[#allocation10 + $0xd0] sm:$0xff]
    %v627 = vld [vmem:[#allocation10 + $0xd8] sm:$0xff]
    %v628 = vld [vmem:[#allocation10 + $0xe0] sm:$0xff]
    %v629 = vld [vmem:[#allocation10 + $0xe8] sm:$0xff]
    %v630 = vld [vmem:[#allocation10 + $0xf0] sm:$0xff]
    %v631 = vld [vmem:[#allocation10 + $0xf8] sm:$0xff]
    %v632 = vpack.c.bf16 %v293, %v293
    %v633 = vld [vmem:[#allocation12] sm:$0xff]
    %v634 = vld [vmem:[#allocation12 + $0x8] sm:$0xff]
    %v635 = vld [vmem:[#allocation12 + $0x10] sm:$0xff]
    %v636 = vld [vmem:[#allocation12 + $0x18] sm:$0xff]
    %v637 = vld [vmem:[#allocation12 + $0x20] sm:$0xff]
    %v638 = vld [vmem:[#allocation12 + $0x28] sm:$0xff]
    %v639 = vld [vmem:[#allocation12 + $0x30] sm:$0xff]
    %v640 = vld [vmem:[#allocation12 + $0x38] sm:$0xff]
    %v641 = vld [vmem:[#allocation12 + $0x40] sm:$0xff]
    %v642 = vld [vmem:[#allocation12 + $0x48] sm:$0xff]
    %v643 = vld [vmem:[#allocation12 + $0x50] sm:$0xff]
    %v644 = vld [vmem:[#allocation12 + $0x58] sm:$0xff]
    %v645 = vld [vmem:[#allocation12 + $0x60] sm:$0xff]
    %v646 = vld [vmem:[#allocation12 + $0x68] sm:$0xff]
    %v647 = vld [vmem:[#allocation12 + $0x70] sm:$0xff]
    %v648 = vld [vmem:[#allocation12 + $0x78] sm:$0xff]
    %v649 = vld [vmem:[#allocation12 + $0x80] sm:$0xff]
    %v650 = vld [vmem:[#allocation12 + $0x88] sm:$0xff]
    %v651 = vld [vmem:[#allocation12 + $0x90] sm:$0xff]
    %v652 = vld [vmem:[#allocation12 + $0x98] sm:$0xff]
    %v653 = vld [vmem:[#allocation12 + $0xa0] sm:$0xff]
    %v654 = vld [vmem:[#allocation12 + $0xa8] sm:$0xff]
    %v655 = vld [vmem:[#allocation12 + $0xb0] sm:$0xff]
    %v656 = vld [vmem:[#allocation12 + $0xb8] sm:$0xff]
    %v657 = vld [vmem:[#allocation12 + $0xc0] sm:$0xff]
    %v658 = vld [vmem:[#allocation12 + $0xc8] sm:$0xff]
    %v659 = vld [vmem:[#allocation12 + $0xd0] sm:$0xff]
    %v660 = vld [vmem:[#allocation12 + $0xd8] sm:$0xff]
    %v661 = vld [vmem:[#allocation12 + $0xe0] sm:$0xff]
    %v662 = vld [vmem:[#allocation12 + $0xe8] sm:$0xff]
    %v663 = vld [vmem:[#allocation12 + $0xf0] sm:$0xff]
    %v664 = vld [vmem:[#allocation12 + $0xf8] sm:$0xff]
    %v697 = vunpack.c.l.b16 %v633
    %v698 = vunpack.c.h.b16 %v633
    %v699 = vunpack.c.l.b16 %v634
    %v700 = vunpack.c.h.b16 %v634
    %v701 = vunpack.c.l.b16 %v635
    %v702 = vunpack.c.h.b16 %v635
    %v703 = vunpack.c.l.b16 %v636
    %v704 = vunpack.c.h.b16 %v636
    %v705 = vunpack.c.l.b16 %v637
    %v706 = vunpack.c.h.b16 %v637
    %v707 = vunpack.c.l.b16 %v638
    %v708 = vunpack.c.h.b16 %v638
    %v709 = vunpack.c.l.b16 %v639
    %v710 = vunpack.c.h.b16 %v639
    %v711 = vunpack.c.l.b16 %v640
    %v712 = vunpack.c.h.b16 %v640
    %v713 = vunpack.c.l.b16 %v641
    %v714 = vunpack.c.h.b16 %v641
    %v715 = vunpack.c.l.b16 %v642
    %v716 = vunpack.c.h.b16 %v642
    %v717 = vunpack.c.l.b16 %v643
    %v718 = vunpack.c.h.b16 %v643
    %v719 = vunpack.c.l.b16 %v644
    %v720 = vunpack.c.h.b16 %v644
    %v721 = vunpack.c.l.b16 %v645
    %v722 = vunpack.c.h.b16 %v645
    %v723 = vunpack.c.l.b16 %v646
    %v724 = vunpack.c.h.b16 %v646
    %v725 = vunpack.c.l.b16 %v647
    %v726 = vunpack.c.h.b16 %v647
    %v727 = vunpack.c.l.b16 %v648
    %v728 = vunpack.c.h.b16 %v648
    %v729 = vunpack.c.l.b16 %v649
    %v730 = vunpack.c.h.b16 %v649
    %v731 = vunpack.c.l.b16 %v650
    %v732 = vunpack.c.h.b16 %v650
    %v733 = vunpack.c.l.b16 %v651
    %v734 = vunpack.c.h.b16 %v651
    %v735 = vunpack.c.l.b16 %v652
    %v736 = vunpack.c.h.b16 %v652
    %v737 = vunpack.c.l.b16 %v653
    %v738 = vunpack.c.h.b16 %v653
    %v739 = vunpack.c.l.b16 %v654
    %v740 = vunpack.c.h.b16 %v654
    %v741 = vunpack.c.l.b16 %v655
    %v742 = vunpack.c.h.b16 %v655
    %v743 = vunpack.c.l.b16 %v656
    %v744 = vunpack.c.h.b16 %v656
    %v745 = vunpack.c.l.b16 %v657
    %v746 = vunpack.c.h.b16 %v657
    %v747 = vunpack.c.l.b16 %v658
    %v748 = vunpack.c.h.b16 %v658
    %v749 = vunpack.c.l.b16 %v659
    %v750 = vunpack.c.h.b16 %v659
    %v751 = vunpack.c.l.b16 %v660
    %v752 = vunpack.c.h.b16 %v660
    %v753 = vunpack.c.l.b16 %v661
    %v754 = vunpack.c.h.b16 %v661
    %v755 = vunpack.c.l.b16 %v662
    %v756 = vunpack.c.h.b16 %v662
    %v757 = vunpack.c.l.b16 %v663
    %v758 = vunpack.c.h.b16 %v663
    %v759 = vunpack.c.l.b16 %v664
    %v760 = vunpack.c.h.b16 %v664
    %v761 = vpack.c.b16 %v701, %v697
    %v762 = vpack.c.b16 %v702, %v698
    %v763 = vpack.c.b16 %v703, %v699
    %v764 = vpack.c.b16 %v704, %v700
    %v765 = vpack.c.b16 %v709, %v705
    %v766 = vpack.c.b16 %v710, %v706
    %v767 = vpack.c.b16 %v711, %v707
    %v768 = vpack.c.b16 %v712, %v708
    %v769 = vpack.c.b16 %v717, %v713
    %v770 = vpack.c.b16 %v718, %v714
    %v771 = vpack.c.b16 %v719, %v715
    %v772 = vpack.c.b16 %v720, %v716
    %v773 = vpack.c.b16 %v725, %v721
    %v774 = vpack.c.b16 %v726, %v722
    %v775 = vpack.c.b16 %v727, %v723
    %v776 = vpack.c.b16 %v728, %v724
    %v777 = vpack.c.b16 %v733, %v729
    %v778 = vpack.c.b16 %v734, %v730
    %v779 = vpack.c.b16 %v735, %v731
    %v780 = vpack.c.b16 %v736, %v732
    %v781 = vpack.c.b16 %v741, %v737
    %v782 = vpack.c.b16 %v742, %v738
    %v783 = vpack.c.b16 %v743, %v739
    %v784 = vpack.c.b16 %v744, %v740
    %v785 = vpack.c.b16 %v749, %v745
    %v786 = vpack.c.b16 %v750, %v746
    %v787 = vpack.c.b16 %v751, %v747
    %v788 = vpack.c.b16 %v752, %v748
    %v789 = vpack.c.b16 %v757, %v753
    %v790 = vpack.c.b16 %v758, %v754
    %v791 = vpack.c.b16 %v759, %v755
    %v792 = vpack.c.b16 %v760, %v756
    %825 = vmatprep.subr.bf16.mxu0 %v762
    %826 = vmatpush1.bf16.msra.mxu0 %v761
    %827 = vmatprep.subr.bf16.mxu0 %v766
    %828 = vmatpush1.bf16.msra.mxu0 %v765
    %829 = vmatprep.subr.bf16.mxu0 %v770
    %830 = vmatpush1.bf16.msra.mxu0 %v769
    %831 = vmatprep.subr.bf16.mxu0 %v774
    %832 = vmatpush1.bf16.msra.mxu0 %v773
    %833 = vmatprep.subr.bf16.mxu0 %v778
    %834 = vmatpush1.bf16.msra.mxu0 %v777
    %835 = vmatprep.subr.bf16.mxu0 %v782
    %836 = vmatpush1.bf16.msra.mxu0 %v781
    %837 = vmatprep.subr.bf16.mxu0 %v786
    %838 = vmatpush1.bf16.msra.mxu0 %v785
    %839 = vmatprep.subr.bf16.mxu0 %v790
    %840 = vmatpush1.bf16.msra.mxu0 %v789
    %841 = vmatprep.subr.bf16.mxu0 0
    %842 = vmatpush1.bf16.msra.mxu0 0
    %843 = vmatprep.subr.bf16.mxu0 0
    %844 = vmatpush1.bf16.msra.mxu0 0
    %845 = vmatprep.subr.bf16.mxu0 0
    %846 = vmatpush1.bf16.msra.mxu0 0
    %847 = vmatprep.subr.bf16.mxu0 0
    %848 = vmatpush1.bf16.msra.mxu0 0
    %849 = vmatprep.subr.bf16.mxu0 0
    %850 = vmatpush1.bf16.msra.mxu0 0
    %851 = vmatprep.subr.bf16.mxu0 0
    %852 = vmatpush1.bf16.msra.mxu0 0
    %853 = vmatprep.subr.bf16.mxu0 0
    %854 = vmatpush1.bf16.msra.mxu0 0
    %855 = vmatprep.subr.bf16.mxu0 0
    %856 = vmatpush1.bf16.msra.mxu0 0
    %857 = vmatprep.mubr.bf16.mxu0 0
    %858 = vmatmul.mubr.bf16.gmra.mrb[0].mxu0 %v632
    %v859 = vpop.f32.mrb[0].mxu0
    %v860 = vadd.f32 0.0, %v859
    %v861 = vpop.f32.mrb[0].mxu0
    %v862 = vadd.f32 0.0, %v861
    %v863 = vpop.f32.mrb[0].mxu0
    %v864 = vpop.f32.mrb[0].mxu0
    %865 = vdwg.mxu0
    %866 = vmatprep.subr.bf16.mxu0 %v764
    %867 = vmatpush1.bf16.msra.mxu0 %v763
    %868 = vmatprep.subr.bf16.mxu0 %v768
    %869 = vmatpush1.bf16.msra.mxu0 %v767
    %870 = vmatprep.subr.bf16.mxu0 %v772
    %871 = vmatpush1.bf16.msra.mxu0 %v771
    %872 = vmatprep.subr.bf16.mxu0 %v776
    %873 = vmatpush1.bf16.msra.mxu0 %v775
    %874 = vmatprep.subr.bf16.mxu0 %v780
    %875 = vmatpush1.bf16.msra.mxu0 %v779
    %876 = vmatprep.subr.bf16.mxu0 %v784
    %877 = vmatpush1.bf16.msra.mxu0 %v783
    %878 = vmatprep.subr.bf16.mxu0 %v788
    %879 = vmatpush1.bf16.msra.mxu0 %v787
    %880 = vmatprep.subr.bf16.mxu0 %v792
    %881 = vmatpush1.bf16.msra.mxu0 %v791
    %882 = vmatprep.subr.bf16.mxu0 0
    %883 = vmatpush1.bf16.msra.mxu0 0
    %884 = vmatprep.subr.bf16.mxu0 0
    %885 = vmatpush1.bf16.msra.mxu0 0
    %886 = vmatprep.subr.bf16.mxu0 0
    %887 = vmatpush1.bf16.msra.mxu0 0
    %888 = vmatprep.subr.bf16.mxu0 0
    %889 = vmatpush1.bf16.msra.mxu0 0
    %890 = vmatprep.subr.bf16.mxu0 0
    %891 = vmatpush1.bf16.msra.mxu0 0
    %892 = vmatprep.subr.bf16.mxu0 0
    %893 = vmatpush1.bf16.msra.mxu0 0
    %894 = vmatprep.subr.bf16.mxu0 0
    %895 = vmatpush1.bf16.msra.mxu0 0
    %896 = vmatprep.subr.bf16.mxu0 0
    %897 = vmatpush1.bf16.msra.mxu0 0
    %898 = vmatprep.mubr.bf16.mxu0 0
    %899 = vmatmul.mubr.bf16.gmra.mrb[0].mxu0 %v632
    %v900 = vpop.f32.mrb[0].mxu0
    %v901 = vadd.f32 0.0, %v900
    %v902 = vpop.f32.mrb[0].mxu0
    %v903 = vadd.f32 0.0, %v902
    %v904 = vpop.f32.mrb[0].mxu0
    %v905 = vpop.f32.mrb[0].mxu0
    %906 = vdwg.mxu0
    %v939 = vunpack.c.l.b16 %v600
    %v940 = vunpack.c.h.b16 %v600
    %v941 = vunpack.c.l.b16 %v601
    %v942 = vunpack.c.h.b16 %v601
    %v943 = vunpack.c.l.b16 %v602
    %v944 = vunpack.c.h.b16 %v602
    %v945 = vunpack.c.l.b16 %v603
    %v946 = vunpack.c.h.b16 %v603
    %v947 = vunpack.c.l.b16 %v604
    %v948 = vunpack.c.h.b16 %v604
    %v949 = vunpack.c.l.b16 %v605
    %v950 = vunpack.c.h.b16 %v605
    %v951 = vunpack.c.l.b16 %v606
    %v952 = vunpack.c.h.b16 %v606
    %v953 = vunpack.c.l.b16 %v607
    %v954 = vunpack.c.h.b16 %v607
    %v955 = vunpack.c.l.b16 %v608
    %v956 = vunpack.c.h.b16 %v608
    %v957 = vunpack.c.l.b16 %v609
    %v958 = vunpack.c.h.b16 %v609
    %v959 = vunpack.c.l.b16 %v610
    %v960 = vunpack.c.h.b16 %v610
    %v961 = vunpack.c.l.b16 %v611
    %v962 = vunpack.c.h.b16 %v611
    %v963 = vunpack.c.l.b16 %v612
    %v964 = vunpack.c.h.b16 %v612
    %v965 = vunpack.c.l.b16 %v613
    %v966 = vunpack.c.h.b16 %v613
    %v967 = vunpack.c.l.b16 %v614
    %v968 = vunpack.c.h.b16 %v614
    %v969 = vunpack.c.l.b16 %v615
    %v970 = vunpack.c.h.b16 %v615
    %v971 = vunpack.c.l.b16 %v616
    %v972 = vunpack.c.h.b16 %v616
    %v973 = vunpack.c.l.b16 %v617
    %v974 = vunpack.c.h.b16 %v617
    %v975 = vunpack.c.l.b16 %v618
    %v976 = vunpack.c.h.b16 %v618
    %v977 = vunpack.c.l.b16 %v619
    %v978 = vunpack.c.h.b16 %v619
    %v979 = vunpack.c.l.b16 %v620
    %v980 = vunpack.c.h.b16 %v620
    %v981 = vunpack.c.l.b16 %v621
    %v982 = vunpack.c.h.b16 %v621
    %v983 = vunpack.c.l.b16 %v622
    %v984 = vunpack.c.h.b16 %v622
    %v985 = vunpack.c.l.b16 %v623
    %v986 = vunpack.c.h.b16 %v623
    %v987 = vunpack.c.l.b16 %v624
    %v988 = vunpack.c.h.b16 %v624
    %v989 = vunpack.c.l.b16 %v625
    %v990 = vunpack.c.h.b16 %v625
    %v991 = vunpack.c.l.b16 %v626
    %v992 = vunpack.c.h.b16 %v626
    %v993 = vunpack.c.l.b16 %v627
    %v994 = vunpack.c.h.b16 %v627
    %v995 = vunpack.c.l.b16 %v628
    %v996 = vunpack.c.h.b16 %v628
    %v997 = vunpack.c.l.b16 %v629
    %v998 = vunpack.c.h.b16 %v629
    %v999 = vunpack.c.l.b16 %v630
    %v1000 = vunpack.c.h.b16 %v630
    %v1001 = vunpack.c.l.b16 %v631
    %v1002 = vunpack.c.h.b16 %v631
    %v1003 = vpack.c.b16 %v943, %v939
    %v1004 = vpack.c.b16 %v944, %v940
    %v1005 = vpack.c.b16 %v945, %v941
    %v1006 = vpack.c.b16 %v946, %v942
    %v1007 = vpack.c.b16 %v951, %v947
    %v1008 = vpack.c.b16 %v952, %v948
    %v1009 = vpack.c.b16 %v953, %v949
    %v1010 = vpack.c.b16 %v954, %v950
    %v1011 = vpack.c.b16 %v959, %v955
    %v1012 = vpack.c.b16 %v960, %v956
    %v1013 = vpack.c.b16 %v961, %v957
    %v1014 = vpack.c.b16 %v962, %v958
    %v1015 = vpack.c.b16 %v967, %v963
    %v1016 = vpack.c.b16 %v968, %v964
    %v1017 = vpack.c.b16 %v969, %v965
    %v1018 = vpack.c.b16 %v970, %v966
    %v1019 = vpack.c.b16 %v975, %v971
    %v1020 = vpack.c.b16 %v976, %v972
    %v1021 = vpack.c.b16 %v977, %v973
    %v1022 = vpack.c.b16 %v978, %v974
    %v1023 = vpack.c.b16 %v983, %v979
    %v1024 = vpack.c.b16 %v984, %v980
    %v1025 = vpack.c.b16 %v985, %v981
    %v1026 = vpack.c.b16 %v986, %v982
    %v1027 = vpack.c.b16 %v991, %v987
    %v1028 = vpack.c.b16 %v992, %v988
    %v1029 = vpack.c.b16 %v993, %v989
    %v1030 = vpack.c.b16 %v994, %v990
    %v1031 = vpack.c.b16 %v999, %v995
    %v1032 = vpack.c.b16 %v1000, %v996
    %v1033 = vpack.c.b16 %v1001, %v997
    %v1034 = vpack.c.b16 %v1002, %v998
    %1067 = vmatprep.subr.bf16.mxu0 %v1004
    %1068 = vmatpush1.bf16.msra.mxu0 %v1003
    %1069 = vmatprep.subr.bf16.mxu0 %v1008
    %1070 = vmatpush1.bf16.msra.mxu0 %v1007
    %1071 = vmatprep.subr.bf16.mxu0 %v1012
    %1072 = vmatpush1.bf16.msra.mxu0 %v1011
    %1073 = vmatprep.subr.bf16.mxu0 %v1016
    %1074 = vmatpush1.bf16.msra.mxu0 %v1015
    %1075 = vmatprep.subr.bf16.mxu0 %v1020
    %1076 = vmatpush1.bf16.msra.mxu0 %v1019
    %1077 = vmatprep.subr.bf16.mxu0 %v1024
    %1078 = vmatpush1.bf16.msra.mxu0 %v1023
    %1079 = vmatprep.subr.bf16.mxu0 %v1028
    %1080 = vmatpush1.bf16.msra.mxu0 %v1027
    %1081 = vmatprep.subr.bf16.mxu0 %v1032
    %1082 = vmatpush1.bf16.msra.mxu0 %v1031
    %1083 = vmatprep.subr.bf16.mxu0 0
    %1084 = vmatpush1.bf16.msra.mxu0 0
    %1085 = vmatprep.subr.bf16.mxu0 0
    %1086 = vmatpush1.bf16.msra.mxu0 0
    %1087 = vmatprep.subr.bf16.mxu0 0
    %1088 = vmatpush1.bf16.msra.mxu0 0
    %1089 = vmatprep.subr.bf16.mxu0 0
    %1090 = vmatpush1.bf16.msra.mxu0 0
    %1091 = vmatprep.subr.bf16.mxu0 0
    %1092 = vmatpush1.bf16.msra.mxu0 0
    %1093 = vmatprep.subr.bf16.mxu0 0
    %1094 = vmatpush1.bf16.msra.mxu0 0
    %1095 = vmatprep.subr.bf16.mxu0 0
    %1096 = vmatpush1.bf16.msra.mxu0 0
    %1097 = vmatprep.subr.bf16.mxu0 0
    %1098 = vmatpush1.bf16.msra.mxu0 0
    %1099 = vmatprep.mubr.bf16.mxu0 0
    %1100 = vmatmul.mubr.bf16.gmra.mrb[0].mxu0 %v599
    %v1101 = vpop.f32.mrb[0].mxu0
    %v1102 = vadd.f32 %v860, %v1101
    %v1103 = vpop.f32.mrb[0].mxu0
    %v1104 = vadd.f32 %v862, %v1103
    %v1105 = vpop.f32.mrb[0].mxu0
    %v1106 = vpop.f32.mrb[0].mxu0
    %1107 = vdwg.mxu0
    %1108 = vmatprep.subr.bf16.mxu0 %v1006
    %1109 = vmatpush1.bf16.msra.mxu0 %v1005
    %1110 = vmatprep.subr.bf16.mxu0 %v1010
    %1111 = vmatpush1.bf16.msra.mxu0 %v1009
    %1112 = vmatprep.subr.bf16.mxu0 %v1014
    %1113 = vmatpush1.bf16.msra.mxu0 %v1013
    %1114 = vmatprep.subr.bf16.mxu0 %v1018
    %1115 = vmatpush1.bf16.msra.mxu0 %v1017
    %1116 = vmatprep.subr.bf16.mxu0 %v1022
    %1117 = vmatpush1.bf16.msra.mxu0 %v1021
    %1118 = vmatprep.subr.bf16.mxu0 %v1026
    %1119 = vmatpush1.bf16.msra.mxu0 %v1025
    %1120 = vmatprep.subr.bf16.mxu0 %v1030
    %1121 = vmatpush1.bf16.msra.mxu0 %v1029
    %1122 = vmatprep.subr.bf16.mxu0 %v1034
    %1123 = vmatpush1.bf16.msra.mxu0 %v1033
    %1124 = vmatprep.subr.bf16.mxu0 0
    %1125 = vmatpush1.bf16.msra.mxu0 0
    %1126 = vmatprep.subr.bf16.mxu0 0
    %1127 = vmatpush1.bf16.msra.mxu0 0
    %1128 = vmatprep.subr.bf16.mxu0 0
    %1129 = vmatpush1.bf16.msra.mxu0 0
    %1130 = vmatprep.subr.bf16.mxu0 0
    %1131 = vmatpush1.bf16.msra.mxu0 0
    %1132 = vmatprep.subr.bf16.mxu0 0
    %1133 = vmatpush1.bf16.msra.mxu0 0
    %1134 = vmatprep.subr.bf16.mxu0 0
    %1135 = vmatpush1.bf16.msra.mxu0 0
    %1136 = vmatprep.subr.bf16.mxu0 0
    %1137 = vmatpush1.bf16.msra.mxu0 0
    %1138 = vmatprep.subr.bf16.mxu0 0
    %1139 = vmatpush1.bf16.msra.mxu0 0
    %1140 = vmatprep.mubr.bf16.mxu0 0
    %1141 = vmatmul.mubr.bf16.gmra.mrb[0].mxu0 %v599
    %v1142 = vpop.f32.mrb[0].mxu0
    %v1143 = vadd.f32 %v901, %v1142
    %v1144 = vpop.f32.mrb[0].mxu0
    %v1145 = vadd.f32 %v903, %v1144
    %v1146 = vpop.f32.mrb[0].mxu0
    %v1147 = vpop.f32.mrb[0].mxu0
    %1148 = vdwg.mxu0
    %v1149 = vld [vmem:[%s6] sm:$0xf]
    %v1151 = vlaneseq
    %v1152 = vshrl.u32 %v1151, 7
    %v1153 = vsub.s32 0, %v1152
    %v1154 = vrot.slane %v1149, %v1153
    %v1155 = vlaneseq
    %v1156 = vshrl.u32 %v1155, 7
    %v1157 = vsub.s32 1, %v1156
    %v1158 = vrot.slane %v1149, %v1157
    %v1159 = vlaneseq
    %v1160 = vshrl.u32 %v1159, 7
    %v1161 = vsub.s32 2, %v1160
    %v1162 = vrot.slane %v1149, %v1161
    %v1163 = vlaneseq
    %v1164 = vshrl.u32 %v1163, 7
    %v1165 = vsub.s32 3, %v1164
    %v1166 = vrot.slane %v1149, %v1165
    %v1171 = vadd.f32 %v1102, %v1154
    %v1172 = vadd.f32 %v1104, %v1158
    %v1173 = vadd.f32 %v1143, %v1162
    %v1174 = vadd.f32 %v1145, %v1166
    %v1175 = vxor.u32 %v1171, 2147483648
    %v1176 = vmul.f32 %v1175, 1.442695
    %v1177 = vpow.pop %v1176
    %v1178 = vadd.f32 %v1177, 1.0
    %v1179 = vrcp.pop %v1178
    %v1180 = vmul.f32 1.0, %v1179
    %v1181 = vxor.u32 %v1172, 2147483648
    %v1182 = vmul.f32 %v1181, 1.442695
    %v1183 = vpow.pop %v1182
    %v1184 = vadd.f32 %v1183, 1.0
    %v1185 = vrcp.pop %v1184
    %v1186 = vmul.f32 1.0, %v1185
    %v1187 = vtanh.pop %v1173
    %v1188 = vxor.u32 %v1174, 2147483648
    %v1189 = vmul.f32 %v1188, 1.442695
    %v1190 = vpow.pop %v1189
    %v1191 = vadd.f32 %v1190, 1.0
    %v1192 = vrcp.pop %v1191
    %v1193 = vmul.f32 1.0, %v1192
    %v1194 = vmul.f32 %v1186, %v295
    %v1195 = vmul.f32 %v1180, %v1187
    %v1196 = vadd.f32 %v1194, %v1195
    %v1197 = vtanh.pop %v1196
    %v1198 = vmul.f32 %v1193, %v1197
    %1199 = vst [vmem:[#allocation16] sm:$0xff] %v598
    %1200 = vst [vmem:[#allocation18] sm:$0xff] %v596
    %1201 = vst [vmem:[%s292] sm:$0xff] %v1198
    %1202 = vst [vmem:[%s294] sm:$0xff] %v1196
    %1203 = vst [vmem:[#allocation3] sm:$0xff] %v1198
    %s1204 = smul.u32 1, 4
    %s1205 = smul.addr %s1204, 8
    %s1206 = scalar_lea.vmem [#allocation2], %s1205
    %v1207 = vld [vmem:[%s1206] sm:$0xff]
    %v1208 = vld [vmem:[%s1206 + $0x8] sm:$0xff]
    %v1209 = vld [vmem:[%s1206 + $0x10] sm:$0xff]
    %v1210 = vld [vmem:[%s1206 + $0x18] sm:$0xff]
    %v1211 = vld [vmem:[#allocation16] sm:$0xff]
    %v1212 = vld [vmem:[#allocation18] sm:$0xff]
    %v1213 = vld [vmem:[%s292] sm:$0xff]
    %v1214 = vld [vmem:[%s294] sm:$0xff]
    %v1215 = vpack.c.bf16 %v1211, %v1211
    %v1216 = vld [vmem:[#allocation9] sm:$0xff]
    %v1217 = vld [vmem:[#allocation9 + $0x8] sm:$0xff]
    %v1218 = vld [vmem:[#allocation9 + $0x10] sm:$0xff]
    %v1219 = vld [vmem:[#allocation9 + $0x18] sm:$0xff]
    %v1220 = vld [vmem:[#allocation9 + $0x20] sm:$0xff]
    %v1221 = vld [vmem:[#allocation9 + $0x28] sm:$0xff]
    %v1222 = vld [vmem:[#allocation9 + $0x30] sm:$0xff]
    %v1223 = vld [vmem:[#allocation9 + $0x38] sm:$0xff]
    %v1224 = vld [vmem:[#allocation9 + $0x40] sm:$0xff]
    %v1225 = vld [vmem:[#allocation9 + $0x48] sm:$0xff]
    %v1226 = vld [vmem:[#allocation9 + $0x50] sm:$0xff]
    %v1227 = vld [vmem:[#allocation9 + $0x58] sm:$0xff]
    %v1228 = vld [vmem:[#allocation9 + $0x60] sm:$0xff]
    %v1229 = vld [vmem:[#allocation9 + $0x68] sm:$0xff]
    %v1230 = vld [vmem:[#allocation9 + $0x70] sm:$0xff]
    %v1231 = vld [vmem:[#allocation9 + $0x78] sm:$0xff]
    %v1232 = vld [vmem:[#allocation9 + $0x80] sm:$0xff]
    %v1233 = vld [vmem:[#allocation9 + $0x88] sm:$0xff]
    %v1234 = vld [vmem:[#allocation9 + $0x90] sm:$0xff]
    %v1235 = vld [vmem:[#allocation9 + $0x98] sm:$0xff]
    %v1236 = vld [vmem:[#allocation9 + $0xa0] sm:$0xff]
    %v1237 = vld [vmem:[#allocation9 + $0xa8] sm:$0xff]
    %v1238 = vld [vmem:[#allocation9 + $0xb0] sm:$0xff]
    %v1239 = vld [vmem:[#allocation9 + $0xb8] sm:$0xff]
    %v1240 = vld [vmem:[#allocation9 + $0xc0] sm:$0xff]
    %v1241 = vld [vmem:[#allocation9 + $0xc8] sm:$0xff]
    %v1242 = vld [vmem:[#allocation9 + $0xd0] sm:$0xff]
    %v1243 = vld [vmem:[#allocation9 + $0xd8] sm:$0xff]
    %v1244 = vld [vmem:[#allocation9 + $0xe0] sm:$0xff]
    %v1245 = vld [vmem:[#allocation9 + $0xe8] sm:$0xff]
    %v1246 = vld [vmem:[#allocation9 + $0xf0] sm:$0xff]
    %v1247 = vld [vmem:[#allocation9 + $0xf8] sm:$0xff]
    %v1280 = vunpack.c.l.b16 %v1216
    %v1281 = vunpack.c.h.b16 %v1216
    %v1282 = vunpack.c.l.b16 %v1217
    %v1283 = vunpack.c.h.b16 %v1217
    %v1284 = vunpack.c.l.b16 %v1218
    %v1285 = vunpack.c.h.b16 %v1218
    %v1286 = vunpack.c.l.b16 %v1219
    %v1287 = vunpack.c.h.b16 %v1219
    %v1288 = vunpack.c.l.b16 %v1220
    %v1289 = vunpack.c.h.b16 %v1220
    %v1290 = vunpack.c.l.b16 %v1221
    %v1291 = vunpack.c.h.b16 %v1221
    %v1292 = vunpack.c.l.b16 %v1222
    %v1293 = vunpack.c.h.b16 %v1222
    %v1294 = vunpack.c.l.b16 %v1223
    %v1295 = vunpack.c.h.b16 %v1223
    %v1296 = vunpack.c.l.b16 %v1224
    %v1297 = vunpack.c.h.b16 %v1224
    %v1298 = vunpack.c.l.b16 %v1225
    %v1299 = vunpack.c.h.b16 %v1225
    %v1300 = vunpack.c.l.b16 %v1226
    %v1301 = vunpack.c.h.b16 %v1226
    %v1302 = vunpack.c.l.b16 %v1227
    %v1303 = vunpack.c.h.b16 %v1227
    %v1304 = vunpack.c.l.b16 %v1228
    %v1305 = vunpack.c.h.b16 %v1228
    %v1306 = vunpack.c.l.b16 %v1229
    %v1307 = vunpack.c.h.b16 %v1229
    %v1308 = vunpack.c.l.b16 %v1230
    %v1309 = vunpack.c.h.b16 %v1230
    %v1310 = vunpack.c.l.b16 %v1231
    %v1311 = vunpack.c.h.b16 %v1231
    %v1312 = vunpack.c.l.b16 %v1232
    %v1313 = vunpack.c.h.b16 %v1232
    %v1314 = vunpack.c.l.b16 %v1233
    %v1315 = vunpack.c.h.b16 %v1233
    %v1316 = vunpack.c.l.b16 %v1234
    %v1317 = vunpack.c.h.b16 %v1234
    %v1318 = vunpack.c.l.b16 %v1235
    %v1319 = vunpack.c.h.b16 %v1235
    %v1320 = vunpack.c.l.b16 %v1236
    %v1321 = vunpack.c.h.b16 %v1236
    %v1322 = vunpack.c.l.b16 %v1237
    %v1323 = vunpack.c.h.b16 %v1237
    %v1324 = vunpack.c.l.b16 %v1238
    %v1325 = vunpack.c.h.b16 %v1238
    %v1326 = vunpack.c.l.b16 %v1239
    %v1327 = vunpack.c.h.b16 %v1239
    %v1328 = vunpack.c.l.b16 %v1240
    %v1329 = vunpack.c.h.b16 %v1240
    %v1330 = vunpack.c.l.b16 %v1241
    %v1331 = vunpack.c.h.b16 %v1241
    %v1332 = vunpack.c.l.b16 %v1242
    %v1333 = vunpack.c.h.b16 %v1242
    %v1334 = vunpack.c.l.b16 %v1243
    %v1335 = vunpack.c.h.b16 %v1243
    %v1336 = vunpack.c.l.b16 %v1244
    %v1337 = vunpack.c.h.b16 %v1244
    %v1338 = vunpack.c.l.b16 %v1245
    %v1339 = vunpack.c.h.b16 %v1245
    %v1340 = vunpack.c.l.b16 %v1246
    %v1341 = vunpack.c.h.b16 %v1246
    %v1342 = vunpack.c.l.b16 %v1247
    %v1343 = vunpack.c.h.b16 %v1247
    %v1344 = vpack.c.b16 %v1284, %v1280
    %v1345 = vpack.c.b16 %v1285, %v1281
    %v1346 = vpack.c.b16 %v1286, %v1282
    %v1347 = vpack.c.b16 %v1287, %v1283
    %v1348 = vpack.c.b16 %v1292, %v1288
    %v1349 = vpack.c.b16 %v1293, %v1289
    %v1350 = vpack.c.b16 %v1294, %v1290
    %v1351 = vpack.c.b16 %v1295, %v1291
    %v1352 = vpack.c.b16 %v1300, %v1296
    %v1353 = vpack.c.b16 %v1301, %v1297
    %v1354 = vpack.c.b16 %v1302, %v1298
    %v1355 = vpack.c.b16 %v1303, %v1299
    %v1356 = vpack.c.b16 %v1308, %v1304
    %v1357 = vpack.c.b16 %v1309, %v1305
    %v1358 = vpack.c.b16 %v1310, %v1306
    %v1359 = vpack.c.b16 %v1311, %v1307
    %v1360 = vpack.c.b16 %v1316, %v1312
    %v1361 = vpack.c.b16 %v1317, %v1313
    %v1362 = vpack.c.b16 %v1318, %v1314
    %v1363 = vpack.c.b16 %v1319, %v1315
    %v1364 = vpack.c.b16 %v1324, %v1320
    %v1365 = vpack.c.b16 %v1325, %v1321
    %v1366 = vpack.c.b16 %v1326, %v1322
    %v1367 = vpack.c.b16 %v1327, %v1323
    %v1368 = vpack.c.b16 %v1332, %v1328
    %v1369 = vpack.c.b16 %v1333, %v1329
    %v1370 = vpack.c.b16 %v1334, %v1330
    %v1371 = vpack.c.b16 %v1335, %v1331
    %v1372 = vpack.c.b16 %v1340, %v1336
    %v1373 = vpack.c.b16 %v1341, %v1337
    %v1374 = vpack.c.b16 %v1342, %v1338
    %v1375 = vpack.c.b16 %v1343, %v1339
    %1408 = vmatprep.subr.bf16.mxu0 %v1345
    %1409 = vmatpush1.bf16.msra.mxu0 %v1344
    %1410 = vmatprep.subr.bf16.mxu0 %v1349
    %1411 = vmatpush1.bf16.msra.mxu0 %v1348
    %1412 = vmatprep.subr.bf16.mxu0 %v1353
    %1413 = vmatpush1.bf16.msra.mxu0 %v1352
    %1414 = vmatprep.subr.bf16.mxu0 %v1357
    %1415 = vmatpush1.bf16.msra.mxu0 %v1356
    %1416 = vmatprep.subr.bf16.mxu0 %v1361
    %1417 = vmatpush1.bf16.msra.mxu0 %v1360
    %1418 = vmatprep.subr.bf16.mxu0 %v1365
    %1419 = vmatpush1.bf16.msra.mxu0 %v1364
    %1420 = vmatprep.subr.bf16.mxu0 %v1369
    %1421 = vmatpush1.bf16.msra.mxu0 %v1368
    %1422 = vmatprep.subr.bf16.mxu0 %v1373
    %1423 = vmatpush1.bf16.msra.mxu0 %v1372
    %1424 = vmatprep.subr.bf16.mxu0 0
    %1425 = vmatpush1.bf16.msra.mxu0 0
    %1426 = vmatprep.subr.bf16.mxu0 0
    %1427 = vmatpush1.bf16.msra.mxu0 0
    %1428 = vmatprep.subr.bf16.mxu0 0
    %1429 = vmatpush1.bf16.msra.mxu0 0
    %1430 = vmatprep.subr.bf16.mxu0 0
    %1431 = vmatpush1.bf16.msra.mxu0 0
    %1432 = vmatprep.subr.bf16.mxu0 0
    %1433 = vmatpush1.bf16.msra.mxu0 0
    %1434 = vmatprep.subr.bf16.mxu0 0
    %1435 = vmatpush1.bf16.msra.mxu0 0
    %1436 = vmatprep.subr.bf16.mxu0 0
    %1437 = vmatpush1.bf16.msra.mxu0 0
    %1438 = vmatprep.subr.bf16.mxu0 0
    %1439 = vmatpush1.bf16.msra.mxu0 0
    %1440 = vmatprep.mubr.bf16.mxu0 0
    %1441 = vmatmul.mubr.bf16.gmra.mrb[0].mxu0 %v1215
    %v1442 = vpop.f32.mrb[0].mxu0
    %v1443 = vadd.f32 0.0, %v1442
    %v1444 = vpop.f32.mrb[0].mxu0
    %v1445 = vadd.f32 0.0, %v1444
    %v1446 = vpop.f32.mrb[0].mxu0
    %v1447 = vpop.f32.mrb[0].mxu0
    %1448 = vdwg.mxu0
    %1449 = vmatprep.subr.bf16.mxu0 %v1347
    %1450 = vmatpush1.bf16.msra.mxu0 %v1346
    %1451 = vmatprep.subr.bf16.mxu0 %v1351
    %1452 = vmatpush1.bf16.msra.mxu0 %v1350
    %1453 = vmatprep.subr.bf16.mxu0 %v1355
    %1454 = vmatpush1.bf16.msra.mxu0 %v1354
    %1455 = vmatprep.subr.bf16.mxu0 %v1359
    %1456 = vmatpush1.bf16.msra.mxu0 %v1358
    %1457 = vmatprep.subr.bf16.mxu0 %v1363
    %1458 = vmatpush1.bf16.msra.mxu0 %v1362
    %1459 = vmatprep.subr.bf16.mxu0 %v1367
    %1460 = vmatpush1.bf16.msra.mxu0 %v1366
    %1461 = vmatprep.subr.bf16.mxu0 %v1371
    %1462 = vmatpush1.bf16.msra.mxu0 %v1370
    %1463 = vmatprep.subr.bf16.mxu0 %v1375
    %1464 = vmatpush1.bf16.msra.mxu0 %v1374
    %1465 = vmatprep.subr.bf16.mxu0 0
    %1466 = vmatpush1.bf16.msra.mxu0 0
    %1467 = vmatprep.subr.bf16.mxu0 0
    %1468 = vmatpush1.bf16.msra.mxu0 0
    %1469 = vmatprep.subr.bf16.mxu0 0
    %1470 = vmatpush1.bf16.msra.mxu0 0
    %1471 = vmatprep.subr.bf16.mxu0 0
    %1472 = vmatpush1.bf16.msra.mxu0 0
    %1473 = vmatprep.subr.bf16.mxu0 0
    %1474 = vmatpush1.bf16.msra.mxu0 0
    %1475 = vmatprep.subr.bf16.mxu0 0
    %1476 = vmatpush1.bf16.msra.mxu0 0
    %1477 = vmatprep.subr.bf16.mxu0 0
    %1478 = vmatpush1.bf16.msra.mxu0 0
    %1479 = vmatprep.subr.bf16.mxu0 0
    %1480 = vmatpush1.bf16.msra.mxu0 0
    %1481 = vmatprep.mubr.bf16.mxu0 0
    %1482 = vmatmul.mubr.bf16.gmra.mrb[0].mxu0 %v1215
    %v1483 = vpop.f32.mrb[0].mxu0
    %v1484 = vadd.f32 0.0, %v1483
    %v1485 = vpop.f32.mrb[0].mxu0
    %v1486 = vadd.f32 0.0, %v1485
    %v1487 = vpop.f32.mrb[0].mxu0
    %v1488 = vpop.f32.mrb[0].mxu0
    %1489 = vdwg.mxu0
    %v1490 = vadd.f32 %v1207, %v1443
    %v1491 = vadd.f32 %v1208, %v1445
    %v1492 = vadd.f32 %v1209, %v1484
    %v1493 = vadd.f32 %v1210, %v1486
    %v1494 = vxor.u32 %v1490, 2147483648
    %v1495 = vmul.f32 %v1494, 1.442695
    %v1496 = vpow.pop %v1495
    %v1497 = vadd.f32 %v1496, 1.0
    %v1498 = vrcp.pop %v1497
    %v1499 = vmul.f32 1.0, %v1498
    %v1500 = vxor.u32 %v1491, 2147483648
    %v1501 = vmul.f32 %v1500, 1.442695
    %v1502 = vpow.pop %v1501
    %v1503 = vadd.f32 %v1502, 1.0
    %v1504 = vrcp.pop %v1503
    %v1505 = vmul.f32 1.0, %v1504
    %v1506 = vtanh.pop %v1492
    %v1507 = vxor.u32 %v1493, 2147483648
    %v1508 = vmul.f32 %v1507, 1.442695
    %v1509 = vpow.pop %v1508
    %v1510 = vadd.f32 %v1509, 1.0
    %v1511 = vrcp.pop %v1510
    %v1512 = vmul.f32 1.0, %v1511
    %v1513 = vmul.f32 %v1505, %v1212
    %v1514 = vmul.f32 %v1499, %v1506
    %v1515 = vadd.f32 %v1513, %v1514
    %v1516 = vtanh.pop %v1515
    %v1517 = vmul.f32 %v1512, %v1516
    %v1518 = vpack.c.bf16 %v1517, %v1517
    %v1519 = vld [vmem:[#allocation10] sm:$0xff]
    %v1520 = vld [vmem:[#allocation10 + $0x8] sm:$0xff]
    %v1521 = vld [vmem:[#allocation10 + $0x10] sm:$0xff]
    %v1522 = vld [vmem:[#allocation10 + $0x18] sm:$0xff]
    %v1523 = vld [vmem:[#allocation10 + $0x20] sm:$0xff]
    %v1524 = vld [vmem:[#allocation10 + $0x28] sm:$0xff]
    %v1525 = vld [vmem:[#allocation10 + $0x30] sm:$0xff]
    %v1526 = vld [vmem:[#allocation10 + $0x38] sm:$0xff]
    %v1527 = vld [vmem:[#allocation10 + $0x40] sm:$0xff]
    %v1528 = vld [vmem:[#allocation10 + $0x48] sm:$0xff]
    %v1529 = vld [vmem:[#allocation10 + $0x50] sm:$0xff]
    %v1530 = vld [vmem:[#allocation10 + $0x58] sm:$0xff]
    %v1531 = vld [vmem:[#allocation10 + $0x60] sm:$0xff]
    %v1532 = vld [vmem:[#allocation10 + $0x68] sm:$0xff]
    %v1533 = vld [vmem:[#allocation10 + $0x70] sm:$0xff]
    %v1534 = vld [vmem:[#allocation10 + $0x78] sm:$0xff]
    %v1535 = vld [vmem:[#allocation10 + $0x80] sm:$0xff]
    %v1536 = vld [vmem:[#allocation10 + $0x88] sm:$0xff]
    %v1537 = vld [vmem:[#allocation10 + $0x90] sm:$0xff]
    %v1538 = vld [vmem:[#allocation10 + $0x98] sm:$0xff]
    %v1539 = vld [vmem:[#allocation10 + $0xa0] sm:$0xff]
    %v1540 = vld [vmem:[#allocation10 + $0xa8] sm:$0xff]
    %v1541 = vld [vmem:[#allocation10 + $0xb0] sm:$0xff]
    %v1542 = vld [vmem:[#allocation10 + $0xb8] sm:$0xff]
    %v1543 = vld [vmem:[#allocation10 + $0xc0] sm:$0xff]
    %v1544 = vld [vmem:[#allocation10 + $0xc8] sm:$0xff]
    %v1545 = vld [vmem:[#allocation10 + $0xd0] sm:$0xff]
    %v1546 = vld [vmem:[#allocation10 + $0xd8] sm:$0xff]
    %v1547 = vld [vmem:[#allocation10 + $0xe0] sm:$0xff]
    %v1548 = vld [vmem:[#allocation10 + $0xe8] sm:$0xff]
    %v1549 = vld [vmem:[#allocation10 + $0xf0] sm:$0xff]
    %v1550 = vld [vmem:[#allocation10 + $0xf8] sm:$0xff]
    %v1551 = vpack.c.bf16 %v1213, %v1213
    %v1552 = vld [vmem:[#allocation12] sm:$0xff]
    %v1553 = vld [vmem:[#allocation12 + $0x8] sm:$0xff]
    %v1554 = vld [vmem:[#allocation12 + $0x10] sm:$0xff]
    %v1555 = vld [vmem:[#allocation12 + $0x18] sm:$0xff]
    %v1556 = vld [vmem:[#allocation12 + $0x20] sm:$0xff]
    %v1557 = vld [vmem:[#allocation12 + $0x28] sm:$0xff]
    %v1558 = vld [vmem:[#allocation12 + $0x30] sm:$0xff]
    %v1559 = vld [vmem:[#allocation12 + $0x38] sm:$0xff]
    %v1560 = vld [vmem:[#allocation12 + $0x40] sm:$0xff]
    %v1561 = vld [vmem:[#allocation12 + $0x48] sm:$0xff]
    %v1562 = vld [vmem:[#allocation12 + $0x50] sm:$0xff]
    %v1563 = vld [vmem:[#allocation12 + $0x58] sm:$0xff]
    %v1564 = vld [vmem:[#allocation12 + $0x60] sm:$0xff]
    %v1565 = vld [vmem:[#allocation12 + $0x68] sm:$0xff]
    %v1566 = vld [vmem:[#allocation12 + $0x70] sm:$0xff]
    %v1567 = vld [vmem:[#allocation12 + $0x78] sm:$0xff]
    %v1568 = vld [vmem:[#allocation12 + $0x80] sm:$0xff]
    %v1569 = vld [vmem:[#allocation12 + $0x88] sm:$0xff]
    %v1570 = vld [vmem:[#allocation12 + $0x90] sm:$0xff]
    %v1571 = vld [vmem:[#allocation12 + $0x98] sm:$0xff]
    %v1572 = vld [vmem:[#allocation12 + $0xa0] sm:$0xff]
    %v1573 = vld [vmem:[#allocation12 + $0xa8] sm:$0xff]
    %v1574 = vld [vmem:[#allocation12 + $0xb0] sm:$0xff]
    %v1575 = vld [vmem:[#allocation12 + $0xb8] sm:$0xff]
    %v1576 = vld [vmem:[#allocation12 + $0xc0] sm:$0xff]
    %v1577 = vld [vmem:[#allocation12 + $0xc8] sm:$0xff]
    %v1578 = vld [vmem:[#allocation12 + $0xd0] sm:$0xff]
    %v1579 = vld [vmem:[#allocation12 + $0xd8] sm:$0xff]
    %v1580 = vld [vmem:[#allocation12 + $0xe0] sm:$0xff]
    %v1581 = vld [vmem:[#allocation12 + $0xe8] sm:$0xff]
    %v1582 = vld [vmem:[#allocation12 + $0xf0] sm:$0xff]
    %v1583 = vld [vmem:[#allocation12 + $0xf8] sm:$0xff]
    %v1616 = vunpack.c.l.b16 %v1552
    %v1617 = vunpack.c.h.b16 %v1552
    %v1618 = vunpack.c.l.b16 %v1553
    %v1619 = vunpack.c.h.b16 %v1553
    %v1620 = vunpack.c.l.b16 %v1554
    %v1621 = vunpack.c.h.b16 %v1554
    %v1622 = vunpack.c.l.b16 %v1555
    %v1623 = vunpack.c.h.b16 %v1555
    %v1624 = vunpack.c.l.b16 %v1556
    %v1625 = vunpack.c.h.b16 %v1556
    %v1626 = vunpack.c.l.b16 %v1557
    %v1627 = vunpack.c.h.b16 %v1557
    %v1628 = vunpack.c.l.b16 %v1558
    %v1629 = vunpack.c.h.b16 %v1558
    %v1630 = vunpack.c.l.b16 %v1559
    %v1631 = vunpack.c.h.b16 %v1559
    %v1632 = vunpack.c.l.b16 %v1560
    %v1633 = vunpack.c.h.b16 %v1560
    %v1634 = vunpack.c.l.b16 %v1561
    %v1635 = vunpack.c.h.b16 %v1561
    %v1636 = vunpack.c.l.b16 %v1562
    %v1637 = vunpack.c.h.b16 %v1562
    %v1638 = vunpack.c.l.b16 %v1563
    %v1639 = vunpack.c.h.b16 %v1563
    %v1640 = vunpack.c.l.b16 %v1564
    %v1641 = vunpack.c.h.b16 %v1564
    %v1642 = vunpack.c.l.b16 %v1565
    %v1643 = vunpack.c.h.b16 %v1565
    %v1644 = vunpack.c.l.b16 %v1566
    %v1645 = vunpack.c.h.b16 %v1566
    %v1646 = vunpack.c.l.b16 %v1567
    %v1647 = vunpack.c.h.b16 %v1567
    %v1648 = vunpack.c.l.b16 %v1568
    %v1649 = vunpack.c.h.b16 %v1568
    %v1650 = vunpack.c.l.b16 %v1569
    %v1651 = vunpack.c.h.b16 %v1569
    %v1652 = vunpack.c.l.b16 %v1570
    %v1653 = vunpack.c.h.b16 %v1570
    %v1654 = vunpack.c.l.b16 %v1571
    %v1655 = vunpack.c.h.b16 %v1571
    %v1656 = vunpack.c.l.b16 %v1572
    %v1657 = vunpack.c.h.b16 %v1572
    %v1658 = vunpack.c.l.b16 %v1573
    %v1659 = vunpack.c.h.b16 %v1573
    %v1660 = vunpack.c.l.b16 %v1574
    %v1661 = vunpack.c.h.b16 %v1574
    %v1662 = vunpack.c.l.b16 %v1575
    %v1663 = vunpack.c.h.b16 %v1575
    %v1664 = vunpack.c.l.b16 %v1576
    %v1665 = vunpack.c.h.b16 %v1576
    %v1666 = vunpack.c.l.b16 %v1577
    %v1667 = vunpack.c.h.b16 %v1577
    %v1668 = vunpack.c.l.b16 %v1578
    %v1669 = vunpack.c.h.b16 %v1578
    %v1670 = vunpack.c.l.b16 %v1579
    %v1671 = vunpack.c.h.b16 %v1579
    %v1672 = vunpack.c.l.b16 %v1580
    %v1673 = vunpack.c.h.b16 %v1580
    %v1674 = vunpack.c.l.b16 %v1581
    %v1675 = vunpack.c.h.b16 %v1581
    %v1676 = vunpack.c.l.b16 %v1582
    %v1677 = vunpack.c.h.b16 %v1582
    %v1678 = vunpack.c.l.b16 %v1583
    %v1679 = vunpack.c.h.b16 %v1583
    %v1680 = vpack.c.b16 %v1620, %v1616
    %v1681 = vpack.c.b16 %v1621, %v1617
    %v1682 = vpack.c.b16 %v1622, %v1618
    %v1683 = vpack.c.b16 %v1623, %v1619
    %v1684 = vpack.c.b16 %v1628, %v1624
    %v1685 = vpack.c.b16 %v1629, %v1625
    %v1686 = vpack.c.b16 %v1630, %v1626
    %v1687 = vpack.c.b16 %v1631, %v1627
    %v1688 = vpack.c.b16 %v1636, %v1632
    %v1689 = vpack.c.b16 %v1637, %v1633
    %v1690 = vpack.c.b16 %v1638, %v1634
    %v1691 = vpack.c.b16 %v1639, %v1635
    %v1692 = vpack.c.b16 %v1644, %v1640
    %v1693 = vpack.c.b16 %v1645, %v1641
    %v1694 = vpack.c.b16 %v1646, %v1642
    %v1695 = vpack.c.b16 %v1647, %v1643
    %v1696 = vpack.c.b16 %v1652, %v1648
    %v1697 = vpack.c.b16 %v1653, %v1649
    %v1698 = vpack.c.b16 %v1654, %v1650
    %v1699 = vpack.c.b16 %v1655, %v1651
    %v1700 = vpack.c.b16 %v1660, %v1656
    %v1701 = vpack.c.b16 %v1661, %v1657
    %v1702 = vpack.c.b16 %v1662, %v1658
    %v1703 = vpack.c.b16 %v1663, %v1659
    %v1704 = vpack.c.b16 %v1668, %v1664
    %v1705 = vpack.c.b16 %v1669, %v1665
    %v1706 = vpack.c.b16 %v1670, %v1666
    %v1707 = vpack.c.b16 %v1671, %v1667
    %v1708 = vpack.c.b16 %v1676, %v1672
    %v1709 = vpack.c.b16 %v1677, %v1673
    %v1710 = vpack.c.b16 %v1678, %v1674
    %v1711 = vpack.c.b16 %v1679, %v1675
    %1744 = vmatprep.subr.bf16.mxu0 %v1681
    %1745 = vmatpush1.bf16.msra.mxu0 %v1680
    %1746 = vmatprep.subr.bf16.mxu0 %v1685
    %1747 = vmatpush1.bf16.msra.mxu0 %v1684
    %1748 = vmatprep.subr.bf16.mxu0 %v1689
    %1749 = vmatpush1.bf16.msra.mxu0 %v1688
    %1750 = vmatprep.subr.bf16.mxu0 %v1693
    %1751 = vmatpush1.bf16.msra.mxu0 %v1692
    %1752 = vmatprep.subr.bf16.mxu0 %v1697
    %1753 = vmatpush1.bf16.msra.mxu0 %v1696
    %1754 = vmatprep.subr.bf16.mxu0 %v1701
    %1755 = vmatpush1.bf16.msra.mxu0 %v1700
    %1756 = vmatprep.subr.bf16.mxu0 %v1705
    %1757 = vmatpush1.bf16.msra.mxu0 %v1704
    %1758 = vmatprep.subr.bf16.mxu0 %v1709
    %1759 = vmatpush1.bf16.msra.mxu0 %v1708
    %1760 = vmatprep.subr.bf16.mxu0 0
    %1761 = vmatpush1.bf16.msra.mxu0 0
    %1762 = vmatprep.subr.bf16.mxu0 0
    %1763 = vmatpush1.bf16.msra.mxu0 0
    %1764 = vmatprep.subr.bf16.mxu0 0
    %1765 = vmatpush1.bf16.msra.mxu0 0
    %1766 = vmatprep.subr.bf16.mxu0 0
    %1767 = vmatpush1.bf16.msra.mxu0 0
    %1768 = vmatprep.subr.bf16.mxu0 0
    %1769 = vmatpush1.bf16.msra.mxu0 0
    %1770 = vmatprep.subr.bf16.mxu0 0
    %1771 = vmatpush1.bf16.msra.mxu0 0
    %1772 = vmatprep.subr.bf16.mxu0 0
    %1773 = vmatpush1.bf16.msra.mxu0 0
    %1774 = vmatprep.subr.bf16.mxu0 0
    %1775 = vmatpush1.bf16.msra.mxu0 0
    %1776 = vmatprep.mubr.bf16.mxu0 0
    %1777 = vmatmul.mubr.bf16.gmra.mrb[0].mxu0 %v1551
    %v1778 = vpop.f32.mrb[0].mxu0
    %v1779 = vadd.f32 0.0, %v1778
    %v1780 = vpop.f32.mrb[0].mxu0
    %v1781 = vadd.f32 0.0, %v1780
    %v1782 = vpop.f32.mrb[0].mxu0
    %v1783 = vpop.f32.mrb[0].mxu0
    %1784 = vdwg.mxu0
    %1785 = vmatprep.subr.bf16.mxu0 %v1683
    %1786 = vmatpush1.bf16.msra.mxu0 %v1682
    %1787 = vmatprep.subr.bf16.mxu0 %v1687
    %1788 = vmatpush1.bf16.msra.mxu0 %v1686
    %1789 = vmatprep.subr.bf16.mxu0 %v1691
    %1790 = vmatpush1.bf16.msra.mxu0 %v1690
    %1791 = vmatprep.subr.bf16.mxu0 %v1695
    %1792 = vmatpush1.bf16.msra.mxu0 %v1694
    %1793 = vmatprep.subr.bf16.mxu0 %v1699
    %1794 = vmatpush1.bf16.msra.mxu0 %v1698
    %1795 = vmatprep.subr.bf16.mxu0 %v1703
    %1796 = vmatpush1.bf16.msra.mxu0 %v1702
    %1797 = vmatprep.subr.bf16.mxu0 %v1707
    %1798 = vmatpush1.bf16.msra.mxu0 %v1706
    %1799 = vmatprep.subr.bf16.mxu0 %v1711
    %1800 = vmatpush1.bf16.msra.mxu0 %v1710
    %1801 = vmatprep.subr.bf16.mxu0 0
    %1802 = vmatpush1.bf16.msra.mxu0 0
    %1803 = vmatprep.subr.bf16.mxu0 0
    %1804 = vmatpush1.bf16.msra.mxu0 0
    %1805 = vmatprep.subr.bf16.mxu0 0
    %1806 = vmatpush1.bf16.msra.mxu0 0
    %1807 = vmatprep.subr.bf16.mxu0 0
    %1808 = vmatpush1.bf16.msra.mxu0 0
    %1809 = vmatprep.subr.bf16.mxu0 0
    %1810 = vmatpush1.bf16.msra.mxu0 0
    %1811 = vmatprep.subr.bf16.mxu0 0
    %1812 = vmatpush1.bf16.msra.mxu0 0
    %1813 = vmatprep.subr.bf16.mxu0 0
    %1814 = vmatpush1.bf16.msra.mxu0 0
    %1815 = vmatprep.subr.bf16.mxu0 0
    %1816 = vmatpush1.bf16.msra.mxu0 0
    %1817 = vmatprep.mubr.bf16.mxu0 0
    %1818 = vmatmul.mubr.bf16.gmra.mrb[0].mxu0 %v1551
    %v1819 = vpop.f32.mrb[0].mxu0
    %v1820 = vadd.f32 0.0, %v1819
    %v1821 = vpop.f32.mrb[0].mxu0
    %v1822 = vadd.f32 0.0, %v1821
    %v1823 = vpop.f32.mrb[0].mxu0
    %v1824 = vpop.f32.mrb[0].mxu0
    %1825 = vdwg.mxu0
    %v1858 = vunpack.c.l.b16 %v1519
    %v1859 = vunpack.c.h.b16 %v1519
    %v1860 = vunpack.c.l.b16 %v1520
    %v1861 = vunpack.c.h.b16 %v1520
    %v1862 = vunpack.c.l.b16 %v1521
    %v1863 = vunpack.c.h.b16 %v1521
    %v1864 = vunpack.c.l.b16 %v1522
    %v1865 = vunpack.c.h.b16 %v1522
    %v1866 = vunpack.c.l.b16 %v1523
    %v1867 = vunpack.c.h.b16 %v1523
    %v1868 = vunpack.c.l.b16 %v1524
    %v1869 = vunpack.c.h.b16 %v1524
    %v1870 = vunpack.c.l.b16 %v1525
    %v1871 = vunpack.c.h.b16 %v1525
    %v1872 = vunpack.c.l.b16 %v1526
    %v1873 = vunpack.c.h.b16 %v1526
    %v1874 = vunpack.c.l.b16 %v1527
    %v1875 = vunpack.c.h.b16 %v1527
    %v1876 = vunpack.c.l.b16 %v1528
    %v1877 = vunpack.c.h.b16 %v1528
    %v1878 = vunpack.c.l.b16 %v1529
    %v1879 = vunpack.c.h.b16 %v1529
    %v1880 = vunpack.c.l.b16 %v1530
    %v1881 = vunpack.c.h.b16 %v1530
    %v1882 = vunpack.c.l.b16 %v1531
    %v1883 = vunpack.c.h.b16 %v1531
    %v1884 = vunpack.c.l.b16 %v1532
    %v1885 = vunpack.c.h.b16 %v1532
    %v1886 = vunpack.c.l.b16 %v1533
    %v1887 = vunpack.c.h.b16 %v1533
    %v1888 = vunpack.c.l.b16 %v1534
    %v1889 = vunpack.c.h.b16 %v1534
    %v1890 = vunpack.c.l.b16 %v1535
    %v1891 = vunpack.c.h.b16 %v1535
    %v1892 = vunpack.c.l.b16 %v1536
    %v1893 = vunpack.c.h.b16 %v1536
    %v1894 = vunpack.c.l.b16 %v1537
    %v1895 = vunpack.c.h.b16 %v1537
    %v1896 = vunpack.c.l.b16 %v1538
    %v1897 = vunpack.c.h.b16 %v1538
    %v1898 = vunpack.c.l.b16 %v1539
    %v1899 = vunpack.c.h.b16 %v1539
    %v1900 = vunpack.c.l.b16 %v1540
    %v1901 = vunpack.c.h.b16 %v1540
    %v1902 = vunpack.c.l.b16 %v1541
    %v1903 = vunpack.c.h.b16 %v1541
    %v1904 = vunpack.c.l.b16 %v1542
    %v1905 = vunpack.c.h.b16 %v1542
    %v1906 = vunpack.c.l.b16 %v1543
    %v1907 = vunpack.c.h.b16 %v1543
    %v1908 = vunpack.c.l.b16 %v1544
    %v1909 = vunpack.c.h.b16 %v1544
    %v1910 = vunpack.c.l.b16 %v1545
    %v1911 = vunpack.c.h.b16 %v1545
    %v1912 = vunpack.c.l.b16 %v1546
    %v1913 = vunpack.c.h.b16 %v1546
    %v1914 = vunpack.c.l.b16 %v1547
    %v1915 = vunpack.c.h.b16 %v1547
    %v1916 = vunpack.c.l.b16 %v1548
    %v1917 = vunpack.c.h.b16 %v1548
    %v1918 = vunpack.c.l.b16 %v1549
    %v1919 = vunpack.c.h.b16 %v1549
    %v1920 = vunpack.c.l.b16 %v1550
    %v1921 = vunpack.c.h.b16 %v1550
    %v1922 = vpack.c.b16 %v1862, %v1858
    %v1923 = vpack.c.b16 %v1863, %v1859
    %v1924 = vpack.c.b16 %v1864, %v1860
    %v1925 = vpack.c.b16 %v1865, %v1861
    %v1926 = vpack.c.b16 %v1870, %v1866
    %v1927 = vpack.c.b16 %v1871, %v1867
    %v1928 = vpack.c.b16 %v1872, %v1868
    %v1929 = vpack.c.b16 %v1873, %v1869
    %v1930 = vpack.c.b16 %v1878, %v1874
    %v1931 = vpack.c.b16 %v1879, %v1875
    %v1932 = vpack.c.b16 %v1880, %v1876
    %v1933 = vpack.c.b16 %v1881, %v1877
    %v1934 = vpack.c.b16 %v1886, %v1882
    %v1935 = vpack.c.b16 %v1887, %v1883
    %v1936 = vpack.c.b16 %v1888, %v1884
    %v1937 = vpack.c.b16 %v1889, %v1885
    %v1938 = vpack.c.b16 %v1894, %v1890
    %v1939 = vpack.c.b16 %v1895, %v1891
    %v1940 = vpack.c.b16 %v1896, %v1892
    %v1941 = vpack.c.b16 %v1897, %v1893
    %v1942 = vpack.c.b16 %v1902, %v1898
    %v1943 = vpack.c.b16 %v1903, %v1899
    %v1944 = vpack.c.b16 %v1904, %v1900
    %v1945 = vpack.c.b16 %v1905, %v1901
    %v1946 = vpack.c.b16 %v1910, %v1906
    %v1947 = vpack.c.b16 %v1911, %v1907
    %v1948 = vpack.c.b16 %v1912, %v1908
    %v1949 = vpack.c.b16 %v1913, %v1909
    %v1950 = vpack.c.b16 %v1918, %v1914
    %v1951 = vpack.c.b16 %v1919, %v1915
    %v1952 = vpack.c.b16 %v1920, %v1916
    %v1953 = vpack.c.b16 %v1921, %v1917
    %1986 = vmatprep.subr.bf16.mxu0 %v1923
    %1987 = vmatpush1.bf16.msra.mxu0 %v1922
    %1988 = vmatprep.subr.bf16.mxu0 %v1927
    %1989 = vmatpush1.bf16.msra.mxu0 %v1926
    %1990 = vmatprep.subr.bf16.mxu0 %v1931
    %1991 = vmatpush1.bf16.msra.mxu0 %v1930
    %1992 = vmatprep.subr.bf16.mxu0 %v1935
    %1993 = vmatpush1.bf16.msra.mxu0 %v1934
    %1994 = vmatprep.subr.bf16.mxu0 %v1939
    %1995 = vmatpush1.bf16.msra.mxu0 %v1938
    %1996 = vmatprep.subr.bf16.mxu0 %v1943
    %1997 = vmatpush1.bf16.msra.mxu0 %v1942
    %1998 = vmatprep.subr.bf16.mxu0 %v1947
    %1999 = vmatpush1.bf16.msra.mxu0 %v1946
    %2000 = vmatprep.subr.bf16.mxu0 %v1951
    %2001 = vmatpush1.bf16.msra.mxu0 %v1950
    %2002 = vmatprep.subr.bf16.mxu0 0
    %2003 = vmatpush1.bf16.msra.mxu0 0
    %2004 = vmatprep.subr.bf16.mxu0 0
    %2005 = vmatpush1.bf16.msra.mxu0 0
    %2006 = vmatprep.subr.bf16.mxu0 0
    %2007 = vmatpush1.bf16.msra.mxu0 0
    %2008 = vmatprep.subr.bf16.mxu0 0
    %2009 = vmatpush1.bf16.msra.mxu0 0
    %2010 = vmatprep.subr.bf16.mxu0 0
    %2011 = vmatpush1.bf16.msra.mxu0 0
    %2012 = vmatprep.subr.bf16.mxu0 0
    %2013 = vmatpush1.bf16.msra.mxu0 0
    %2014 = vmatprep.subr.bf16.mxu0 0
    %2015 = vmatpush1.bf16.msra.mxu0 0
    %2016 = vmatprep.subr.bf16.mxu0 0
    %2017 = vmatpush1.bf16.msra.mxu0 0
    %2018 = vmatprep.mubr.bf16.mxu0 0
    %2019 = vmatmul.mubr.bf16.gmra.mrb[0].mxu0 %v1518
    %v2020 = vpop.f32.mrb[0].mxu0
    %v2021 = vadd.f32 %v1779, %v2020
    %v2022 = vpop.f32.mrb[0].mxu0
    %v2023 = vadd.f32 %v1781, %v2022
    %v2024 = vpop.f32.mrb[0].mxu0
    %v2025 = vpop.f32.mrb[0].mxu0
    %2026 = vdwg.mxu0
    %2027 = vmatprep.subr.bf16.mxu0 %v1925
    %2028 = vmatpush1.bf16.msra.mxu0 %v1924
    %2029 = vmatprep.subr.bf16.mxu0 %v1929
    %2030 = vmatpush1.bf16.msra.mxu0 %v1928
    %2031 = vmatprep.subr.bf16.mxu0 %v1933
    %2032 = vmatpush1.bf16.msra.mxu0 %v1932
    %2033 = vmatprep.subr.bf16.mxu0 %v1937
    %2034 = vmatpush1.bf16.msra.mxu0 %v1936
    %2035 = vmatprep.subr.bf16.mxu0 %v1941
    %2036 = vmatpush1.bf16.msra.mxu0 %v1940
    %2037 = vmatprep.subr.bf16.mxu0 %v1945
    %2038 = vmatpush1.bf16.msra.mxu0 %v1944
    %2039 = vmatprep.subr.bf16.mxu0 %v1949
    %2040 = vmatpush1.bf16.msra.mxu0 %v1948
    %2041 = vmatprep.subr.bf16.mxu0 %v1953
    %2042 = vmatpush1.bf16.msra.mxu0 %v1952
    %2043 = vmatprep.subr.bf16.mxu0 0
    %2044 = vmatpush1.bf16.msra.mxu0 0
    %2045 = vmatprep.subr.bf16.mxu0 0
    %2046 = vmatpush1.bf16.msra.mxu0 0
    %2047 = vmatprep.subr.bf16.mxu0 0
    %2048 = vmatpush1.bf16.msra.mxu0 0
    %2049 = vmatprep.subr.bf16.mxu0 0
    %2050 = vmatpush1.bf16.msra.mxu0 0
    %2051 = vmatprep.subr.bf16.mxu0 0
    %2052 = vmatpush1.bf16.msra.mxu0 0
    %2053 = vmatprep.subr.bf16.mxu0 0
    %2054 = vmatpush1.bf16.msra.mxu0 0
    %2055 = vmatprep.subr.bf16.mxu0 0
    %2056 = vmatpush1.bf16.msra.mxu0 0
    %2057 = vmatprep.subr.bf16.mxu0 0
    %2058 = vmatpush1.bf16.msra.mxu0 0
    %2059 = vmatprep.mubr.bf16.mxu0 0
    %2060 = vmatmul.mubr.bf16.gmra.mrb[0].mxu0 %v1518
    %v2061 = vpop.f32.mrb[0].mxu0
    %v2062 = vadd.f32 %v1820, %v2061
    %v2063 = vpop.f32.mrb[0].mxu0
    %v2064 = vadd.f32 %v1822, %v2063
    %v2065 = vpop.f32.mrb[0].mxu0
    %v2066 = vpop.f32.mrb[0].mxu0
    %2067 = vdwg.mxu0
    %v2068 = vld [vmem:[%s6] sm:$0xf]
    %v2070 = vlaneseq
    %v2071 = vshrl.u32 %v2070, 7
    %v2072 = vsub.s32 0, %v2071
    %v2073 = vrot.slane %v2068, %v2072
    %v2074 = vlaneseq
    %v2075 = vshrl.u32 %v2074, 7
    %v2076 = vsub.s32 1, %v2075
    %v2077 = vrot.slane %v2068, %v2076
    %v2078 = vlaneseq
    %v2079 = vshrl.u32 %v2078, 7
    %v2080 = vsub.s32 2, %v2079
    %v2081 = vrot.slane %v2068, %v2080
    %v2082 = vlaneseq
    %v2083 = vshrl.u32 %v2082, 7
    %v2084 = vsub.s32 3, %v2083
    %v2085 = vrot.slane %v2068, %v2084
    %v2090 = vadd.f32 %v2021, %v2073
    %v2091 = vadd.f32 %v2023, %v2077
    %v2092 = vadd.f32 %v2062, %v2081
    %v2093 = vadd.f32 %v2064, %v2085
    %v2094 = vxor.u32 %v2090, 2147483648
    %v2095 = vmul.f32 %v2094, 1.442695
    %v2096 = vpow.pop %v2095
    %v2097 = vadd.f32 %v2096, 1.0
    %v2098 = vrcp.pop %v2097
    %v2099 = vmul.f32 1.0, %v2098
    %v2100 = vxor.u32 %v2091, 2147483648
    %v2101 = vmul.f32 %v2100, 1.442695
    %v2102 = vpow.pop %v2101
    %v2103 = vadd.f32 %v2102, 1.0
    %v2104 = vrcp.pop %v2103
    %v2105 = vmul.f32 1.0, %v2104
    %v2106 = vtanh.pop %v2092
    %v2107 = vxor.u32 %v2093, 2147483648
    %v2108 = vmul.f32 %v2107, 1.442695
    %v2109 = vpow.pop %v2108
    %v2110 = vadd.f32 %v2109, 1.0
    %v2111 = vrcp.pop %v2110
    %v2112 = vmul.f32 1.0, %v2111
    %v2113 = vmul.f32 %v2105, %v1214
    %v2114 = vmul.f32 %v2099, %v2106
    %v2115 = vadd.f32 %v2113, %v2114
    %v2116 = vtanh.pop %v2115
    %v2117 = vmul.f32 %v2112, %v2116
    %2118 = vst [vmem:[#allocation16] sm:$0xff] %v1517
    %2119 = vst [vmem:[#allocation18] sm:$0xff] %v1515
    %2120 = vst [vmem:[%s292] sm:$0xff] %v2117
    %2121 = vst [vmem:[%s294] sm:$0xff] %v2115
    %s2122 = scalar_lea.vmem [#allocation3], 8
    %2123 = vst [vmem:[%s2122] sm:$0xff] %v2117
    %v2124 = vld [vmem:[#allocation3] ss:$8 sm:$0xf]
    %v2125 = vld [vmem:[#allocation3] ss:$8 sm:$0xf0]
    %v2126 = vor.u32 %v2124, %v2125
    %v2127 = vpack.c.bf16 %v2126, %v2126
    %v2128 = vld [vmem:[#allocation13] sm:$0xf]
    %v2129 = vld [vmem:[#allocation13 + $0x4] sm:$0xf]
    %v2130 = vld [vmem:[#allocation13 + $0x8] sm:$0xf]
    %v2131 = vld [vmem:[#allocation13 + $0xc] sm:$0xf]
    %v2132 = vld [vmem:[#allocation13 + $0x10] sm:$0xf]
    %v2133 = vld [vmem:[#allocation13 + $0x14] sm:$0xf]
    %v2134 = vld [vmem:[#allocation13 + $0x18] sm:$0xf]
    %v2135 = vld [vmem:[#allocation13 + $0x1c] sm:$0xf]
    %v2136 = vld [vmem:[#allocation13 + $0x20] sm:$0xf]
    %v2137 = vld [vmem:[#allocation13 + $0x24] sm:$0xf]
    %v2138 = vld [vmem:[#allocation13 + $0x28] sm:$0xf]
    %v2139 = vld [vmem:[#allocation13 + $0x2c] sm:$0xf]
    %v2140 = vld [vmem:[#allocation13 + $0x30] sm:$0xf]
    %v2141 = vld [vmem:[#allocation13 + $0x34] sm:$0xf]
    %v2142 = vld [vmem:[#allocation13 + $0x38] sm:$0xf]
    %v2143 = vld [vmem:[#allocation13 + $0x3c] sm:$0xf]
    %s2144 = scalar_lea.vmem [#allocation3], 1
    %v2145 = vld [vmem:[%s2144] ss:$8 sm:$0xf]
    %v2146 = vld [vmem:[%s2144] ss:$8 sm:$0xf0]
    %v2147 = vor.u32 %v2145, %v2146
    %v2148 = vpack.c.bf16 %v2147, %v2147
    %s2149 = scalar_lea.vmem [#allocation13], 64
    %v2150 = vld [vmem:[%s2149] sm:$0xf]
    %v2151 = vld [vmem:[%s2149 + $0x4] sm:$0xf]
    %v2152 = vld [vmem:[%s2149 + $0x8] sm:$0xf]
    %v2153 = vld [vmem:[%s2149 + $0xc] sm:$0xf]
    %v2154 = vld [vmem:[%s2149 + $0x10] sm:$0xf]
    %v2155 = vld [vmem:[%s2149 + $0x14] sm:$0xf]
    %v2156 = vld [vmem:[%s2149 + $0x18] sm:$0xf]
    %v2157 = vld [vmem:[%s2149 + $0x1c] sm:$0xf]
    %v2158 = vld [vmem:[%s2149 + $0x20] sm:$0xf]
    %v2159 = vld [vmem:[%s2149 + $0x24] sm:$0xf]
    %v2160 = vld [vmem:[%s2149 + $0x28] sm:$0xf]
    %v2161 = vld [vmem:[%s2149 + $0x2c] sm:$0xf]
    %v2162 = vld [vmem:[%s2149 + $0x30] sm:$0xf]
    %v2163 = vld [vmem:[%s2149 + $0x34] sm:$0xf]
    %v2164 = vld [vmem:[%s2149 + $0x38] sm:$0xf]
    %v2165 = vld [vmem:[%s2149 + $0x3c] sm:$0xf]
    %v2182 = vunpack.c.l.b16 %v2150
    %v2183 = vunpack.c.l.b16 %v2151
    %v2184 = vunpack.c.l.b16 %v2152
    %v2185 = vunpack.c.l.b16 %v2153
    %v2186 = vunpack.c.l.b16 %v2154
    %v2187 = vunpack.c.l.b16 %v2155
    %v2188 = vunpack.c.l.b16 %v2156
    %v2189 = vunpack.c.l.b16 %v2157
    %v2190 = vunpack.c.l.b16 %v2158
    %v2191 = vunpack.c.l.b16 %v2159
    %v2192 = vunpack.c.l.b16 %v2160
    %v2193 = vunpack.c.l.b16 %v2161
    %v2194 = vunpack.c.l.b16 %v2162
    %v2195 = vunpack.c.l.b16 %v2163
    %v2196 = vunpack.c.l.b16 %v2164
    %v2197 = vunpack.c.l.b16 %v2165
    %v2198 = vpack.c.b16 %v2183, %v2182
    %v2199 = vpack.c.b16 %v2185, %v2184
    %v2200 = vpack.c.b16 %v2187, %v2186
    %v2201 = vpack.c.b16 %v2189, %v2188
    %v2202 = vpack.c.b16 %v2191, %v2190
    %v2203 = vpack.c.b16 %v2193, %v2192
    %v2204 = vpack.c.b16 %v2195, %v2194
    %v2205 = vpack.c.b16 %v2197, %v2196
    %2214 = vmatprep.subr.bf16.mxu0 0
    %2215 = vmatpush1.bf16.msra.mxu0 %v2198
    %2216 = vmatprep.subr.bf16.mxu0 0
    %2217 = vmatpush1.bf16.msra.mxu0 %v2199
    %2218 = vmatprep.subr.bf16.mxu0 0
    %2219 = vmatpush1.bf16.msra.mxu0 %v2200
    %2220 = vmatprep.subr.bf16.mxu0 0
    %2221 = vmatpush1.bf16.msra.mxu0 %v2201
    %2222 = vmatprep.subr.bf16.mxu0 0
    %2223 = vmatpush1.bf16.msra.mxu0 %v2202
    %2224 = vmatprep.subr.bf16.mxu0 0
    %2225 = vmatpush1.bf16.msra.mxu0 %v2203
    %2226 = vmatprep.subr.bf16.mxu0 0
    %2227 = vmatpush1.bf16.msra.mxu0 %v2204
    %2228 = vmatprep.subr.bf16.mxu0 0
    %2229 = vmatpush1.bf16.msra.mxu0 %v2205
    %2230 = vmatprep.subr.bf16.mxu0 0
    %2231 = vmatpush1.bf16.msra.mxu0 0
    %2232 = vmatprep.subr.bf16.mxu0 0
    %2233 = vmatpush1.bf16.msra.mxu0 0
    %2234 = vmatprep.subr.bf16.mxu0 0
    %2235 = vmatpush1.bf16.msra.mxu0 0
    %2236 = vmatprep.subr.bf16.mxu0 0
    %2237 = vmatpush1.bf16.msra.mxu0 0
    %2238 = vmatprep.subr.bf16.mxu0 0
    %2239 = vmatpush1.bf16.msra.mxu0 0
    %2240 = vmatprep.subr.bf16.mxu0 0
    %2241 = vmatpush1.bf16.msra.mxu0 0
    %2242 = vmatprep.subr.bf16.mxu0 0
    %2243 = vmatpush1.bf16.msra.mxu0 0
    %2244 = vmatprep.subr.bf16.mxu0 0
    %2245 = vmatpush1.bf16.msra.mxu0 0
    %2246 = vmatprep.mubr.bf16.mxu0 0
    %2247 = vmatmul.mubr.bf16.gmra.mrb[0].mxu0 %v2148
    %v2248 = vpop.f32.mrb[0].mxu0
    %v2249 = vadd.f32 0.0, %v2248
    %v2250 = vpop.f32.mrb[0].mxu0
    %v2251 = vpop.f32.mrb[0].mxu0
    %v2252 = vpop.f32.mrb[0].mxu0
    %2253 = vdwg.mxu0
    %v2270 = vunpack.c.l.b16 %v2128
    %v2271 = vunpack.c.l.b16 %v2129
    %v2272 = vunpack.c.l.b16 %v2130
    %v2273 = vunpack.c.l.b16 %v2131
    %v2274 = vunpack.c.l.b16 %v2132
    %v2275 = vunpack.c.l.b16 %v2133
    %v2276 = vunpack.c.l.b16 %v2134
    %v2277 = vunpack.c.l.b16 %v2135
    %v2278 = vunpack.c.l.b16 %v2136
    %v2279 = vunpack.c.l.b16 %v2137
    %v2280 = vunpack.c.l.b16 %v2138
    %v2281 = vunpack.c.l.b16 %v2139
    %v2282 = vunpack.c.l.b16 %v2140
    %v2283 = vunpack.c.l.b16 %v2141
    %v2284 = vunpack.c.l.b16 %v2142
    %v2285 = vunpack.c.l.b16 %v2143
    %v2286 = vpack.c.b16 %v2271, %v2270
    %v2287 = vpack.c.b16 %v2273, %v2272
    %v2288 = vpack.c.b16 %v2275, %v2274
    %v2289 = vpack.c.b16 %v2277, %v2276
    %v2290 = vpack.c.b16 %v2279, %v2278
    %v2291 = vpack.c.b16 %v2281, %v2280
    %v2292 = vpack.c.b16 %v2283, %v2282
    %v2293 = vpack.c.b16 %v2285, %v2284
    %2302 = vmatprep.subr.bf16.mxu0 0
    %2303 = vmatpush1.bf16.msra.mxu0 %v2286
    %2304 = vmatprep.subr.bf16.mxu0 0
    %2305 = vmatpush1.bf16.msra.mxu0 %v2287
    %2306 = vmatprep.subr.bf16.mxu0 0
    %2307 = vmatpush1.bf16.msra.mxu0 %v2288
    %2308 = vmatprep.subr.bf16.mxu0 0
    %2309 = vmatpush1.bf16.msra.mxu0 %v2289
    %2310 = vmatprep.subr.bf16.mxu0 0
    %2311 = vmatpush1.bf16.msra.mxu0 %v2290
    %2312 = vmatprep.subr.bf16.mxu0 0
    %2313 = vmatpush1.bf16.msra.mxu0 %v2291
    %2314 = vmatprep.subr.bf16.mxu0 0
    %2315 = vmatpush1.bf16.msra.mxu0 %v2292
    %2316 = vmatprep.subr.bf16.mxu0 0
    %2317 = vmatpush1.bf16.msra.mxu0 %v2293
    %2318 = vmatprep.subr.bf16.mxu0 0
    %2319 = vmatpush1.bf16.msra.mxu0 0
    %2320 = vmatprep.subr.bf16.mxu0 0
    %2321 = vmatpush1.bf16.msra.mxu0 0
    %2322 = vmatprep.subr.bf16.mxu0 0
    %2323 = vmatpush1.bf16.msra.mxu0 0
    %2324 = vmatprep.subr.bf16.mxu0 0
    %2325 = vmatpush1.bf16.msra.mxu0 0
    %2326 = vmatprep.subr.bf16.mxu0 0
    %2327 = vmatpush1.bf16.msra.mxu0 0
    %2328 = vmatprep.subr.bf16.mxu0 0
    %2329 = vmatpush1.bf16.msra.mxu0 0
    %2330 = vmatprep.subr.bf16.mxu0 0
    %2331 = vmatpush1.bf16.msra.mxu0 0
    %2332 = vmatprep.subr.bf16.mxu0 0
    %2333 = vmatpush1.bf16.msra.mxu0 0
    %2334 = vmatprep.mubr.bf16.mxu0 0
    %2335 = vmatmul.mubr.bf16.gmra.mrb[0].mxu0 %v2127
    %v2336 = vpop.f32.mrb[0].mxu0
    %v2337 = vadd.f32 %v2249, %v2336
    %v2338 = vpop.f32.mrb[0].mxu0
    %v2339 = vpop.f32.mrb[0].mxu0
    %v2340 = vpop.f32.mrb[0].mxu0
    %2341 = vdwg.mxu0
    %s2342 = scalar_lea.vmem [#allocation3], 2
    %v2343 = vld [vmem:[%s2342] ss:$8 sm:$0xf]
    %v2344 = vld [vmem:[%s2342] ss:$8 sm:$0xf0]
    %v2345 = vor.u32 %v2343, %v2344
    %v2346 = vpack.c.bf16 %v2345, %v2345
    %s2347 = scalar_lea.vmem [#allocation13], 128
    %v2348 = vld [vmem:[%s2347] sm:$0xf]
    %v2349 = vld [vmem:[%s2347 + $0x4] sm:$0xf]
    %v2350 = vld [vmem:[%s2347 + $0x8] sm:$0xf]
    %v2351 = vld [vmem:[%s2347 + $0xc] sm:$0xf]
    %v2352 = vld [vmem:[%s2347 + $0x10] sm:$0xf]
    %v2353 = vld [vmem:[%s2347 + $0x14] sm:$0xf]
    %v2354 = vld [vmem:[%s2347 + $0x18] sm:$0xf]
    %v2355 = vld [vmem:[%s2347 + $0x1c] sm:$0xf]
    %v2356 = vld [vmem:[%s2347 + $0x20] sm:$0xf]
    %v2357 = vld [vmem:[%s2347 + $0x24] sm:$0xf]
    %v2358 = vld [vmem:[%s2347 + $0x28] sm:$0xf]
    %v2359 = vld [vmem:[%s2347 + $0x2c] sm:$0xf]
    %v2360 = vld [vmem:[%s2347 + $0x30] sm:$0xf]
    %v2361 = vld [vmem:[%s2347 + $0x34] sm:$0xf]
    %v2362 = vld [vmem:[%s2347 + $0x38] sm:$0xf]
    %v2363 = vld [vmem:[%s2347 + $0x3c] sm:$0xf]
    %v2380 = vunpack.c.l.b16 %v2348
    %v2381 = vunpack.c.l.b16 %v2349
    %v2382 = vunpack.c.l.b16 %v2350
    %v2383 = vunpack.c.l.b16 %v2351
    %v2384 = vunpack.c.l.b16 %v2352
    %v2385 = vunpack.c.l.b16 %v2353
    %v2386 = vunpack.c.l.b16 %v2354
    %v2387 = vunpack.c.l.b16 %v2355
    %v2388 = vunpack.c.l.b16 %v2356
    %v2389 = vunpack.c.l.b16 %v2357
    %v2390 = vunpack.c.l.b16 %v2358
    %v2391 = vunpack.c.l.b16 %v2359
    %v2392 = vunpack.c.l.b16 %v2360
    %v2393 = vunpack.c.l.b16 %v2361
    %v2394 = vunpack.c.l.b16 %v2362
    %v2395 = vunpack.c.l.b16 %v2363
    %v2396 = vpack.c.b16 %v2381, %v2380
    %v2397 = vpack.c.b16 %v2383, %v2382
    %v2398 = vpack.c.b16 %v2385, %v2384
    %v2399 = vpack.c.b16 %v2387, %v2386
    %v2400 = vpack.c.b16 %v2389, %v2388
    %v2401 = vpack.c.b16 %v2391, %v2390
    %v2402 = vpack.c.b16 %v2393, %v2392
    %v2403 = vpack.c.b16 %v2395, %v2394
    %2412 = vmatprep.subr.bf16.mxu0 0
    %2413 = vmatpush1.bf16.msra.mxu0 %v2396
    %2414 = vmatprep.subr.bf16.mxu0 0
    %2415 = vmatpush1.bf16.msra.mxu0 %v2397
    %2416 = vmatprep.subr.bf16.mxu0 0
    %2417 = vmatpush1.bf16.msra.mxu0 %v2398
    %2418 = vmatprep.subr.bf16.mxu0 0
    %2419 = vmatpush1.bf16.msra.mxu0 %v2399
    %2420 = vmatprep.subr.bf16.mxu0 0
    %2421 = vmatpush1.bf16.msra.mxu0 %v2400
    %2422 = vmatprep.subr.bf16.mxu0 0
    %2423 = vmatpush1.bf16.msra.mxu0 %v2401
    %2424 = vmatprep.subr.bf16.mxu0 0
    %2425 = vmatpush1.bf16.msra.mxu0 %v2402
    %2426 = vmatprep.subr.bf16.mxu0 0
    %2427 = vmatpush1.bf16.msra.mxu0 %v2403
    %2428 = vmatprep.subr.bf16.mxu0 0
    %2429 = vmatpush1.bf16.msra.mxu0 0
    %2430 = vmatprep.subr.bf16.mxu0 0
    %2431 = vmatpush1.bf16.msra.mxu0 0
    %2432 = vmatprep.subr.bf16.mxu0 0
    %2433 = vmatpush1.bf16.msra.mxu0 0
    %2434 = vmatprep.subr.bf16.mxu0 0
    %2435 = vmatpush1.bf16.msra.mxu0 0
    %2436 = vmatprep.subr.bf16.mxu0 0
    %2437 = vmatpush1.bf16.msra.mxu0 0
    %2438 = vmatprep.subr.bf16.mxu0 0
    %2439 = vmatpush1.bf16.msra.mxu0 0
    %2440 = vmatprep.subr.bf16.mxu0 0
    %2441 = vmatpush1.bf16.msra.mxu0 0
    %2442 = vmatprep.subr.bf16.mxu0 0
    %2443 = vmatpush1.bf16.msra.mxu0 0
    %2444 = vmatprep.mubr.bf16.mxu0 0
    %2445 = vmatmul.mubr.bf16.gmra.mrb[0].mxu0 %v2346
    %v2446 = vpop.f32.mrb[0].mxu0
    %v2447 = vadd.f32 0.0, %v2446
    %v2448 = vpop.f32.mrb[0].mxu0
    %v2449 = vpop.f32.mrb[0].mxu0
    %v2450 = vpop.f32.mrb[0].mxu0
    %2451 = vdwg.mxu0
    %v2452 = vadd.f32 %v2337, %v2447
    %s2453 = scalar_lea.vmem [#allocation3], 3
    %v2454 = vld [vmem:[%s2453] ss:$8 sm:$0xf]
    %v2455 = vld [vmem:[%s2453] ss:$8 sm:$0xf0]
    %v2456 = vor.u32 %v2454, %v2455
    %v2457 = vpack.c.bf16 %v2456, %v2456
    %s2458 = scalar_lea.vmem [#allocation13], 192
    %v2459 = vld [vmem:[%s2458] sm:$0xf]
    %v2460 = vld [vmem:[%s2458 + $0x4] sm:$0xf]
    %v2461 = vld [vmem:[%s2458 + $0x8] sm:$0xf]
    %v2462 = vld [vmem:[%s2458 + $0xc] sm:$0xf]
    %v2463 = vld [vmem:[%s2458 + $0x10] sm:$0xf]
    %v2464 = vld [vmem:[%s2458 + $0x14] sm:$0xf]
    %v2465 = vld [vmem:[%s2458 + $0x18] sm:$0xf]
    %v2466 = vld [vmem:[%s2458 + $0x1c] sm:$0xf]
    %v2467 = vld [vmem:[%s2458 + $0x20] sm:$0xf]
    %v2468 = vld [vmem:[%s2458 + $0x24] sm:$0xf]
    %v2469 = vld [vmem:[%s2458 + $0x28] sm:$0xf]
    %v2470 = vld [vmem:[%s2458 + $0x2c] sm:$0xf]
    %v2471 = vld [vmem:[%s2458 + $0x30] sm:$0xf]
    %v2472 = vld [vmem:[%s2458 + $0x34] sm:$0xf]
    %v2473 = vld [vmem:[%s2458 + $0x38] sm:$0xf]
    %v2474 = vld [vmem:[%s2458 + $0x3c] sm:$0xf]
    %v2491 = vunpack.c.l.b16 %v2459
    %v2492 = vunpack.c.l.b16 %v2460
    %v2493 = vunpack.c.l.b16 %v2461
    %v2494 = vunpack.c.l.b16 %v2462
    %v2495 = vunpack.c.l.b16 %v2463
    %v2496 = vunpack.c.l.b16 %v2464
    %v2497 = vunpack.c.l.b16 %v2465
    %v2498 = vunpack.c.l.b16 %v2466
    %v2499 = vunpack.c.l.b16 %v2467
    %v2500 = vunpack.c.l.b16 %v2468
    %v2501 = vunpack.c.l.b16 %v2469
    %v2502 = vunpack.c.l.b16 %v2470
    %v2503 = vunpack.c.l.b16 %v2471
    %v2504 = vunpack.c.l.b16 %v2472
    %v2505 = vunpack.c.l.b16 %v2473
    %v2506 = vunpack.c.l.b16 %v2474
    %v2507 = vpack.c.b16 %v2492, %v2491
    %v2508 = vpack.c.b16 %v2494, %v2493
    %v2509 = vpack.c.b16 %v2496, %v2495
    %v2510 = vpack.c.b16 %v2498, %v2497
    %v2511 = vpack.c.b16 %v2500, %v2499
    %v2512 = vpack.c.b16 %v2502, %v2501
    %v2513 = vpack.c.b16 %v2504, %v2503
    %v2514 = vpack.c.b16 %v2506, %v2505
    %2523 = vmatprep.subr.bf16.mxu0 0
    %2524 = vmatpush1.bf16.msra.mxu0 %v2507
    %2525 = vmatprep.subr.bf16.mxu0 0
    %2526 = vmatpush1.bf16.msra.mxu0 %v2508
    %2527 = vmatprep.subr.bf16.mxu0 0
    %2528 = vmatpush1.bf16.msra.mxu0 %v2509
    %2529 = vmatprep.subr.bf16.mxu0 0
    %2530 = vmatpush1.bf16.msra.mxu0 %v2510
    %2531 = vmatprep.subr.bf16.mxu0 0
    %2532 = vmatpush1.bf16.msra.mxu0 %v2511
    %2533 = vmatprep.subr.bf16.mxu0 0
    %2534 = vmatpush1.bf16.msra.mxu0 %v2512
    %2535 = vmatprep.subr.bf16.mxu0 0
    %2536 = vmatpush1.bf16.msra.mxu0 %v2513
    %2537 = vmatprep.subr.bf16.mxu0 0
    %2538 = vmatpush1.bf16.msra.mxu0 %v2514
    %2539 = vmatprep.subr.bf16.mxu0 0
    %2540 = vmatpush1.bf16.msra.mxu0 0
    %2541 = vmatprep.subr.bf16.mxu0 0
    %2542 = vmatpush1.bf16.msra.mxu0 0
    %2543 = vmatprep.subr.bf16.mxu0 0
    %2544 = vmatpush1.bf16.msra.mxu0 0
    %2545 = vmatprep.subr.bf16.mxu0 0
    %2546 = vmatpush1.bf16.msra.mxu0 0
    %2547 = vmatprep.subr.bf16.mxu0 0
    %2548 = vmatpush1.bf16.msra.mxu0 0
    %2549 = vmatprep.subr.bf16.mxu0 0
    %2550 = vmatpush1.bf16.msra.mxu0 0
    %2551 = vmatprep.subr.bf16.mxu0 0
    %2552 = vmatpush1.bf16.msra.mxu0 0
    %2553 = vmatprep.subr.bf16.mxu0 0
    %2554 = vmatpush1.bf16.msra.mxu0 0
    %2555 = vmatprep.mubr.bf16.mxu0 0
    %2556 = vmatmul.mubr.bf16.gmra.mrb[0].mxu0 %v2457
    %v2557 = vpop.f32.mrb[0].mxu0
    %v2558 = vadd.f32 0.0, %v2557
    %v2559 = vpop.f32.mrb[0].mxu0
    %v2560 = vpop.f32.mrb[0].mxu0
    %v2561 = vpop.f32.mrb[0].mxu0
    %2562 = vdwg.mxu0
    %v2563 = vadd.f32 %v2452, %v2558
    %s2564 = scalar_lea.vmem [#allocation3], 4
    %v2565 = vld [vmem:[%s2564] ss:$8 sm:$0xf]
    %v2566 = vld [vmem:[%s2564] ss:$8 sm:$0xf0]
    %v2567 = vor.u32 %v2565, %v2566
    %v2568 = vpack.c.bf16 %v2567, %v2567
    %s2569 = scalar_lea.vmem [#allocation13], 256
    %v2570 = vld [vmem:[%s2569] sm:$0xf]
    %v2571 = vld [vmem:[%s2569 + $0x4] sm:$0xf]
    %v2572 = vld [vmem:[%s2569 + $0x8] sm:$0xf]
    %v2573 = vld [vmem:[%s2569 + $0xc] sm:$0xf]
    %v2574 = vld [vmem:[%s2569 + $0x10] sm:$0xf]
    %v2575 = vld [vmem:[%s2569 + $0x14] sm:$0xf]
    %v2576 = vld [vmem:[%s2569 + $0x18] sm:$0xf]
    %v2577 = vld [vmem:[%s2569 + $0x1c] sm:$0xf]
    %v2578 = vld [vmem:[%s2569 + $0x20] sm:$0xf]
    %v2579 = vld [vmem:[%s2569 + $0x24] sm:$0xf]
    %v2580 = vld [vmem:[%s2569 + $0x28] sm:$0xf]
    %v2581 = vld [vmem:[%s2569 + $0x2c] sm:$0xf]
    %v2582 = vld [vmem:[%s2569 + $0x30] sm:$0xf]
    %v2583 = vld [vmem:[%s2569 + $0x34] sm:$0xf]
    %v2584 = vld [vmem:[%s2569 + $0x38] sm:$0xf]
    %v2585 = vld [vmem:[%s2569 + $0x3c] sm:$0xf]
    %v2602 = vunpack.c.l.b16 %v2570
    %v2603 = vunpack.c.l.b16 %v2571
    %v2604 = vunpack.c.l.b16 %v2572
    %v2605 = vunpack.c.l.b16 %v2573
    %v2606 = vunpack.c.l.b16 %v2574
    %v2607 = vunpack.c.l.b16 %v2575
    %v2608 = vunpack.c.l.b16 %v2576
    %v2609 = vunpack.c.l.b16 %v2577
    %v2610 = vunpack.c.l.b16 %v2578
    %v2611 = vunpack.c.l.b16 %v2579
    %v2612 = vunpack.c.l.b16 %v2580
    %v2613 = vunpack.c.l.b16 %v2581
    %v2614 = vunpack.c.l.b16 %v2582
    %v2615 = vunpack.c.l.b16 %v2583
    %v2616 = vunpack.c.l.b16 %v2584
    %v2617 = vunpack.c.l.b16 %v2585
    %v2618 = vpack.c.b16 %v2603, %v2602
    %v2619 = vpack.c.b16 %v2605, %v2604
    %v2620 = vpack.c.b16 %v2607, %v2606
    %v2621 = vpack.c.b16 %v2609, %v2608
    %v2622 = vpack.c.b16 %v2611, %v2610
    %v2623 = vpack.c.b16 %v2613, %v2612
    %v2624 = vpack.c.b16 %v2615, %v2614
    %v2625 = vpack.c.b16 %v2617, %v2616
    %2634 = vmatprep.subr.bf16.mxu0 0
    %2635 = vmatpush1.bf16.msra.mxu0 %v2618
    %2636 = vmatprep.subr.bf16.mxu0 0
    %2637 = vmatpush1.bf16.msra.mxu0 %v2619
    %2638 = vmatprep.subr.bf16.mxu0 0
    %2639 = vmatpush1.bf16.msra.mxu0 %v2620
    %2640 = vmatprep.subr.bf16.mxu0 0
    %2641 = vmatpush1.bf16.msra.mxu0 %v2621
    %2642 = vmatprep.subr.bf16.mxu0 0
    %2643 = vmatpush1.bf16.msra.mxu0 %v2622
    %2644 = vmatprep.subr.bf16.mxu0 0
    %2645 = vmatpush1.bf16.msra.mxu0 %v2623
    %2646 = vmatprep.subr.bf16.mxu0 0
    %2647 = vmatpush1.bf16.msra.mxu0 %v2624
    %2648 = vmatprep.subr.bf16.mxu0 0
    %2649 = vmatpush1.bf16.msra.mxu0 %v2625
    %2650 = vmatprep.subr.bf16.mxu0 0
    %2651 = vmatpush1.bf16.msra.mxu0 0
    %2652 = vmatprep.subr.bf16.mxu0 0
    %2653 = vmatpush1.bf16.msra.mxu0 0
    %2654 = vmatprep.subr.bf16.mxu0 0
    %2655 = vmatpush1.bf16.msra.mxu0 0
    %2656 = vmatprep.subr.bf16.mxu0 0
    %2657 = vmatpush1.bf16.msra.mxu0 0
    %2658 = vmatprep.subr.bf16.mxu0 0
    %2659 = vmatpush1.bf16.msra.mxu0 0
    %2660 = vmatprep.subr.bf16.mxu0 0
    %2661 = vmatpush1.bf16.msra.mxu0 0
    %2662 = vmatprep.subr.bf16.mxu0 0
    %2663 = vmatpush1.bf16.msra.mxu0 0
    %2664 = vmatprep.subr.bf16.mxu0 0
    %2665 = vmatpush1.bf16.msra.mxu0 0
    %2666 = vmatprep.mubr.bf16.mxu0 0
    %2667 = vmatmul.mubr.bf16.gmra.mrb[0].mxu0 %v2568
    %v2668 = vpop.f32.mrb[0].mxu0
    %v2669 = vadd.f32 0.0, %v2668
    %v2670 = vpop.f32.mrb[0].mxu0
    %v2671 = vpop.f32.mrb[0].mxu0
    %v2672 = vpop.f32.mrb[0].mxu0
    %2673 = vdwg.mxu0
    %v2674 = vadd.f32 %v2563, %v2669
    %s2675 = scalar_lea.vmem [#allocation3], 5
    %v2676 = vld [vmem:[%s2675] ss:$8 sm:$0xf]
    %v2677 = vld [vmem:[%s2675] ss:$8 sm:$0xf0]
    %v2678 = vor.u32 %v2676, %v2677
    %v2679 = vpack.c.bf16 %v2678, %v2678
    %s2680 = scalar_lea.vmem [#allocation13], 320
    %v2681 = vld [vmem:[%s2680] sm:$0xf]
    %v2682 = vld [vmem:[%s2680 + $0x4] sm:$0xf]
    %v2683 = vld [vmem:[%s2680 + $0x8] sm:$0xf]
    %v2684 = vld [vmem:[%s2680 + $0xc] sm:$0xf]
    %v2685 = vld [vmem:[%s2680 + $0x10] sm:$0xf]
    %v2686 = vld [vmem:[%s2680 + $0x14] sm:$0xf]
    %v2687 = vld [vmem:[%s2680 + $0x18] sm:$0xf]
    %v2688 = vld [vmem:[%s2680 + $0x1c] sm:$0xf]
    %v2689 = vld [vmem:[%s2680 + $0x20] sm:$0xf]
    %v2690 = vld [vmem:[%s2680 + $0x24] sm:$0xf]
    %v2691 = vld [vmem:[%s2680 + $0x28] sm:$0xf]
    %v2692 = vld [vmem:[%s2680 + $0x2c] sm:$0xf]
    %v2693 = vld [vmem:[%s2680 + $0x30] sm:$0xf]
    %v2694 = vld [vmem:[%s2680 + $0x34] sm:$0xf]
    %v2695 = vld [vmem:[%s2680 + $0x38] sm:$0xf]
    %v2696 = vld [vmem:[%s2680 + $0x3c] sm:$0xf]
    %v2713 = vunpack.c.l.b16 %v2681
    %v2714 = vunpack.c.l.b16 %v2682
    %v2715 = vunpack.c.l.b16 %v2683
    %v2716 = vunpack.c.l.b16 %v2684
    %v2717 = vunpack.c.l.b16 %v2685
    %v2718 = vunpack.c.l.b16 %v2686
    %v2719 = vunpack.c.l.b16 %v2687
    %v2720 = vunpack.c.l.b16 %v2688
    %v2721 = vunpack.c.l.b16 %v2689
    %v2722 = vunpack.c.l.b16 %v2690
    %v2723 = vunpack.c.l.b16 %v2691
    %v2724 = vunpack.c.l.b16 %v2692
    %v2725 = vunpack.c.l.b16 %v2693
    %v2726 = vunpack.c.l.b16 %v2694
    %v2727 = vunpack.c.l.b16 %v2695
    %v2728 = vunpack.c.l.b16 %v2696
    %v2729 = vpack.c.b16 %v2714, %v2713
    %v2730 = vpack.c.b16 %v2716, %v2715
    %v2731 = vpack.c.b16 %v2718, %v2717
    %v2732 = vpack.c.b16 %v2720, %v2719
    %v2733 = vpack.c.b16 %v2722, %v2721
    %v2734 = vpack.c.b16 %v2724, %v2723
    %v2735 = vpack.c.b16 %v2726, %v2725
    %v2736 = vpack.c.b16 %v2728, %v2727
    %2745 = vmatprep.subr.bf16.mxu0 0
    %2746 = vmatpush1.bf16.msra.mxu0 %v2729
    %2747 = vmatprep.subr.bf16.mxu0 0
    %2748 = vmatpush1.bf16.msra.mxu0 %v2730
    %2749 = vmatprep.subr.bf16.mxu0 0
    %2750 = vmatpush1.bf16.msra.mxu0 %v2731
    %2751 = vmatprep.subr.bf16.mxu0 0
    %2752 = vmatpush1.bf16.msra.mxu0 %v2732
    %2753 = vmatprep.subr.bf16.mxu0 0
    %2754 = vmatpush1.bf16.msra.mxu0 %v2733
    %2755 = vmatprep.subr.bf16.mxu0 0
    %2756 = vmatpush1.bf16.msra.mxu0 %v2734
    %2757 = vmatprep.subr.bf16.mxu0 0
    %2758 = vmatpush1.bf16.msra.mxu0 %v2735
    %2759 = vmatprep.subr.bf16.mxu0 0
    %2760 = vmatpush1.bf16.msra.mxu0 %v2736
    %2761 = vmatprep.subr.bf16.mxu0 0
    %2762 = vmatpush1.bf16.msra.mxu0 0
    %2763 = vmatprep.subr.bf16.mxu0 0
    %2764 = vmatpush1.bf16.msra.mxu0 0
    %2765 = vmatprep.subr.bf16.mxu0 0
    %2766 = vmatpush1.bf16.msra.mxu0 0
    %2767 = vmatprep.subr.bf16.mxu0 0
    %2768 = vmatpush1.bf16.msra.mxu0 0
    %2769 = vmatprep.subr.bf16.mxu0 0
    %2770 = vmatpush1.bf16.msra.mxu0 0
    %2771 = vmatprep.subr.bf16.mxu0 0
    %2772 = vmatpush1.bf16.msra.mxu0 0
    %2773 = vmatprep.subr.bf16.mxu0 0
    %2774 = vmatpush1.bf16.msra.mxu0 0
    %2775 = vmatprep.subr.bf16.mxu0 0
    %2776 = vmatpush1.bf16.msra.mxu0 0
    %2777 = vmatprep.mubr.bf16.mxu0 0
    %2778 = vmatmul.mubr.bf16.gmra.mrb[0].mxu0 %v2679
    %v2779 = vpop.f32.mrb[0].mxu0
    %v2780 = vadd.f32 0.0, %v2779
    %v2781 = vpop.f32.mrb[0].mxu0
    %v2782 = vpop.f32.mrb[0].mxu0
    %v2783 = vpop.f32.mrb[0].mxu0
    %2784 = vdwg.mxu0
    %v2785 = vadd.f32 %v2674, %v2780
    %s2786 = scalar_lea.vmem [#allocation3], 6
    %v2787 = vld [vmem:[%s2786] ss:$8 sm:$0xf]
    %v2788 = vld [vmem:[%s2786] ss:$8 sm:$0xf0]
    %v2789 = vor.u32 %v2787, %v2788
    %v2790 = vpack.c.bf16 %v2789, %v2789
    %s2791 = scalar_lea.vmem [#allocation13], 384
    %v2792 = vld [vmem:[%s2791] sm:$0xf]
    %v2793 = vld [vmem:[%s2791 + $0x4] sm:$0xf]
    %v2794 = vld [vmem:[%s2791 + $0x8] sm:$0xf]
    %v2795 = vld [vmem:[%s2791 + $0xc] sm:$0xf]
    %v2796 = vld [vmem:[%s2791 + $0x10] sm:$0xf]
    %v2797 = vld [vmem:[%s2791 + $0x14] sm:$0xf]
    %v2798 = vld [vmem:[%s2791 + $0x18] sm:$0xf]
    %v2799 = vld [vmem:[%s2791 + $0x1c] sm:$0xf]
    %v2800 = vld [vmem:[%s2791 + $0x20] sm:$0xf]
    %v2801 = vld [vmem:[%s2791 + $0x24] sm:$0xf]
    %v2802 = vld [vmem:[%s2791 + $0x28] sm:$0xf]
    %v2803 = vld [vmem:[%s2791 + $0x2c] sm:$0xf]
    %v2804 = vld [vmem:[%s2791 + $0x30] sm:$0xf]
    %v2805 = vld [vmem:[%s2791 + $0x34] sm:$0xf]
    %v2806 = vld [vmem:[%s2791 + $0x38] sm:$0xf]
    %v2807 = vld [vmem:[%s2791 + $0x3c] sm:$0xf]
    %v2824 = vunpack.c.l.b16 %v2792
    %v2825 = vunpack.c.l.b16 %v2793
    %v2826 = vunpack.c.l.b16 %v2794
    %v2827 = vunpack.c.l.b16 %v2795
    %v2828 = vunpack.c.l.b16 %v2796
    %v2829 = vunpack.c.l.b16 %v2797
    %v2830 = vunpack.c.l.b16 %v2798
    %v2831 = vunpack.c.l.b16 %v2799
    %v2832 = vunpack.c.l.b16 %v2800
    %v2833 = vunpack.c.l.b16 %v2801
    %v2834 = vunpack.c.l.b16 %v2802
    %v2835 = vunpack.c.l.b16 %v2803
    %v2836 = vunpack.c.l.b16 %v2804
    %v2837 = vunpack.c.l.b16 %v2805
    %v2838 = vunpack.c.l.b16 %v2806
    %v2839 = vunpack.c.l.b16 %v2807
    %v2840 = vpack.c.b16 %v2825, %v2824
    %v2841 = vpack.c.b16 %v2827, %v2826
    %v2842 = vpack.c.b16 %v2829, %v2828
    %v2843 = vpack.c.b16 %v2831, %v2830
    %v2844 = vpack.c.b16 %v2833, %v2832
    %v2845 = vpack.c.b16 %v2835, %v2834
    %v2846 = vpack.c.b16 %v2837, %v2836
    %v2847 = vpack.c.b16 %v2839, %v2838
    %2856 = vmatprep.subr.bf16.mxu0 0
    %2857 = vmatpush1.bf16.msra.mxu0 %v2840
    %2858 = vmatprep.subr.bf16.mxu0 0
    %2859 = vmatpush1.bf16.msra.mxu0 %v2841
    %2860 = vmatprep.subr.bf16.mxu0 0
    %2861 = vmatpush1.bf16.msra.mxu0 %v2842
    %2862 = vmatprep.subr.bf16.mxu0 0
    %2863 = vmatpush1.bf16.msra.mxu0 %v2843
    %2864 = vmatprep.subr.bf16.mxu0 0
    %2865 = vmatpush1.bf16.msra.mxu0 %v2844
    %2866 = vmatprep.subr.bf16.mxu0 0
    %2867 = vmatpush1.bf16.msra.mxu0 %v2845
    %2868 = vmatprep.subr.bf16.mxu0 0
    %2869 = vmatpush1.bf16.msra.mxu0 %v2846
    %2870 = vmatprep.subr.bf16.mxu0 0
    %2871 = vmatpush1.bf16.msra.mxu0 %v2847
    %2872 = vmatprep.subr.bf16.mxu0 0
    %2873 = vmatpush1.bf16.msra.mxu0 0
    %2874 = vmatprep.subr.bf16.mxu0 0
    %2875 = vmatpush1.bf16.msra.mxu0 0
    %2876 = vmatprep.subr.bf16.mxu0 0
    %2877 = vmatpush1.bf16.msra.mxu0 0
    %2878 = vmatprep.subr.bf16.mxu0 0
    %2879 = vmatpush1.bf16.msra.mxu0 0
    %2880 = vmatprep.subr.bf16.mxu0 0
    %2881 = vmatpush1.bf16.msra.mxu0 0
    %2882 = vmatprep.subr.bf16.mxu0 0
    %2883 = vmatpush1.bf16.msra.mxu0 0
    %2884 = vmatprep.subr.bf16.mxu0 0
    %2885 = vmatpush1.bf16.msra.mxu0 0
    %2886 = vmatprep.subr.bf16.mxu0 0
    %2887 = vmatpush1.bf16.msra.mxu0 0
    %2888 = vmatprep.mubr.bf16.mxu0 0
    %2889 = vmatmul.mubr.bf16.gmra.mrb[0].mxu0 %v2790
    %v2890 = vpop.f32.mrb[0].mxu0
    %v2891 = vadd.f32 0.0, %v2890
    %v2892 = vpop.f32.mrb[0].mxu0
    %v2893 = vpop.f32.mrb[0].mxu0
    %v2894 = vpop.f32.mrb[0].mxu0
    %2895 = vdwg.mxu0
    %v2896 = vadd.f32 %v2785, %v2891
    %s2897 = scalar_lea.vmem [#allocation3], 7
    %v2898 = vld [vmem:[%s2897] ss:$8 sm:$0xf]
    %v2899 = vld [vmem:[%s2897] ss:$8 sm:$0xf0]
    %v2900 = vor.u32 %v2898, %v2899
    %v2901 = vpack.c.bf16 %v2900, %v2900
    %s2902 = scalar_lea.vmem [#allocation13], 448
    %v2903 = vld [vmem:[%s2902] sm:$0xf]
    %v2904 = vld [vmem:[%s2902 + $0x4] sm:$0xf]
    %v2905 = vld [vmem:[%s2902 + $0x8] sm:$0xf]
    %v2906 = vld [vmem:[%s2902 + $0xc] sm:$0xf]
    %v2907 = vld [vmem:[%s2902 + $0x10] sm:$0xf]
    %v2908 = vld [vmem:[%s2902 + $0x14] sm:$0xf]
    %v2909 = vld [vmem:[%s2902 + $0x18] sm:$0xf]
    %v2910 = vld [vmem:[%s2902 + $0x1c] sm:$0xf]
    %v2911 = vld [vmem:[%s2902 + $0x20] sm:$0xf]
    %v2912 = vld [vmem:[%s2902 + $0x24] sm:$0xf]
    %v2913 = vld [vmem:[%s2902 + $0x28] sm:$0xf]
    %v2914 = vld [vmem:[%s2902 + $0x2c] sm:$0xf]
    %v2915 = vld [vmem:[%s2902 + $0x30] sm:$0xf]
    %v2916 = vld [vmem:[%s2902 + $0x34] sm:$0xf]
    %v2917 = vld [vmem:[%s2902 + $0x38] sm:$0xf]
    %v2918 = vld [vmem:[%s2902 + $0x3c] sm:$0xf]
    %v2935 = vunpack.c.l.b16 %v2903
    %v2936 = vunpack.c.l.b16 %v2904
    %v2937 = vunpack.c.l.b16 %v2905
    %v2938 = vunpack.c.l.b16 %v2906
    %v2939 = vunpack.c.l.b16 %v2907
    %v2940 = vunpack.c.l.b16 %v2908
    %v2941 = vunpack.c.l.b16 %v2909
    %v2942 = vunpack.c.l.b16 %v2910
    %v2943 = vunpack.c.l.b16 %v2911
    %v2944 = vunpack.c.l.b16 %v2912
    %v2945 = vunpack.c.l.b16 %v2913
    %v2946 = vunpack.c.l.b16 %v2914
    %v2947 = vunpack.c.l.b16 %v2915
    %v2948 = vunpack.c.l.b16 %v2916
    %v2949 = vunpack.c.l.b16 %v2917
    %v2950 = vunpack.c.l.b16 %v2918
    %v2951 = vpack.c.b16 %v2936, %v2935
    %v2952 = vpack.c.b16 %v2938, %v2937
    %v2953 = vpack.c.b16 %v2940, %v2939
    %v2954 = vpack.c.b16 %v2942, %v2941
    %v2955 = vpack.c.b16 %v2944, %v2943
    %v2956 = vpack.c.b16 %v2946, %v2945
    %v2957 = vpack.c.b16 %v2948, %v2947
    %v2958 = vpack.c.b16 %v2950, %v2949
    %2967 = vmatprep.subr.bf16.mxu0 0
    %2968 = vmatpush1.bf16.msra.mxu0 %v2951
    %2969 = vmatprep.subr.bf16.mxu0 0
    %2970 = vmatpush1.bf16.msra.mxu0 %v2952
    %2971 = vmatprep.subr.bf16.mxu0 0
    %2972 = vmatpush1.bf16.msra.mxu0 %v2953
    %2973 = vmatprep.subr.bf16.mxu0 0
    %2974 = vmatpush1.bf16.msra.mxu0 %v2954
    %2975 = vmatprep.subr.bf16.mxu0 0
    %2976 = vmatpush1.bf16.msra.mxu0 %v2955
    %2977 = vmatprep.subr.bf16.mxu0 0
    %2978 = vmatpush1.bf16.msra.mxu0 %v2956
    %2979 = vmatprep.subr.bf16.mxu0 0
    %2980 = vmatpush1.bf16.msra.mxu0 %v2957
    %2981 = vmatprep.subr.bf16.mxu0 0
    %2982 = vmatpush1.bf16.msra.mxu0 %v2958
    %2983 = vmatprep.subr.bf16.mxu0 0
    %2984 = vmatpush1.bf16.msra.mxu0 0
    %2985 = vmatprep.subr.bf16.mxu0 0
    %2986 = vmatpush1.bf16.msra.mxu0 0
    %2987 = vmatprep.subr.bf16.mxu0 0
    %2988 = vmatpush1.bf16.msra.mxu0 0
    %2989 = vmatprep.subr.bf16.mxu0 0
    %2990 = vmatpush1.bf16.msra.mxu0 0
    %2991 = vmatprep.subr.bf16.mxu0 0
    %2992 = vmatpush1.bf16.msra.mxu0 0
    %2993 = vmatprep.subr.bf16.mxu0 0
    %2994 = vmatpush1.bf16.msra.mxu0 0
    %2995 = vmatprep.subr.bf16.mxu0 0
    %2996 = vmatpush1.bf16.msra.mxu0 0
    %2997 = vmatprep.subr.bf16.mxu0 0
    %2998 = vmatpush1.bf16.msra.mxu0 0
    %2999 = vmatprep.mubr.bf16.mxu0 0
    %3000 = vmatmul.mubr.bf16.gmra.mrb[0].mxu0 %v2901
    %v3001 = vpop.f32.mrb[0].mxu0
    %v3002 = vadd.f32 0.0, %v3001
    %v3003 = vpop.f32.mrb[0].mxu0
    %v3004 = vpop.f32.mrb[0].mxu0
    %v3005 = vpop.f32.mrb[0].mxu0
    %3006 = vdwg.mxu0
    %v3007 = vadd.f32 %v2896, %v3002
    %v3008 = vld [vmem:[%s8] sm:$0x1]
    %v3010 = vlaneseq
    %v3011 = vshrl.u32 %v3010, 7
    %v3012 = vsub.s32 0, %v3011
    %v3013 = vrot.slane %v3008, %v3012
    %v3015 = vadd.f32 %v3007, %v3013
    %3016 = vst [vmem:[#allocation15] sm:$0xff] %v3015
    // Predicated region
    $region62: #{tpu_custom_call.1} parent=1 // pred_check
      _
    $region63: #{tpu_custom_call.1} parent=1 // pred_check_branch
      %3018 = sbr.rel (0) target = $region65
    $region64: #{tpu_custom_call.1} parent=1 // pred_region
      %s3020 = ssub.s32 128, 128
      %3021 = vsyncadd [#allocation6], %s3020
      %s3023 = sshll.u32 [#allocation15], 4
      %s3024 = int_to_ptr.vmem [resolvable:$true] %s3023
      %3026 = dma.vmem_to_hbm [thread:$0]  %s3024, 128, %s9, [#allocation6]
    $region65: #{tpu_custom_call.1} parent=1 // pred_fallthru
      _
    // Predicated region
    $region66: #{tpu_custom_call.1} parent=1 // pred_check
      _
    $region67: #{tpu_custom_call.1} parent=1 // pred_check_branch
      %3028 = sbr.rel (0) target = $region69
    $region68: #{tpu_custom_call.1} parent=1 // pred_region
      %s3030 = ssub.s32 256, 256
      %3031 = vsyncadd [#allocation17], %s3030
      %s3032 = sshll.u32 [#allocation16], 4
      %s3033 = int_to_ptr.vmem [resolvable:$true] %s3032
      %3038 = dma.vmem_to_hbm [thread:$0]  %s3033, 256, %s10, [#allocation17], 128, 128, 8
    $region69: #{tpu_custom_call.1} parent=1 // pred_fallthru
      _
    // Predicated region
    $region70: #{tpu_custom_call.1} parent=1 // pred_check
      _
    $region71: #{tpu_custom_call.1} parent=1 // pred_check_branch
      %3040 = sbr.rel (0) target = $region73
    $region72: #{tpu_custom_call.1} parent=1 // pred_region
      %s3042 = ssub.s32 256, 256
      %3043 = vsyncadd [#allocation17], %s3042
      %s3044 = sshll.u32 [#allocation18], 4
      %s3045 = int_to_ptr.vmem [resolvable:$true] %s3044
      %3050 = dma.vmem_to_hbm [thread:$0]  %s3045, 256, %s11, [#allocation17], 128, 128, 8
    $region73: #{tpu_custom_call.1} parent=1 // pred_fallthru
      _
    // Predicated region
    $region74: #{tpu_custom_call.1} parent=1 // pred_check
      _
    $region75: #{tpu_custom_call.1} parent=1 // pred_check_branch
      %3052 = sbr.rel (0) target = $region77
    $region76: #{tpu_custom_call.1} parent=1 // pred_region
      %3053 = dma.done [#allocation6], 128
    $region77: #{tpu_custom_call.1} parent=1 // pred_fallthru
      _
    // Predicated region
    $region78: #{tpu_custom_call.1} parent=1 // pred_check
      _
    $region79: #{tpu_custom_call.1} parent=1 // pred_check_branch
      %3055 = sbr.rel (0) target = $region81
    $region80: #{tpu_custom_call.1} parent=1 // pred_region
      %3056 = dma.done [#allocation17], 256
    $region81: #{tpu_custom_call.1} parent=1 // pred_fallthru
      _
    // Predicated region
    $region82: #{tpu_custom_call.1} parent=1 // pred_check
      _
    $region83: #{tpu_custom_call.1} parent=1 // pred_check_branch
      %3058 = sbr.rel (0) target = $region85
    $region84: #{tpu_custom_call.1} parent=1 // pred_region
      %3059 = dma.done [#allocation17], 256
    $region85: #{tpu_custom_call.1} parent=1 // pred_fallthru
      _
    %3060 = vsyncpa [#allocation5], 1
    %3061 = vsyncpa [#allocation8], 1
    %3062 = vsyncpa [#allocation11], 1
    %3063 = vsyncpa [#allocation14], 1
    %3064 = vsyncpa [#allocation6], 1
    %3065 = vsyncpa [#allocation17], 1

</llo_original>
